<compile_context>
chip_gen: v6e
topology: v6e:2x2x1
jax: 0.10.0
libtpu: 0.0.40
codegen_flags: <defaults>
</compile_context>

<pallas_src>
import math
from functools import partial

import jax
import jax.numpy as jnp
from jax.experimental import pallas as pl
from jax.experimental.pallas import tpu as pltpu

CFG = dict(
    vocab_size=64,
    emb_dim=32,
    n_heads=4,
    n_layers=2,
    max_seq_length=16,
    drop_rate=0.0,     # inference mode -> dropout = identity
    qkv_bias=False,
)
EPS = 1e-5
NEG_BIG = -1e30        # large finite additive mask (avoids exp(-inf - -inf) NaNs)


# ----------------------------- in-kernel helpers ------------------------------------

def _layernorm(x, scale, shift):
    # biased variance, eps=1e-5, scale*x_norm + shift (matches reference LayerNorm)
    mean = jnp.mean(x, axis=-1, keepdims=True)
    c = x - mean
    var = jnp.mean(c * c, axis=-1, keepdims=True)
    return c * jax.lax.rsqrt(var + EPS) * scale + shift     # rsqrt -> EUP slot


def _gelu_tanh(x):
    # GELU (tanh approximation), as in the reference FeedForward block
    return 0.5 * x * (1.0 + jnp.tanh(
        jnp.sqrt(2.0 / jnp.pi) * (x + 0.044715 * x * x * x)))


# ----------------------------- fused GPT kernel -------------------------------------

def gpt_fused_kernel(ids_ref, tok_ref, pos_ref,
                     wqkv_ref, wo_ref, bo_ref,
                     w1_ref, b1_ref, w2_ref, b2_ref,
                     ln1s_ref, ln1b_ref, ln2s_ref, ln2b_ref,
                     fns_ref, fnb_ref, wout_ref,
                     o_ref, *, n_layers, n_heads, batch, seq):
    TB, S = batch, seq                 # sequences handled in this grid step
    N = TB * S                         # flattened token count
    V, E = tok_ref.shape
    H = n_heads
    D = E // H
    Vp = wout_ref.shape[1]
    bf16 = jnp.bfloat16

    # ---- token embedding as one-hot bf16 MXU matmul (exact) + positional add --------
    ids = ids_ref[...].reshape(N, 1)                                     # (N, 1) int32
    vocab_iota = jax.lax.broadcasted_iota(jnp.int32, (N, V), 1)
    one_hot = (vocab_iota == ids).astype(bf16)                           # (N, V)
    x = jnp.dot(one_hot, tok_ref[...], preferred_element_type=jnp.float32)   # (N, E)
    x = (x.reshape(TB, S, E) + pos_ref[...]).reshape(N, E)               # pos broadcast

    # ---- causal additive bias, hoisted out of the layer loop -------------------------
    row = jax.lax.broadcasted_iota(jnp.int32, (S, S), 0)
    col = jax.lax.broadcasted_iota(jnp.int32, (S, S), 1)
    bias = jnp.where(col > row, jnp.float32(NEG_BIG), jnp.float32(0.0))  # (S, S)

    # ---- transformer blocks: static unroll, residual stays on-chip -------------------
    for l in range(n_layers):
        # attention sub-block: x = x + att(LN1(x))
        xn = _layernorm(x, ln1s_ref[l], ln1b_ref[l])                     # (N, E) f32
        # fused QKV projection: one lane-dense (N,E)@(E,3E) matmul
        # (1/sqrt(D) scale already folded into the q-columns of wqkv at init)
        qkv = jnp.dot(xn.astype(bf16), wqkv_ref[l],
                      preferred_element_type=jnp.float32)                # (N, 3E)

        ctx_heads = []
        for h in range(H):                                               # static unroll
            q_h = qkv[:, h * D:(h + 1) * D].astype(bf16).reshape(TB, S, D)
            k_h = qkv[:, E + h * D:E + (h + 1) * D].astype(bf16).reshape(TB, S, D)
            v_h = qkv[:, 2 * E + h * D:2 * E + (h + 1) * D].astype(bf16).reshape(TB, S, D)

            s = jnp.einsum('bsd,btd->bst', q_h, k_h,
                           preferred_element_type=jnp.float32)           # (TB, S, S)
            s = s + bias
            s = s - jnp.max(s, axis=-1, keepdims=True)
            p = jnp.exp(s)
            p = p * pl.reciprocal(jnp.sum(p, axis=-1, keepdims=True), approx=True)

            ctx_h = jnp.einsum('bst,btd->bsd', p.astype(bf16), v_h,
                               preferred_element_type=jnp.float32)       # (TB, S, D)
            ctx_heads.append(ctx_h.reshape(N, D))

        # merged output projection: one (N,E)@(E,E) matmul instead of per-head K=D=8
        ctx = jnp.concatenate(ctx_heads, axis=-1)                        # (N, E)
        attn = jnp.dot(ctx.astype(bf16), wo_ref[l],
                       preferred_element_type=jnp.float32)               # (N, E)
        x = x + attn + bo_ref[l]

        # feed-forward sub-block: x = x + FF(LN2(x))
        xn2 = _layernorm(x, ln2s_ref[l], ln2b_ref[l])
        h1 = jnp.dot(xn2.astype(bf16), w1_ref[l],
                     preferred_element_type=jnp.float32) + b1_ref[l]
        h1 = _gelu_tanh(h1)
        ff = jnp.dot(h1.astype(bf16), w2_ref[l],
                     preferred_element_type=jnp.float32) + b2_ref[l]
        x = x + ff

    # ---- final LayerNorm + LM head (lane-dense padded vocab) -------------------------
    xf = _layernorm(x, fns_ref[...], fnb_ref[...])
    logits = jnp.dot(xf.astype(bf16), wout_ref[...],
                     preferred_element_type=jnp.float32)                 # (N, Vp)
    o_ref[...] = logits.reshape(TB, S, Vp)


# ----------------------------- wrapper ----------------------------------------------

def _const_spec(arr):
    # constant-index full-array spec (weights identical for every grid step)
    nd = arr.ndim
    return pl.BlockSpec(arr.shape, lambda i, nd=nd: (0,) * nd)


def gpt_forward(in_idx, params, cfg, batch_chunk=None):
    B, S = in_idx.shape
    V = cfg["vocab_size"]
    Vp = params["w_out"].shape[1]
    if batch_chunk is None:
        batch_chunk = B              # single grid step: no serial-step overhead on 1-TC
    assert B % batch_chunk == 0
    steps = B // batch_chunk         # set batch_chunk=B//2 to use both v7x TensorCores

    ids = in_idx.astype(jnp.int32).reshape(B, S, 1)
    pos = params["pos_emb"][:S]

    weights = (params["tok_emb"], pos,
               params["wqkv"], params["wo"], params["bo"],
               params["w1"], params["b1"], params["w2"], params["b2"],
               params["ln1_s"], params["ln1_b"], params["ln2_s"], params["ln2_b"],
               params["fn_s"], params["fn_b"], params["w_out"])

    kernel = partial(gpt_fused_kernel,
                     n_layers=cfg["n_layers"], n_heads=cfg["n_heads"],
                     batch=batch_chunk, seq=S)

    logits_padded = pl.pallas_call(
        kernel,
        out_shape=jax.ShapeDtypeStruct((B, S, Vp), jnp.float32),
        grid=(steps,),
        in_specs=[pl.BlockSpec((batch_chunk, S, 1), lambda i: (i, 0, 0))]
                 + [_const_spec(w) for w in weights],
        out_specs=pl.BlockSpec((batch_chunk, S, Vp), lambda i: (i, 0, 0)),
        compiler_params=pltpu.CompilerParams(
            dimension_semantics=("parallel",),
            vmem_limit_bytes=64 * 1024 * 1024),
    )(ids, *weights)

    return logits_padded[:, :, :V]           # drop zero-padded vocab columns


# ----------------------------- parameters -------------------------------------------

def init_params(key, cfg):
    E, V, H = cfg["emb_dim"], cfg["vocab_size"], cfg["n_heads"]
    L, F = cfg["n_layers"], 4 * cfg["emb_dim"]
    D = E // H
    Vp = ((V + 127) // 128) * 128                      # lane-dense LM-head width
    keys = jax.random.split(key, 3 + L)

    def w(k, shape, s=0.02):
        return jax.random.normal(k, shape, jnp.float32) * s

    wqkv, wo, w1, w2 = [], [], [], []
    scale = 1.0 / math.sqrt(D)
    for i in range(L):
        lk = jax.random.split(keys[3 + i], 6)
        wq = w(lk[0], (E, E)) * scale                  # fold attention scale into wq
        wk = w(lk[1], (E, E))
        wv = w(lk[2], (E, E))
        wqkv.append(jnp.concatenate([wq, wk, wv], axis=1))     # (E, 3E) fused slab
        wo.append(w(lk[3], (E, E)))                            # merged out-projection
        w1.append(w(lk[4], (E, F)))
        w2.append(w(lk[5], (F, E)))

    bf = jnp.bfloat16
    params = dict(
        tok_emb=w(keys[0], (V, E), 1.0).astype(bf),            # bf16 for MXU path
        pos_emb=w(keys[1], (cfg["max_seq_length"], E), 1.0),
        wqkv=jnp.stack(wqkv).astype(bf),                       # (L, E, 3E)
        wo=jnp.stack(wo).astype(bf),                           # (L, E, E)
        bo=jnp.zeros((L, 1, E), jnp.float32),
        w1=jnp.stack(w1).astype(bf), b1=jnp.zeros((L, 1, F), jnp.float32),
        w2=jnp.stack(w2).astype(bf), b2=jnp.zeros((L, 1, E), jnp.float32),
        ln1_s=jnp.ones((L, 1, E), jnp.float32), ln1_b=jnp.zeros((L, 1, E), jnp.float32),
        ln2_s=jnp.ones((L, 1, E), jnp.float32), ln2_b=jnp.zeros((L, 1, E), jnp.float32),
        fn_s=jnp.ones((1, E), jnp.float32), fn_b=jnp.zeros((1, E), jnp.float32),
        # out_head has no bias; pad vocab dim to a multiple of 128 with zero columns
        w_out=jnp.pad(w(keys[2], (E, V)), ((0, 0), (0, Vp - V))).astype(bf),
    )
    return params


if __name__ == "__main__":
    key = jax.random.PRNGKey(0)
    pkey, ikey = jax.random.split(key)
    params = init_params(pkey, CFG)

    B, S = 2, 8
    in_idx = jax.random.randint(ikey, (B, S), 0, CFG["vocab_size"], dtype=jnp.int32)

    logits = gpt_forward(in_idx, params, CFG)
    logits = jax.block_until_ready(logits)
    assert logits.shape == (B, S, CFG["vocab_size"])
    assert bool(jnp.all(jnp.isfinite(logits)))
    print("KERNEL_OK")
</pallas_src>

<mosaic_0001>
module attributes {stable_mosaic.version = 11 : i64} {
  func.func @gpt_fused_kernel(%arg0: i32, %arg1: memref<2x8x1xi32, #tpu.memory_space<vmem>>, %arg2: memref<64x32xbf16, #tpu.memory_space<vmem>>, %arg3: memref<8x32xf32, #tpu.memory_space<vmem>>, %arg4: memref<2x32x96xbf16, #tpu.memory_space<vmem>>, %arg5: memref<2x32x32xbf16, #tpu.memory_space<vmem>>, %arg6: memref<2x1x32xf32, #tpu.memory_space<vmem>>, %arg7: memref<2x32x128xbf16, #tpu.memory_space<vmem>>, %arg8: memref<2x1x128xf32, #tpu.memory_space<vmem>>, %arg9: memref<2x128x32xbf16, #tpu.memory_space<vmem>>, %arg10: memref<2x1x32xf32, #tpu.memory_space<vmem>>, %arg11: memref<2x1x32xf32, #tpu.memory_space<vmem>>, %arg12: memref<2x1x32xf32, #tpu.memory_space<vmem>>, %arg13: memref<2x1x32xf32, #tpu.memory_space<vmem>>, %arg14: memref<2x1x32xf32, #tpu.memory_space<vmem>>, %arg15: memref<1x32xf32, #tpu.memory_space<vmem>>, %arg16: memref<1x32xf32, #tpu.memory_space<vmem>>, %arg17: memref<32x128xbf16, #tpu.memory_space<vmem>>, %arg18: memref<2x8x128xf32, #tpu.memory_space<vmem>>) attributes {dimension_semantics = [#tpu.dimension_semantics<parallel>], iteration_bounds = array<i64: 1>, scalar_prefetch = 0 : i64, scratch_operands = 0 : i64, tpu.core_type = #tpu.core_type<tc>, window_params = [{transform_indices = @transform_0, window_bounds = array<i64: 2, 8, 1>}, {pipeline_mode = #tpu.pipeline_mode<synchronous>, transform_indices = @transform_1, window_bounds = array<i64: 64, 32>}, {pipeline_mode = #tpu.pipeline_mode<synchronous>, transform_indices = @transform_2, window_bounds = array<i64: 8, 32>}, {pipeline_mode = #tpu.pipeline_mode<synchronous>, transform_indices = @transform_3, window_bounds = array<i64: 2, 32, 96>}, {pipeline_mode = #tpu.pipeline_mode<synchronous>, transform_indices = @transform_4, window_bounds = array<i64: 2, 32, 32>}, {pipeline_mode = #tpu.pipeline_mode<synchronous>, transform_indices = @transform_5, window_bounds = array<i64: 2, 1, 32>}, {pipeline_mode = #tpu.pipeline_mode<synchronous>, transform_indices = @transform_6, window_bounds = array<i64: 2, 32, 128>}, {pipeline_mode = #tpu.pipeline_mode<synchronous>, transform_indices = @transform_7, window_bounds = array<i64: 2, 1, 128>}, {pipeline_mode = #tpu.pipeline_mode<synchronous>, transform_indices = @transform_8, window_bounds = array<i64: 2, 128, 32>}, {pipeline_mode = #tpu.pipeline_mode<synchronous>, transform_indices = @transform_9, window_bounds = array<i64: 2, 1, 32>}, {pipeline_mode = #tpu.pipeline_mode<synchronous>, transform_indices = @transform_10, window_bounds = array<i64: 2, 1, 32>}, {pipeline_mode = #tpu.pipeline_mode<synchronous>, transform_indices = @transform_11, window_bounds = array<i64: 2, 1, 32>}, {pipeline_mode = #tpu.pipeline_mode<synchronous>, transform_indices = @transform_12, window_bounds = array<i64: 2, 1, 32>}, {pipeline_mode = #tpu.pipeline_mode<synchronous>, transform_indices = @transform_13, window_bounds = array<i64: 2, 1, 32>}, {pipeline_mode = #tpu.pipeline_mode<synchronous>, transform_indices = @transform_14, window_bounds = array<i64: 1, 32>}, {pipeline_mode = #tpu.pipeline_mode<synchronous>, transform_indices = @transform_15, window_bounds = array<i64: 1, 32>}, {pipeline_mode = #tpu.pipeline_mode<synchronous>, transform_indices = @transform_16, window_bounds = array<i64: 32, 128>}, {transform_indices = @transform_17, window_bounds = array<i64: 2, 8, 128>}]} {
    %c0 = arith.constant 0 : index
    %c0_0 = arith.constant 0 : index
    %c0_1 = arith.constant 0 : index
    %0 = vector.load %arg1[%c0, %c0_0, %c0_1] : memref<2x8x1xi32, #tpu.memory_space<vmem>>, vector<2x8x1xi32>
    %1 = vector.shape_cast %0 : vector<2x8x1xi32> to vector<16x1xi32>
    %2 = tpu.iota {dimensions = array<i32: 1>} : vector<16x64xi32>
    %3 = vector.broadcast %1 : vector<16x1xi32> to vector<16x64xi32>
    %4 = arith.cmpi eq, %2, %3 : vector<16x64xi32>
    %5 = arith.extui %4 : vector<16x64xi1> to vector<16x64xi32>
    %6 = arith.sitofp %5 : vector<16x64xi32> to vector<16x64xf32>
    %7 = arith.truncf %6 : vector<16x64xf32> to vector<16x64xbf16>
    %c0_2 = arith.constant 0 : index
    %c0_3 = arith.constant 0 : index
    %8 = vector.load %arg2[%c0_2, %c0_3] : memref<64x32xbf16, #tpu.memory_space<vmem>>, vector<64x32xbf16>
    %cst = arith.constant dense<0.000000e+00> : vector<16x32xf32>
    %9 = tpu.matmul %7, %8, %cst {dimension_numbers = #tpu.dot_dimension_numbers<[1], [0], [0], [1], [0, 0, 1, 1], [], []>} : vector<16x64xbf16>, vector<64x32xbf16>, vector<16x32xf32> -> vector<16x32xf32>
    %10 = vector.shape_cast %9 : vector<16x32xf32> to vector<2x8x32xf32>
    %c0_4 = arith.constant 0 : index
    %c0_5 = arith.constant 0 : index
    %11 = vector.load %arg3[%c0_4, %c0_5] : memref<8x32xf32, #tpu.memory_space<vmem>>, vector<8x32xf32>
    %12 = vector.shape_cast %11 : vector<8x32xf32> to vector<1x8x32xf32>
    %13 = vector.broadcast %12 : vector<1x8x32xf32> to vector<2x8x32xf32>
    %14 = arith.addf %10, %13 : vector<2x8x32xf32>
    %15 = vector.shape_cast %14 : vector<2x8x32xf32> to vector<16x32xf32>
    %16 = tpu.iota {dimensions = array<i32: 0>} : vector<8x8xi32>
    %17 = tpu.iota {dimensions = array<i32: 1>} : vector<8x8xi32>
    %18 = arith.cmpi sgt, %17, %16 : vector<8x8xi32>
    %cst_6 = arith.constant -1.000000e+30 : f32
    %cst_7 = arith.constant 0.000000e+00 : f32
    %19 = vector.broadcast %cst_6 : f32 to vector<8x8xf32>
    %20 = vector.broadcast %cst_7 : f32 to vector<8x8xf32>
    %21 = arith.select %18, %19, %20 : vector<8x8xi1>, vector<8x8xf32>
    %c0_8 = arith.constant 0 : index
    %c0_9 = arith.constant 0 : index
    %c0_10 = arith.constant 0 : index
    %22 = vector.load %arg11[%c0_8, %c0_9, %c0_10] : memref<2x1x32xf32, #tpu.memory_space<vmem>>, vector<1x1x32xf32>
    %23 = vector.shape_cast %22 : vector<1x1x32xf32> to vector<1x32xf32>
    %c0_11 = arith.constant 0 : index
    %c0_12 = arith.constant 0 : index
    %c0_13 = arith.constant 0 : index
    %24 = vector.load %arg12[%c0_11, %c0_12, %c0_13] : memref<2x1x32xf32, #tpu.memory_space<vmem>>, vector<1x1x32xf32>
    %25 = vector.shape_cast %24 : vector<1x1x32xf32> to vector<1x32xf32>
    %cst_14 = arith.constant dense<0.000000e+00> : vector<16xf32>
    %26 = vector.multi_reduction <add>, %15, %cst_14 [1] : vector<16x32xf32> to vector<16xf32>
    %27 = vector.shape_cast %26 : vector<16xf32> to vector<16x1xf32>
    %cst_15 = arith.constant 3.200000e+01 : f32
    %28 = vector.broadcast %cst_15 : f32 to vector<16x1xf32>
    %29 = arith.divf %27, %28 : vector<16x1xf32>
    %30 = vector.broadcast %29 : vector<16x1xf32> to vector<16x32xf32>
    %31 = arith.subf %15, %30 : vector<16x32xf32>
    %32 = arith.mulf %31, %31 : vector<16x32xf32>
    %cst_16 = arith.constant dense<0.000000e+00> : vector<16xf32>
    %33 = vector.multi_reduction <add>, %32, %cst_16 [1] : vector<16x32xf32> to vector<16xf32>
    %34 = vector.shape_cast %33 : vector<16xf32> to vector<16x1xf32>
    %cst_17 = arith.constant 3.200000e+01 : f32
    %35 = vector.broadcast %cst_17 : f32 to vector<16x1xf32>
    %36 = arith.divf %34, %35 : vector<16x1xf32>
    %cst_18 = arith.constant 9.99999974E-6 : f32
    %37 = vector.broadcast %cst_18 : f32 to vector<16x1xf32>
    %38 = arith.addf %36, %37 : vector<16x1xf32>
    %39 = math.rsqrt %38 : vector<16x1xf32>
    %40 = vector.broadcast %39 : vector<16x1xf32> to vector<16x32xf32>
    %41 = arith.mulf %31, %40 : vector<16x32xf32>
    %42 = vector.broadcast %23 : vector<1x32xf32> to vector<16x32xf32>
    %43 = arith.mulf %41, %42 : vector<16x32xf32>
    %44 = vector.broadcast %25 : vector<1x32xf32> to vector<16x32xf32>
    %45 = arith.addf %43, %44 : vector<16x32xf32>
    %46 = arith.truncf %45 : vector<16x32xf32> to vector<16x32xbf16>
    %c0_19 = arith.constant 0 : index
    %c0_20 = arith.constant 0 : index
    %c0_21 = arith.constant 0 : index
    %47 = vector.load %arg4[%c0_19, %c0_20, %c0_21] : memref<2x32x96xbf16, #tpu.memory_space<vmem>>, vector<1x32x96xbf16>
    %48 = vector.shape_cast %47 : vector<1x32x96xbf16> to vector<32x96xbf16>
    %cst_22 = arith.constant dense<0.000000e+00> : vector<16x96xf32>
    %49 = tpu.matmul %46, %48, %cst_22 {dimension_numbers = #tpu.dot_dimension_numbers<[1], [0], [0], [1], [0, 0, 1, 1], [], []>} : vector<16x32xbf16>, vector<32x96xbf16>, vector<16x96xf32> -> vector<16x96xf32>
    %50 = vector.extract_strided_slice %49 {offsets = [0, 0], sizes = [16, 8], strides = [1, 1]} : vector<16x96xf32> to vector<16x8xf32>
    %51 = arith.truncf %50 : vector<16x8xf32> to vector<16x8xbf16>
    %52 = vector.shape_cast %51 : vector<16x8xbf16> to vector<2x8x8xbf16>
    %53 = vector.extract_strided_slice %49 {offsets = [0, 32], sizes = [16, 8], strides = [1, 1]} : vector<16x96xf32> to vector<16x8xf32>
    %54 = arith.truncf %53 : vector<16x8xf32> to vector<16x8xbf16>
    %55 = vector.shape_cast %54 : vector<16x8xbf16> to vector<2x8x8xbf16>
    %56 = vector.extract_strided_slice %49 {offsets = [0, 64], sizes = [16, 8], strides = [1, 1]} : vector<16x96xf32> to vector<16x8xf32>
    %57 = arith.truncf %56 : vector<16x8xf32> to vector<16x8xbf16>
    %58 = vector.shape_cast %57 : vector<16x8xbf16> to vector<2x8x8xbf16>
    "tpu.trace_start"() <{level = 10 : i32, message = "bsd,btd->bst"}> : () -> ()
    %cst_23 = arith.constant dense<0.000000e+00> : vector<2x8x8xf32>
    %59 = tpu.matmul %52, %55, %cst_23 {dimension_numbers = #tpu.dot_dimension_numbers<[2], [2], [1], [1], [0, 0, 0, 1, 1, 1], [0], [0]>} : vector<2x8x8xbf16>, vector<2x8x8xbf16>, vector<2x8x8xf32> -> vector<2x8x8xf32>
    "tpu.trace_stop"() : () -> ()
    %60 = vector.shape_cast %21 : vector<8x8xf32> to vector<1x8x8xf32>
    %61 = vector.broadcast %60 : vector<1x8x8xf32> to vector<2x8x8xf32>
    %62 = arith.addf %59, %61 : vector<2x8x8xf32>
    %cst_24 = arith.constant dense<0xFF800000> : vector<2x8xf32>
    %63 = vector.multi_reduction <maximumf>, %62, %cst_24 [2] : vector<2x8x8xf32> to vector<2x8xf32>
    %64 = vector.shape_cast %63 : vector<2x8xf32> to vector<2x8x1xf32>
    %65 = vector.broadcast %64 : vector<2x8x1xf32> to vector<2x8x8xf32>
    %66 = arith.subf %62, %65 : vector<2x8x8xf32>
    %67 = math.exp %66 : vector<2x8x8xf32>
    %cst_25 = arith.constant dense<0.000000e+00> : vector<2x8xf32>
    %68 = vector.multi_reduction <add>, %67, %cst_25 [2] : vector<2x8x8xf32> to vector<2x8xf32>
    %69 = vector.shape_cast %68 : vector<2x8xf32> to vector<2x8x1xf32>
    %70 = tpu.reciprocal %69 {approx = true} : vector<2x8x1xf32> -> vector<2x8x1xf32>
    %71 = vector.broadcast %70 : vector<2x8x1xf32> to vector<2x8x8xf32>
    %72 = arith.mulf %67, %71 : vector<2x8x8xf32>
    %73 = arith.truncf %72 : vector<2x8x8xf32> to vector<2x8x8xbf16>
    "tpu.trace_start"() <{level = 10 : i32, message = "bst,btd->bsd"}> : () -> ()
    %cst_26 = arith.constant dense<0.000000e+00> : vector<2x8x8xf32>
    %74 = tpu.matmul %73, %58, %cst_26 {dimension_numbers = #tpu.dot_dimension_numbers<[2], [1], [1], [2], [0, 0, 0, 1, 1, 2], [0], [0]>} : vector<2x8x8xbf16>, vector<2x8x8xbf16>, vector<2x8x8xf32> -> vector<2x8x8xf32>
    "tpu.trace_stop"() : () -> ()
    %75 = vector.shape_cast %74 : vector<2x8x8xf32> to vector<16x8xf32>
    %76 = vector.extract_strided_slice %49 {offsets = [0, 8], sizes = [16, 8], strides = [1, 1]} : vector<16x96xf32> to vector<16x8xf32>
    %77 = arith.truncf %76 : vector<16x8xf32> to vector<16x8xbf16>
    %78 = vector.shape_cast %77 : vector<16x8xbf16> to vector<2x8x8xbf16>
    %79 = vector.extract_strided_slice %49 {offsets = [0, 40], sizes = [16, 8], strides = [1, 1]} : vector<16x96xf32> to vector<16x8xf32>
    %80 = arith.truncf %79 : vector<16x8xf32> to vector<16x8xbf16>
    %81 = vector.shape_cast %80 : vector<16x8xbf16> to vector<2x8x8xbf16>
    %82 = vector.extract_strided_slice %49 {offsets = [0, 72], sizes = [16, 8], strides = [1, 1]} : vector<16x96xf32> to vector<16x8xf32>
    %83 = arith.truncf %82 : vector<16x8xf32> to vector<16x8xbf16>
    %84 = vector.shape_cast %83 : vector<16x8xbf16> to vector<2x8x8xbf16>
    "tpu.trace_start"() <{level = 10 : i32, message = "bsd,btd->bst"}> : () -> ()
    %cst_27 = arith.constant dense<0.000000e+00> : vector<2x8x8xf32>
    %85 = tpu.matmul %78, %81, %cst_27 {dimension_numbers = #tpu.dot_dimension_numbers<[2], [2], [1], [1], [0, 0, 0, 1, 1, 1], [0], [0]>} : vector<2x8x8xbf16>, vector<2x8x8xbf16>, vector<2x8x8xf32> -> vector<2x8x8xf32>
    "tpu.trace_stop"() : () -> ()
    %86 = vector.shape_cast %21 : vector<8x8xf32> to vector<1x8x8xf32>
    %87 = vector.broadcast %86 : vector<1x8x8xf32> to vector<2x8x8xf32>
    %88 = arith.addf %85, %87 : vector<2x8x8xf32>
    %cst_28 = arith.constant dense<0xFF800000> : vector<2x8xf32>
    %89 = vector.multi_reduction <maximumf>, %88, %cst_28 [2] : vector<2x8x8xf32> to vector<2x8xf32>
    %90 = vector.shape_cast %89 : vector<2x8xf32> to vector<2x8x1xf32>
    %91 = vector.broadcast %90 : vector<2x8x1xf32> to vector<2x8x8xf32>
    %92 = arith.subf %88, %91 : vector<2x8x8xf32>
    %93 = math.exp %92 : vector<2x8x8xf32>
    %cst_29 = arith.constant dense<0.000000e+00> : vector<2x8xf32>
    %94 = vector.multi_reduction <add>, %93, %cst_29 [2] : vector<2x8x8xf32> to vector<2x8xf32>
    %95 = vector.shape_cast %94 : vector<2x8xf32> to vector<2x8x1xf32>
    %96 = tpu.reciprocal %95 {approx = true} : vector<2x8x1xf32> -> vector<2x8x1xf32>
    %97 = vector.broadcast %96 : vector<2x8x1xf32> to vector<2x8x8xf32>
    %98 = arith.mulf %93, %97 : vector<2x8x8xf32>
    %99 = arith.truncf %98 : vector<2x8x8xf32> to vector<2x8x8xbf16>
    "tpu.trace_start"() <{level = 10 : i32, message = "bst,btd->bsd"}> : () -> ()
    %cst_30 = arith.constant dense<0.000000e+00> : vector<2x8x8xf32>
    %100 = tpu.matmul %99, %84, %cst_30 {dimension_numbers = #tpu.dot_dimension_numbers<[2], [1], [1], [2], [0, 0, 0, 1, 1, 2], [0], [0]>} : vector<2x8x8xbf16>, vector<2x8x8xbf16>, vector<2x8x8xf32> -> vector<2x8x8xf32>
    "tpu.trace_stop"() : () -> ()
    %101 = vector.shape_cast %100 : vector<2x8x8xf32> to vector<16x8xf32>
    %102 = vector.extract_strided_slice %49 {offsets = [0, 16], sizes = [16, 8], strides = [1, 1]} : vector<16x96xf32> to vector<16x8xf32>
    %103 = arith.truncf %102 : vector<16x8xf32> to vector<16x8xbf16>
    %104 = vector.shape_cast %103 : vector<16x8xbf16> to vector<2x8x8xbf16>
    %105 = vector.extract_strided_slice %49 {offsets = [0, 48], sizes = [16, 8], strides = [1, 1]} : vector<16x96xf32> to vector<16x8xf32>
    %106 = arith.truncf %105 : vector<16x8xf32> to vector<16x8xbf16>
    %107 = vector.shape_cast %106 : vector<16x8xbf16> to vector<2x8x8xbf16>
    %108 = vector.extract_strided_slice %49 {offsets = [0, 80], sizes = [16, 8], strides = [1, 1]} : vector<16x96xf32> to vector<16x8xf32>
    %109 = arith.truncf %108 : vector<16x8xf32> to vector<16x8xbf16>
    %110 = vector.shape_cast %109 : vector<16x8xbf16> to vector<2x8x8xbf16>
    "tpu.trace_start"() <{level = 10 : i32, message = "bsd,btd->bst"}> : () -> ()
    %cst_31 = arith.constant dense<0.000000e+00> : vector<2x8x8xf32>
    %111 = tpu.matmul %104, %107, %cst_31 {dimension_numbers = #tpu.dot_dimension_numbers<[2], [2], [1], [1], [0, 0, 0, 1, 1, 1], [0], [0]>} : vector<2x8x8xbf16>, vector<2x8x8xbf16>, vector<2x8x8xf32> -> vector<2x8x8xf32>
    "tpu.trace_stop"() : () -> ()
    %112 = vector.shape_cast %21 : vector<8x8xf32> to vector<1x8x8xf32>
    %113 = vector.broadcast %112 : vector<1x8x8xf32> to vector<2x8x8xf32>
    %114 = arith.addf %111, %113 : vector<2x8x8xf32>
    %cst_32 = arith.constant dense<0xFF800000> : vector<2x8xf32>
    %115 = vector.multi_reduction <maximumf>, %114, %cst_32 [2] : vector<2x8x8xf32> to vector<2x8xf32>
    %116 = vector.shape_cast %115 : vector<2x8xf32> to vector<2x8x1xf32>
    %117 = vector.broadcast %116 : vector<2x8x1xf32> to vector<2x8x8xf32>
    %118 = arith.subf %114, %117 : vector<2x8x8xf32>
    %119 = math.exp %118 : vector<2x8x8xf32>
    %cst_33 = arith.constant dense<0.000000e+00> : vector<2x8xf32>
    %120 = vector.multi_reduction <add>, %119, %cst_33 [2] : vector<2x8x8xf32> to vector<2x8xf32>
    %121 = vector.shape_cast %120 : vector<2x8xf32> to vector<2x8x1xf32>
    %122 = tpu.reciprocal %121 {approx = true} : vector<2x8x1xf32> -> vector<2x8x1xf32>
    %123 = vector.broadcast %122 : vector<2x8x1xf32> to vector<2x8x8xf32>
    %124 = arith.mulf %119, %123 : vector<2x8x8xf32>
    %125 = arith.truncf %124 : vector<2x8x8xf32> to vector<2x8x8xbf16>
    "tpu.trace_start"() <{level = 10 : i32, message = "bst,btd->bsd"}> : () -> ()
    %cst_34 = arith.constant dense<0.000000e+00> : vector<2x8x8xf32>
    %126 = tpu.matmul %125, %110, %cst_34 {dimension_numbers = #tpu.dot_dimension_numbers<[2], [1], [1], [2], [0, 0, 0, 1, 1, 2], [0], [0]>} : vector<2x8x8xbf16>, vector<2x8x8xbf16>, vector<2x8x8xf32> -> vector<2x8x8xf32>
    "tpu.trace_stop"() : () -> ()
    %127 = vector.shape_cast %126 : vector<2x8x8xf32> to vector<16x8xf32>
    %128 = vector.extract_strided_slice %49 {offsets = [0, 24], sizes = [16, 8], strides = [1, 1]} : vector<16x96xf32> to vector<16x8xf32>
    %129 = arith.truncf %128 : vector<16x8xf32> to vector<16x8xbf16>
    %130 = vector.shape_cast %129 : vector<16x8xbf16> to vector<2x8x8xbf16>
    %131 = vector.extract_strided_slice %49 {offsets = [0, 56], sizes = [16, 8], strides = [1, 1]} : vector<16x96xf32> to vector<16x8xf32>
    %132 = arith.truncf %131 : vector<16x8xf32> to vector<16x8xbf16>
    %133 = vector.shape_cast %132 : vector<16x8xbf16> to vector<2x8x8xbf16>
    %134 = vector.extract_strided_slice %49 {offsets = [0, 88], sizes = [16, 8], strides = [1, 1]} : vector<16x96xf32> to vector<16x8xf32>
    %135 = arith.truncf %134 : vector<16x8xf32> to vector<16x8xbf16>
    %136 = vector.shape_cast %135 : vector<16x8xbf16> to vector<2x8x8xbf16>
    "tpu.trace_start"() <{level = 10 : i32, message = "bsd,btd->bst"}> : () -> ()
    %cst_35 = arith.constant dense<0.000000e+00> : vector<2x8x8xf32>
    %137 = tpu.matmul %130, %133, %cst_35 {dimension_numbers = #tpu.dot_dimension_numbers<[2], [2], [1], [1], [0, 0, 0, 1, 1, 1], [0], [0]>} : vector<2x8x8xbf16>, vector<2x8x8xbf16>, vector<2x8x8xf32> -> vector<2x8x8xf32>
    "tpu.trace_stop"() : () -> ()
    %138 = vector.shape_cast %21 : vector<8x8xf32> to vector<1x8x8xf32>
    %139 = vector.broadcast %138 : vector<1x8x8xf32> to vector<2x8x8xf32>
    %140 = arith.addf %137, %139 : vector<2x8x8xf32>
    %cst_36 = arith.constant dense<0xFF800000> : vector<2x8xf32>
    %141 = vector.multi_reduction <maximumf>, %140, %cst_36 [2] : vector<2x8x8xf32> to vector<2x8xf32>
    %142 = vector.shape_cast %141 : vector<2x8xf32> to vector<2x8x1xf32>
    %143 = vector.broadcast %142 : vector<2x8x1xf32> to vector<2x8x8xf32>
    %144 = arith.subf %140, %143 : vector<2x8x8xf32>
    %145 = math.exp %144 : vector<2x8x8xf32>
    %cst_37 = arith.constant dense<0.000000e+00> : vector<2x8xf32>
    %146 = vector.multi_reduction <add>, %145, %cst_37 [2] : vector<2x8x8xf32> to vector<2x8xf32>
    %147 = vector.shape_cast %146 : vector<2x8xf32> to vector<2x8x1xf32>
    %148 = tpu.reciprocal %147 {approx = true} : vector<2x8x1xf32> -> vector<2x8x1xf32>
    %149 = vector.broadcast %148 : vector<2x8x1xf32> to vector<2x8x8xf32>
    %150 = arith.mulf %145, %149 : vector<2x8x8xf32>
    %151 = arith.truncf %150 : vector<2x8x8xf32> to vector<2x8x8xbf16>
    "tpu.trace_start"() <{level = 10 : i32, message = "bst,btd->bsd"}> : () -> ()
    %cst_38 = arith.constant dense<0.000000e+00> : vector<2x8x8xf32>
    %152 = tpu.matmul %151, %136, %cst_38 {dimension_numbers = #tpu.dot_dimension_numbers<[2], [1], [1], [2], [0, 0, 0, 1, 1, 2], [0], [0]>} : vector<2x8x8xbf16>, vector<2x8x8xbf16>, vector<2x8x8xf32> -> vector<2x8x8xf32>
    "tpu.trace_stop"() : () -> ()
    %153 = vector.shape_cast %152 : vector<2x8x8xf32> to vector<16x8xf32>
    %154 = tpu.concatenate %75, %101, %127, %153 in 1 : vector<16x8xf32>, vector<16x8xf32>, vector<16x8xf32>, vector<16x8xf32> -> vector<16x32xf32>
    %155 = arith.truncf %154 : vector<16x32xf32> to vector<16x32xbf16>
    %c0_39 = arith.constant 0 : index
    %c0_40 = arith.constant 0 : index
    %c0_41 = arith.constant 0 : index
    %156 = vector.load %arg5[%c0_39, %c0_40, %c0_41] : memref<2x32x32xbf16, #tpu.memory_space<vmem>>, vector<1x32x32xbf16>
    %157 = vector.shape_cast %156 : vector<1x32x32xbf16> to vector<32x32xbf16>
    %cst_42 = arith.constant dense<0.000000e+00> : vector<16x32xf32>
    %158 = tpu.matmul %155, %157, %cst_42 {dimension_numbers = #tpu.dot_dimension_numbers<[1], [0], [0], [1], [0, 0, 1, 1], [], []>} : vector<16x32xbf16>, vector<32x32xbf16>, vector<16x32xf32> -> vector<16x32xf32>
    %159 = arith.addf %15, %158 : vector<16x32xf32>
    %c0_43 = arith.constant 0 : index
    %c0_44 = arith.constant 0 : index
    %c0_45 = arith.constant 0 : index
    %160 = vector.load %arg6[%c0_43, %c0_44, %c0_45] : memref<2x1x32xf32, #tpu.memory_space<vmem>>, vector<1x1x32xf32>
    %161 = vector.shape_cast %160 : vector<1x1x32xf32> to vector<1x32xf32>
    %162 = vector.broadcast %161 : vector<1x32xf32> to vector<16x32xf32>
    %163 = arith.addf %159, %162 : vector<16x32xf32>
    %c0_46 = arith.constant 0 : index
    %c0_47 = arith.constant 0 : index
    %c0_48 = arith.constant 0 : index
    %164 = vector.load %arg13[%c0_46, %c0_47, %c0_48] : memref<2x1x32xf32, #tpu.memory_space<vmem>>, vector<1x1x32xf32>
    %165 = vector.shape_cast %164 : vector<1x1x32xf32> to vector<1x32xf32>
    %c0_49 = arith.constant 0 : index
    %c0_50 = arith.constant 0 : index
    %c0_51 = arith.constant 0 : index
    %166 = vector.load %arg14[%c0_49, %c0_50, %c0_51] : memref<2x1x32xf32, #tpu.memory_space<vmem>>, vector<1x1x32xf32>
    %167 = vector.shape_cast %166 : vector<1x1x32xf32> to vector<1x32xf32>
    %cst_52 = arith.constant dense<0.000000e+00> : vector<16xf32>
    %168 = vector.multi_reduction <add>, %163, %cst_52 [1] : vector<16x32xf32> to vector<16xf32>
    %169 = vector.shape_cast %168 : vector<16xf32> to vector<16x1xf32>
    %cst_53 = arith.constant 3.200000e+01 : f32
    %170 = vector.broadcast %cst_53 : f32 to vector<16x1xf32>
    %171 = arith.divf %169, %170 : vector<16x1xf32>
    %172 = vector.broadcast %171 : vector<16x1xf32> to vector<16x32xf32>
    %173 = arith.subf %163, %172 : vector<16x32xf32>
    %174 = arith.mulf %173, %173 : vector<16x32xf32>
    %cst_54 = arith.constant dense<0.000000e+00> : vector<16xf32>
    %175 = vector.multi_reduction <add>, %174, %cst_54 [1] : vector<16x32xf32> to vector<16xf32>
    %176 = vector.shape_cast %175 : vector<16xf32> to vector<16x1xf32>
    %cst_55 = arith.constant 3.200000e+01 : f32
    %177 = vector.broadcast %cst_55 : f32 to vector<16x1xf32>
    %178 = arith.divf %176, %177 : vector<16x1xf32>
    %cst_56 = arith.constant 9.99999974E-6 : f32
    %179 = vector.broadcast %cst_56 : f32 to vector<16x1xf32>
    %180 = arith.addf %178, %179 : vector<16x1xf32>
    %181 = math.rsqrt %180 : vector<16x1xf32>
    %182 = vector.broadcast %181 : vector<16x1xf32> to vector<16x32xf32>
    %183 = arith.mulf %173, %182 : vector<16x32xf32>
    %184 = vector.broadcast %165 : vector<1x32xf32> to vector<16x32xf32>
    %185 = arith.mulf %183, %184 : vector<16x32xf32>
    %186 = vector.broadcast %167 : vector<1x32xf32> to vector<16x32xf32>
    %187 = arith.addf %185, %186 : vector<16x32xf32>
    %188 = arith.truncf %187 : vector<16x32xf32> to vector<16x32xbf16>
    %c0_57 = arith.constant 0 : index
    %c0_58 = arith.constant 0 : index
    %c0_59 = arith.constant 0 : index
    %189 = vector.load %arg7[%c0_57, %c0_58, %c0_59] : memref<2x32x128xbf16, #tpu.memory_space<vmem>>, vector<1x32x128xbf16>
    %190 = vector.shape_cast %189 : vector<1x32x128xbf16> to vector<32x128xbf16>
    %cst_60 = arith.constant dense<0.000000e+00> : vector<16x128xf32>
    %191 = tpu.matmul %188, %190, %cst_60 {dimension_numbers = #tpu.dot_dimension_numbers<[1], [0], [0], [1], [0, 0, 1, 1], [], []>} : vector<16x32xbf16>, vector<32x128xbf16>, vector<16x128xf32> -> vector<16x128xf32>
    %c0_61 = arith.constant 0 : index
    %c0_62 = arith.constant 0 : index
    %c0_63 = arith.constant 0 : index
    %192 = vector.load %arg8[%c0_61, %c0_62, %c0_63] : memref<2x1x128xf32, #tpu.memory_space<vmem>>, vector<1x1x128xf32>
    %193 = vector.shape_cast %192 : vector<1x1x128xf32> to vector<1x128xf32>
    %194 = vector.broadcast %193 : vector<1x128xf32> to vector<16x128xf32>
    %195 = arith.addf %191, %194 : vector<16x128xf32>
    %cst_64 = arith.constant 5.000000e-01 : f32
    %196 = vector.broadcast %cst_64 : f32 to vector<16x128xf32>
    %197 = arith.mulf %196, %195 : vector<16x128xf32>
    %cst_65 = arith.constant 0.636619746 : f32
    %198 = math.sqrt %cst_65 : f32
    %cst_66 = arith.constant 4.471500e-02 : f32
    %199 = vector.broadcast %cst_66 : f32 to vector<16x128xf32>
    %200 = arith.mulf %199, %195 : vector<16x128xf32>
    %201 = arith.mulf %200, %195 : vector<16x128xf32>
    %202 = arith.mulf %201, %195 : vector<16x128xf32>
    %203 = arith.addf %195, %202 : vector<16x128xf32>
    %204 = vector.broadcast %198 : f32 to vector<16x128xf32>
    %205 = arith.mulf %204, %203 : vector<16x128xf32>
    %206 = math.tanh %205 : vector<16x128xf32>
    %cst_67 = arith.constant 1.000000e+00 : f32
    %207 = vector.broadcast %cst_67 : f32 to vector<16x128xf32>
    %208 = arith.addf %207, %206 : vector<16x128xf32>
    %209 = arith.mulf %197, %208 : vector<16x128xf32>
    %210 = arith.truncf %209 : vector<16x128xf32> to vector<16x128xbf16>
    %c0_68 = arith.constant 0 : index
    %c0_69 = arith.constant 0 : index
    %c0_70 = arith.constant 0 : index
    %211 = vector.load %arg9[%c0_68, %c0_69, %c0_70] : memref<2x128x32xbf16, #tpu.memory_space<vmem>>, vector<1x128x32xbf16>
    %212 = vector.shape_cast %211 : vector<1x128x32xbf16> to vector<128x32xbf16>
    %cst_71 = arith.constant dense<0.000000e+00> : vector<16x32xf32>
    %213 = tpu.matmul %210, %212, %cst_71 {dimension_numbers = #tpu.dot_dimension_numbers<[1], [0], [0], [1], [0, 0, 1, 1], [], []>} : vector<16x128xbf16>, vector<128x32xbf16>, vector<16x32xf32> -> vector<16x32xf32>
    %c0_72 = arith.constant 0 : index
    %c0_73 = arith.constant 0 : index
    %c0_74 = arith.constant 0 : index
    %214 = vector.load %arg10[%c0_72, %c0_73, %c0_74] : memref<2x1x32xf32, #tpu.memory_space<vmem>>, vector<1x1x32xf32>
    %215 = vector.shape_cast %214 : vector<1x1x32xf32> to vector<1x32xf32>
    %216 = vector.broadcast %215 : vector<1x32xf32> to vector<16x32xf32>
    %217 = arith.addf %213, %216 : vector<16x32xf32>
    %218 = arith.addf %163, %217 : vector<16x32xf32>
    %c1 = arith.constant 1 : index
    %c0_75 = arith.constant 0 : index
    %c0_76 = arith.constant 0 : index
    %219 = vector.load %arg11[%c1, %c0_75, %c0_76] : memref<2x1x32xf32, #tpu.memory_space<vmem>>, vector<1x1x32xf32>
    %220 = vector.shape_cast %219 : vector<1x1x32xf32> to vector<1x32xf32>
    %c1_77 = arith.constant 1 : index
    %c0_78 = arith.constant 0 : index
    %c0_79 = arith.constant 0 : index
    %221 = vector.load %arg12[%c1_77, %c0_78, %c0_79] : memref<2x1x32xf32, #tpu.memory_space<vmem>>, vector<1x1x32xf32>
    %222 = vector.shape_cast %221 : vector<1x1x32xf32> to vector<1x32xf32>
    %cst_80 = arith.constant dense<0.000000e+00> : vector<16xf32>
    %223 = vector.multi_reduction <add>, %218, %cst_80 [1] : vector<16x32xf32> to vector<16xf32>
    %224 = vector.shape_cast %223 : vector<16xf32> to vector<16x1xf32>
    %cst_81 = arith.constant 3.200000e+01 : f32
    %225 = vector.broadcast %cst_81 : f32 to vector<16x1xf32>
    %226 = arith.divf %224, %225 : vector<16x1xf32>
    %227 = vector.broadcast %226 : vector<16x1xf32> to vector<16x32xf32>
    %228 = arith.subf %218, %227 : vector<16x32xf32>
    %229 = arith.mulf %228, %228 : vector<16x32xf32>
    %cst_82 = arith.constant dense<0.000000e+00> : vector<16xf32>
    %230 = vector.multi_reduction <add>, %229, %cst_82 [1] : vector<16x32xf32> to vector<16xf32>
    %231 = vector.shape_cast %230 : vector<16xf32> to vector<16x1xf32>
    %cst_83 = arith.constant 3.200000e+01 : f32
    %232 = vector.broadcast %cst_83 : f32 to vector<16x1xf32>
    %233 = arith.divf %231, %232 : vector<16x1xf32>
    %cst_84 = arith.constant 9.99999974E-6 : f32
    %234 = vector.broadcast %cst_84 : f32 to vector<16x1xf32>
    %235 = arith.addf %233, %234 : vector<16x1xf32>
    %236 = math.rsqrt %235 : vector<16x1xf32>
    %237 = vector.broadcast %236 : vector<16x1xf32> to vector<16x32xf32>
    %238 = arith.mulf %228, %237 : vector<16x32xf32>
    %239 = vector.broadcast %220 : vector<1x32xf32> to vector<16x32xf32>
    %240 = arith.mulf %238, %239 : vector<16x32xf32>
    %241 = vector.broadcast %222 : vector<1x32xf32> to vector<16x32xf32>
    %242 = arith.addf %240, %241 : vector<16x32xf32>
    %243 = arith.truncf %242 : vector<16x32xf32> to vector<16x32xbf16>
    %c1_85 = arith.constant 1 : index
    %c0_86 = arith.constant 0 : index
    %c0_87 = arith.constant 0 : index
    %244 = vector.load %arg4[%c1_85, %c0_86, %c0_87] : memref<2x32x96xbf16, #tpu.memory_space<vmem>>, vector<1x32x96xbf16>
    %245 = vector.shape_cast %244 : vector<1x32x96xbf16> to vector<32x96xbf16>
    %cst_88 = arith.constant dense<0.000000e+00> : vector<16x96xf32>
    %246 = tpu.matmul %243, %245, %cst_88 {dimension_numbers = #tpu.dot_dimension_numbers<[1], [0], [0], [1], [0, 0, 1, 1], [], []>} : vector<16x32xbf16>, vector<32x96xbf16>, vector<16x96xf32> -> vector<16x96xf32>
    %247 = vector.extract_strided_slice %246 {offsets = [0, 0], sizes = [16, 8], strides = [1, 1]} : vector<16x96xf32> to vector<16x8xf32>
    %248 = arith.truncf %247 : vector<16x8xf32> to vector<16x8xbf16>
    %249 = vector.shape_cast %248 : vector<16x8xbf16> to vector<2x8x8xbf16>
    %250 = vector.extract_strided_slice %246 {offsets = [0, 32], sizes = [16, 8], strides = [1, 1]} : vector<16x96xf32> to vector<16x8xf32>
    %251 = arith.truncf %250 : vector<16x8xf32> to vector<16x8xbf16>
    %252 = vector.shape_cast %251 : vector<16x8xbf16> to vector<2x8x8xbf16>
    %253 = vector.extract_strided_slice %246 {offsets = [0, 64], sizes = [16, 8], strides = [1, 1]} : vector<16x96xf32> to vector<16x8xf32>
    %254 = arith.truncf %253 : vector<16x8xf32> to vector<16x8xbf16>
    %255 = vector.shape_cast %254 : vector<16x8xbf16> to vector<2x8x8xbf16>
    "tpu.trace_start"() <{level = 10 : i32, message = "bsd,btd->bst"}> : () -> ()
    %cst_89 = arith.constant dense<0.000000e+00> : vector<2x8x8xf32>
    %256 = tpu.matmul %249, %252, %cst_89 {dimension_numbers = #tpu.dot_dimension_numbers<[2], [2], [1], [1], [0, 0, 0, 1, 1, 1], [0], [0]>} : vector<2x8x8xbf16>, vector<2x8x8xbf16>, vector<2x8x8xf32> -> vector<2x8x8xf32>
    "tpu.trace_stop"() : () -> ()
    %257 = vector.shape_cast %21 : vector<8x8xf32> to vector<1x8x8xf32>
    %258 = vector.broadcast %257 : vector<1x8x8xf32> to vector<2x8x8xf32>
    %259 = arith.addf %256, %258 : vector<2x8x8xf32>
    %cst_90 = arith.constant dense<0xFF800000> : vector<2x8xf32>
    %260 = vector.multi_reduction <maximumf>, %259, %cst_90 [2] : vector<2x8x8xf32> to vector<2x8xf32>
    %261 = vector.shape_cast %260 : vector<2x8xf32> to vector<2x8x1xf32>
    %262 = vector.broadcast %261 : vector<2x8x1xf32> to vector<2x8x8xf32>
    %263 = arith.subf %259, %262 : vector<2x8x8xf32>
    %264 = math.exp %263 : vector<2x8x8xf32>
    %cst_91 = arith.constant dense<0.000000e+00> : vector<2x8xf32>
    %265 = vector.multi_reduction <add>, %264, %cst_91 [2] : vector<2x8x8xf32> to vector<2x8xf32>
    %266 = vector.shape_cast %265 : vector<2x8xf32> to vector<2x8x1xf32>
    %267 = tpu.reciprocal %266 {approx = true} : vector<2x8x1xf32> -> vector<2x8x1xf32>
    %268 = vector.broadcast %267 : vector<2x8x1xf32> to vector<2x8x8xf32>
    %269 = arith.mulf %264, %268 : vector<2x8x8xf32>
    %270 = arith.truncf %269 : vector<2x8x8xf32> to vector<2x8x8xbf16>
    "tpu.trace_start"() <{level = 10 : i32, message = "bst,btd->bsd"}> : () -> ()
    %cst_92 = arith.constant dense<0.000000e+00> : vector<2x8x8xf32>
    %271 = tpu.matmul %270, %255, %cst_92 {dimension_numbers = #tpu.dot_dimension_numbers<[2], [1], [1], [2], [0, 0, 0, 1, 1, 2], [0], [0]>} : vector<2x8x8xbf16>, vector<2x8x8xbf16>, vector<2x8x8xf32> -> vector<2x8x8xf32>
    "tpu.trace_stop"() : () -> ()
    %272 = vector.shape_cast %271 : vector<2x8x8xf32> to vector<16x8xf32>
    %273 = vector.extract_strided_slice %246 {offsets = [0, 8], sizes = [16, 8], strides = [1, 1]} : vector<16x96xf32> to vector<16x8xf32>
    %274 = arith.truncf %273 : vector<16x8xf32> to vector<16x8xbf16>
    %275 = vector.shape_cast %274 : vector<16x8xbf16> to vector<2x8x8xbf16>
    %276 = vector.extract_strided_slice %246 {offsets = [0, 40], sizes = [16, 8], strides = [1, 1]} : vector<16x96xf32> to vector<16x8xf32>
    %277 = arith.truncf %276 : vector<16x8xf32> to vector<16x8xbf16>
    %278 = vector.shape_cast %277 : vector<16x8xbf16> to vector<2x8x8xbf16>
    %279 = vector.extract_strided_slice %246 {offsets = [0, 72], sizes = [16, 8], strides = [1, 1]} : vector<16x96xf32> to vector<16x8xf32>
    %280 = arith.truncf %279 : vector<16x8xf32> to vector<16x8xbf16>
    %281 = vector.shape_cast %280 : vector<16x8xbf16> to vector<2x8x8xbf16>
    "tpu.trace_start"() <{level = 10 : i32, message = "bsd,btd->bst"}> : () -> ()
    %cst_93 = arith.constant dense<0.000000e+00> : vector<2x8x8xf32>
    %282 = tpu.matmul %275, %278, %cst_93 {dimension_numbers = #tpu.dot_dimension_numbers<[2], [2], [1], [1], [0, 0, 0, 1, 1, 1], [0], [0]>} : vector<2x8x8xbf16>, vector<2x8x8xbf16>, vector<2x8x8xf32> -> vector<2x8x8xf32>
    "tpu.trace_stop"() : () -> ()
    %283 = vector.shape_cast %21 : vector<8x8xf32> to vector<1x8x8xf32>
    %284 = vector.broadcast %283 : vector<1x8x8xf32> to vector<2x8x8xf32>
    %285 = arith.addf %282, %284 : vector<2x8x8xf32>
    %cst_94 = arith.constant dense<0xFF800000> : vector<2x8xf32>
    %286 = vector.multi_reduction <maximumf>, %285, %cst_94 [2] : vector<2x8x8xf32> to vector<2x8xf32>
    %287 = vector.shape_cast %286 : vector<2x8xf32> to vector<2x8x1xf32>
    %288 = vector.broadcast %287 : vector<2x8x1xf32> to vector<2x8x8xf32>
    %289 = arith.subf %285, %288 : vector<2x8x8xf32>
    %290 = math.exp %289 : vector<2x8x8xf32>
    %cst_95 = arith.constant dense<0.000000e+00> : vector<2x8xf32>
    %291 = vector.multi_reduction <add>, %290, %cst_95 [2] : vector<2x8x8xf32> to vector<2x8xf32>
    %292 = vector.shape_cast %291 : vector<2x8xf32> to vector<2x8x1xf32>
    %293 = tpu.reciprocal %292 {approx = true} : vector<2x8x1xf32> -> vector<2x8x1xf32>
    %294 = vector.broadcast %293 : vector<2x8x1xf32> to vector<2x8x8xf32>
    %295 = arith.mulf %290, %294 : vector<2x8x8xf32>
    %296 = arith.truncf %295 : vector<2x8x8xf32> to vector<2x8x8xbf16>
    "tpu.trace_start"() <{level = 10 : i32, message = "bst,btd->bsd"}> : () -> ()
    %cst_96 = arith.constant dense<0.000000e+00> : vector<2x8x8xf32>
    %297 = tpu.matmul %296, %281, %cst_96 {dimension_numbers = #tpu.dot_dimension_numbers<[2], [1], [1], [2], [0, 0, 0, 1, 1, 2], [0], [0]>} : vector<2x8x8xbf16>, vector<2x8x8xbf16>, vector<2x8x8xf32> -> vector<2x8x8xf32>
    "tpu.trace_stop"() : () -> ()
    %298 = vector.shape_cast %297 : vector<2x8x8xf32> to vector<16x8xf32>
    %299 = vector.extract_strided_slice %246 {offsets = [0, 16], sizes = [16, 8], strides = [1, 1]} : vector<16x96xf32> to vector<16x8xf32>
    %300 = arith.truncf %299 : vector<16x8xf32> to vector<16x8xbf16>
    %301 = vector.shape_cast %300 : vector<16x8xbf16> to vector<2x8x8xbf16>
    %302 = vector.extract_strided_slice %246 {offsets = [0, 48], sizes = [16, 8], strides = [1, 1]} : vector<16x96xf32> to vector<16x8xf32>
    %303 = arith.truncf %302 : vector<16x8xf32> to vector<16x8xbf16>
    %304 = vector.shape_cast %303 : vector<16x8xbf16> to vector<2x8x8xbf16>
    %305 = vector.extract_strided_slice %246 {offsets = [0, 80], sizes = [16, 8], strides = [1, 1]} : vector<16x96xf32> to vector<16x8xf32>
    %306 = arith.truncf %305 : vector<16x8xf32> to vector<16x8xbf16>
    %307 = vector.shape_cast %306 : vector<16x8xbf16> to vector<2x8x8xbf16>
    "tpu.trace_start"() <{level = 10 : i32, message = "bsd,btd->bst"}> : () -> ()
    %cst_97 = arith.constant dense<0.000000e+00> : vector<2x8x8xf32>
    %308 = tpu.matmul %301, %304, %cst_97 {dimension_numbers = #tpu.dot_dimension_numbers<[2], [2], [1], [1], [0, 0, 0, 1, 1, 1], [0], [0]>} : vector<2x8x8xbf16>, vector<2x8x8xbf16>, vector<2x8x8xf32> -> vector<2x8x8xf32>
    "tpu.trace_stop"() : () -> ()
    %309 = vector.shape_cast %21 : vector<8x8xf32> to vector<1x8x8xf32>
    %310 = vector.broadcast %309 : vector<1x8x8xf32> to vector<2x8x8xf32>
    %311 = arith.addf %308, %310 : vector<2x8x8xf32>
    %cst_98 = arith.constant dense<0xFF800000> : vector<2x8xf32>
    %312 = vector.multi_reduction <maximumf>, %311, %cst_98 [2] : vector<2x8x8xf32> to vector<2x8xf32>
    %313 = vector.shape_cast %312 : vector<2x8xf32> to vector<2x8x1xf32>
    %314 = vector.broadcast %313 : vector<2x8x1xf32> to vector<2x8x8xf32>
    %315 = arith.subf %311, %314 : vector<2x8x8xf32>
    %316 = math.exp %315 : vector<2x8x8xf32>
    %cst_99 = arith.constant dense<0.000000e+00> : vector<2x8xf32>
    %317 = vector.multi_reduction <add>, %316, %cst_99 [2] : vector<2x8x8xf32> to vector<2x8xf32>
    %318 = vector.shape_cast %317 : vector<2x8xf32> to vector<2x8x1xf32>
    %319 = tpu.reciprocal %318 {approx = true} : vector<2x8x1xf32> -> vector<2x8x1xf32>
    %320 = vector.broadcast %319 : vector<2x8x1xf32> to vector<2x8x8xf32>
    %321 = arith.mulf %316, %320 : vector<2x8x8xf32>
    %322 = arith.truncf %321 : vector<2x8x8xf32> to vector<2x8x8xbf16>
    "tpu.trace_start"() <{level = 10 : i32, message = "bst,btd->bsd"}> : () -> ()
    %cst_100 = arith.constant dense<0.000000e+00> : vector<2x8x8xf32>
    %323 = tpu.matmul %322, %307, %cst_100 {dimension_numbers = #tpu.dot_dimension_numbers<[2], [1], [1], [2], [0, 0, 0, 1, 1, 2], [0], [0]>} : vector<2x8x8xbf16>, vector<2x8x8xbf16>, vector<2x8x8xf32> -> vector<2x8x8xf32>
    "tpu.trace_stop"() : () -> ()
    %324 = vector.shape_cast %323 : vector<2x8x8xf32> to vector<16x8xf32>
    %325 = vector.extract_strided_slice %246 {offsets = [0, 24], sizes = [16, 8], strides = [1, 1]} : vector<16x96xf32> to vector<16x8xf32>
    %326 = arith.truncf %325 : vector<16x8xf32> to vector<16x8xbf16>
    %327 = vector.shape_cast %326 : vector<16x8xbf16> to vector<2x8x8xbf16>
    %328 = vector.extract_strided_slice %246 {offsets = [0, 56], sizes = [16, 8], strides = [1, 1]} : vector<16x96xf32> to vector<16x8xf32>
    %329 = arith.truncf %328 : vector<16x8xf32> to vector<16x8xbf16>
    %330 = vector.shape_cast %329 : vector<16x8xbf16> to vector<2x8x8xbf16>
    %331 = vector.extract_strided_slice %246 {offsets = [0, 88], sizes = [16, 8], strides = [1, 1]} : vector<16x96xf32> to vector<16x8xf32>
    %332 = arith.truncf %331 : vector<16x8xf32> to vector<16x8xbf16>
    %333 = vector.shape_cast %332 : vector<16x8xbf16> to vector<2x8x8xbf16>
    "tpu.trace_start"() <{level = 10 : i32, message = "bsd,btd->bst"}> : () -> ()
    %cst_101 = arith.constant dense<0.000000e+00> : vector<2x8x8xf32>
    %334 = tpu.matmul %327, %330, %cst_101 {dimension_numbers = #tpu.dot_dimension_numbers<[2], [2], [1], [1], [0, 0, 0, 1, 1, 1], [0], [0]>} : vector<2x8x8xbf16>, vector<2x8x8xbf16>, vector<2x8x8xf32> -> vector<2x8x8xf32>
    "tpu.trace_stop"() : () -> ()
    %335 = vector.shape_cast %21 : vector<8x8xf32> to vector<1x8x8xf32>
    %336 = vector.broadcast %335 : vector<1x8x8xf32> to vector<2x8x8xf32>
    %337 = arith.addf %334, %336 : vector<2x8x8xf32>
    %cst_102 = arith.constant dense<0xFF800000> : vector<2x8xf32>
    %338 = vector.multi_reduction <maximumf>, %337, %cst_102 [2] : vector<2x8x8xf32> to vector<2x8xf32>
    %339 = vector.shape_cast %338 : vector<2x8xf32> to vector<2x8x1xf32>
    %340 = vector.broadcast %339 : vector<2x8x1xf32> to vector<2x8x8xf32>
    %341 = arith.subf %337, %340 : vector<2x8x8xf32>
    %342 = math.exp %341 : vector<2x8x8xf32>
    %cst_103 = arith.constant dense<0.000000e+00> : vector<2x8xf32>
    %343 = vector.multi_reduction <add>, %342, %cst_103 [2] : vector<2x8x8xf32> to vector<2x8xf32>
    %344 = vector.shape_cast %343 : vector<2x8xf32> to vector<2x8x1xf32>
    %345 = tpu.reciprocal %344 {approx = true} : vector<2x8x1xf32> -> vector<2x8x1xf32>
    %346 = vector.broadcast %345 : vector<2x8x1xf32> to vector<2x8x8xf32>
    %347 = arith.mulf %342, %346 : vector<2x8x8xf32>
    %348 = arith.truncf %347 : vector<2x8x8xf32> to vector<2x8x8xbf16>
    "tpu.trace_start"() <{level = 10 : i32, message = "bst,btd->bsd"}> : () -> ()
    %cst_104 = arith.constant dense<0.000000e+00> : vector<2x8x8xf32>
    %349 = tpu.matmul %348, %333, %cst_104 {dimension_numbers = #tpu.dot_dimension_numbers<[2], [1], [1], [2], [0, 0, 0, 1, 1, 2], [0], [0]>} : vector<2x8x8xbf16>, vector<2x8x8xbf16>, vector<2x8x8xf32> -> vector<2x8x8xf32>
    "tpu.trace_stop"() : () -> ()
    %350 = vector.shape_cast %349 : vector<2x8x8xf32> to vector<16x8xf32>
    %351 = tpu.concatenate %272, %298, %324, %350 in 1 : vector<16x8xf32>, vector<16x8xf32>, vector<16x8xf32>, vector<16x8xf32> -> vector<16x32xf32>
    %352 = arith.truncf %351 : vector<16x32xf32> to vector<16x32xbf16>
    %c1_105 = arith.constant 1 : index
    %c0_106 = arith.constant 0 : index
    %c0_107 = arith.constant 0 : index
    %353 = vector.load %arg5[%c1_105, %c0_106, %c0_107] : memref<2x32x32xbf16, #tpu.memory_space<vmem>>, vector<1x32x32xbf16>
    %354 = vector.shape_cast %353 : vector<1x32x32xbf16> to vector<32x32xbf16>
    %cst_108 = arith.constant dense<0.000000e+00> : vector<16x32xf32>
    %355 = tpu.matmul %352, %354, %cst_108 {dimension_numbers = #tpu.dot_dimension_numbers<[1], [0], [0], [1], [0, 0, 1, 1], [], []>} : vector<16x32xbf16>, vector<32x32xbf16>, vector<16x32xf32> -> vector<16x32xf32>
    %356 = arith.addf %218, %355 : vector<16x32xf32>
    %c1_109 = arith.constant 1 : index
    %c0_110 = arith.constant 0 : index
    %c0_111 = arith.constant 0 : index
    %357 = vector.load %arg6[%c1_109, %c0_110, %c0_111] : memref<2x1x32xf32, #tpu.memory_space<vmem>>, vector<1x1x32xf32>
    %358 = vector.shape_cast %357 : vector<1x1x32xf32> to vector<1x32xf32>
    %359 = vector.broadcast %358 : vector<1x32xf32> to vector<16x32xf32>
    %360 = arith.addf %356, %359 : vector<16x32xf32>
    %c1_112 = arith.constant 1 : index
    %c0_113 = arith.constant 0 : index
    %c0_114 = arith.constant 0 : index
    %361 = vector.load %arg13[%c1_112, %c0_113, %c0_114] : memref<2x1x32xf32, #tpu.memory_space<vmem>>, vector<1x1x32xf32>
    %362 = vector.shape_cast %361 : vector<1x1x32xf32> to vector<1x32xf32>
    %c1_115 = arith.constant 1 : index
    %c0_116 = arith.constant 0 : index
    %c0_117 = arith.constant 0 : index
    %363 = vector.load %arg14[%c1_115, %c0_116, %c0_117] : memref<2x1x32xf32, #tpu.memory_space<vmem>>, vector<1x1x32xf32>
    %364 = vector.shape_cast %363 : vector<1x1x32xf32> to vector<1x32xf32>
    %cst_118 = arith.constant dense<0.000000e+00> : vector<16xf32>
    %365 = vector.multi_reduction <add>, %360, %cst_118 [1] : vector<16x32xf32> to vector<16xf32>
    %366 = vector.shape_cast %365 : vector<16xf32> to vector<16x1xf32>
    %cst_119 = arith.constant 3.200000e+01 : f32
    %367 = vector.broadcast %cst_119 : f32 to vector<16x1xf32>
    %368 = arith.divf %366, %367 : vector<16x1xf32>
    %369 = vector.broadcast %368 : vector<16x1xf32> to vector<16x32xf32>
    %370 = arith.subf %360, %369 : vector<16x32xf32>
    %371 = arith.mulf %370, %370 : vector<16x32xf32>
    %cst_120 = arith.constant dense<0.000000e+00> : vector<16xf32>
    %372 = vector.multi_reduction <add>, %371, %cst_120 [1] : vector<16x32xf32> to vector<16xf32>
    %373 = vector.shape_cast %372 : vector<16xf32> to vector<16x1xf32>
    %cst_121 = arith.constant 3.200000e+01 : f32
    %374 = vector.broadcast %cst_121 : f32 to vector<16x1xf32>
    %375 = arith.divf %373, %374 : vector<16x1xf32>
    %cst_122 = arith.constant 9.99999974E-6 : f32
    %376 = vector.broadcast %cst_122 : f32 to vector<16x1xf32>
    %377 = arith.addf %375, %376 : vector<16x1xf32>
    %378 = math.rsqrt %377 : vector<16x1xf32>
    %379 = vector.broadcast %378 : vector<16x1xf32> to vector<16x32xf32>
    %380 = arith.mulf %370, %379 : vector<16x32xf32>
    %381 = vector.broadcast %362 : vector<1x32xf32> to vector<16x32xf32>
    %382 = arith.mulf %380, %381 : vector<16x32xf32>
    %383 = vector.broadcast %364 : vector<1x32xf32> to vector<16x32xf32>
    %384 = arith.addf %382, %383 : vector<16x32xf32>
    %385 = arith.truncf %384 : vector<16x32xf32> to vector<16x32xbf16>
    %c1_123 = arith.constant 1 : index
    %c0_124 = arith.constant 0 : index
    %c0_125 = arith.constant 0 : index
    %386 = vector.load %arg7[%c1_123, %c0_124, %c0_125] : memref<2x32x128xbf16, #tpu.memory_space<vmem>>, vector<1x32x128xbf16>
    %387 = vector.shape_cast %386 : vector<1x32x128xbf16> to vector<32x128xbf16>
    %cst_126 = arith.constant dense<0.000000e+00> : vector<16x128xf32>
    %388 = tpu.matmul %385, %387, %cst_126 {dimension_numbers = #tpu.dot_dimension_numbers<[1], [0], [0], [1], [0, 0, 1, 1], [], []>} : vector<16x32xbf16>, vector<32x128xbf16>, vector<16x128xf32> -> vector<16x128xf32>
    %c1_127 = arith.constant 1 : index
    %c0_128 = arith.constant 0 : index
    %c0_129 = arith.constant 0 : index
    %389 = vector.load %arg8[%c1_127, %c0_128, %c0_129] : memref<2x1x128xf32, #tpu.memory_space<vmem>>, vector<1x1x128xf32>
    %390 = vector.shape_cast %389 : vector<1x1x128xf32> to vector<1x128xf32>
    %391 = vector.broadcast %390 : vector<1x128xf32> to vector<16x128xf32>
    %392 = arith.addf %388, %391 : vector<16x128xf32>
    %cst_130 = arith.constant 5.000000e-01 : f32
    %393 = vector.broadcast %cst_130 : f32 to vector<16x128xf32>
    %394 = arith.mulf %393, %392 : vector<16x128xf32>
    %cst_131 = arith.constant 0.636619746 : f32
    %395 = math.sqrt %cst_131 : f32
    %cst_132 = arith.constant 4.471500e-02 : f32
    %396 = vector.broadcast %cst_132 : f32 to vector<16x128xf32>
    %397 = arith.mulf %396, %392 : vector<16x128xf32>
    %398 = arith.mulf %397, %392 : vector<16x128xf32>
    %399 = arith.mulf %398, %392 : vector<16x128xf32>
    %400 = arith.addf %392, %399 : vector<16x128xf32>
    %401 = vector.broadcast %395 : f32 to vector<16x128xf32>
    %402 = arith.mulf %401, %400 : vector<16x128xf32>
    %403 = math.tanh %402 : vector<16x128xf32>
    %cst_133 = arith.constant 1.000000e+00 : f32
    %404 = vector.broadcast %cst_133 : f32 to vector<16x128xf32>
    %405 = arith.addf %404, %403 : vector<16x128xf32>
    %406 = arith.mulf %394, %405 : vector<16x128xf32>
    %407 = arith.truncf %406 : vector<16x128xf32> to vector<16x128xbf16>
    %c1_134 = arith.constant 1 : index
    %c0_135 = arith.constant 0 : index
    %c0_136 = arith.constant 0 : index
    %408 = vector.load %arg9[%c1_134, %c0_135, %c0_136] : memref<2x128x32xbf16, #tpu.memory_space<vmem>>, vector<1x128x32xbf16>
    %409 = vector.shape_cast %408 : vector<1x128x32xbf16> to vector<128x32xbf16>
    %cst_137 = arith.constant dense<0.000000e+00> : vector<16x32xf32>
    %410 = tpu.matmul %407, %409, %cst_137 {dimension_numbers = #tpu.dot_dimension_numbers<[1], [0], [0], [1], [0, 0, 1, 1], [], []>} : vector<16x128xbf16>, vector<128x32xbf16>, vector<16x32xf32> -> vector<16x32xf32>
    %c1_138 = arith.constant 1 : index
    %c0_139 = arith.constant 0 : index
    %c0_140 = arith.constant 0 : index
    %411 = vector.load %arg10[%c1_138, %c0_139, %c0_140] : memref<2x1x32xf32, #tpu.memory_space<vmem>>, vector<1x1x32xf32>
    %412 = vector.shape_cast %411 : vector<1x1x32xf32> to vector<1x32xf32>
    %413 = vector.broadcast %412 : vector<1x32xf32> to vector<16x32xf32>
    %414 = arith.addf %410, %413 : vector<16x32xf32>
    %415 = arith.addf %360, %414 : vector<16x32xf32>
    %c0_141 = arith.constant 0 : index
    %c0_142 = arith.constant 0 : index
    %416 = vector.load %arg15[%c0_141, %c0_142] : memref<1x32xf32, #tpu.memory_space<vmem>>, vector<1x32xf32>
    %c0_143 = arith.constant 0 : index
    %c0_144 = arith.constant 0 : index
    %417 = vector.load %arg16[%c0_143, %c0_144] : memref<1x32xf32, #tpu.memory_space<vmem>>, vector<1x32xf32>
    %cst_145 = arith.constant dense<0.000000e+00> : vector<16xf32>
    %418 = vector.multi_reduction <add>, %415, %cst_145 [1] : vector<16x32xf32> to vector<16xf32>
    %419 = vector.shape_cast %418 : vector<16xf32> to vector<16x1xf32>
    %cst_146 = arith.constant 3.200000e+01 : f32
    %420 = vector.broadcast %cst_146 : f32 to vector<16x1xf32>
    %421 = arith.divf %419, %420 : vector<16x1xf32>
    %422 = vector.broadcast %421 : vector<16x1xf32> to vector<16x32xf32>
    %423 = arith.subf %415, %422 : vector<16x32xf32>
    %424 = arith.mulf %423, %423 : vector<16x32xf32>
    %cst_147 = arith.constant dense<0.000000e+00> : vector<16xf32>
    %425 = vector.multi_reduction <add>, %424, %cst_147 [1] : vector<16x32xf32> to vector<16xf32>
    %426 = vector.shape_cast %425 : vector<16xf32> to vector<16x1xf32>
    %cst_148 = arith.constant 3.200000e+01 : f32
    %427 = vector.broadcast %cst_148 : f32 to vector<16x1xf32>
    %428 = arith.divf %426, %427 : vector<16x1xf32>
    %cst_149 = arith.constant 9.99999974E-6 : f32
    %429 = vector.broadcast %cst_149 : f32 to vector<16x1xf32>
    %430 = arith.addf %428, %429 : vector<16x1xf32>
    %431 = math.rsqrt %430 : vector<16x1xf32>
    %432 = vector.broadcast %431 : vector<16x1xf32> to vector<16x32xf32>
    %433 = arith.mulf %423, %432 : vector<16x32xf32>
    %434 = vector.broadcast %416 : vector<1x32xf32> to vector<16x32xf32>
    %435 = arith.mulf %433, %434 : vector<16x32xf32>
    %436 = vector.broadcast %417 : vector<1x32xf32> to vector<16x32xf32>
    %437 = arith.addf %435, %436 : vector<16x32xf32>
    %438 = arith.truncf %437 : vector<16x32xf32> to vector<16x32xbf16>
    %c0_150 = arith.constant 0 : index
    %c0_151 = arith.constant 0 : index
    %439 = vector.load %arg17[%c0_150, %c0_151] : memref<32x128xbf16, #tpu.memory_space<vmem>>, vector<32x128xbf16>
    %cst_152 = arith.constant dense<0.000000e+00> : vector<16x128xf32>
    %440 = tpu.matmul %438, %439, %cst_152 {dimension_numbers = #tpu.dot_dimension_numbers<[1], [0], [0], [1], [0, 0, 1, 1], [], []>} : vector<16x32xbf16>, vector<32x128xbf16>, vector<16x128xf32> -> vector<16x128xf32>
    %441 = vector.shape_cast %440 : vector<16x128xf32> to vector<2x8x128xf32>
    %c0_153 = arith.constant 0 : index
    %c0_154 = arith.constant 0 : index
    %c0_155 = arith.constant 0 : index
    %442 = vector.load %arg18[%c0_153, %c0_154, %c0_155] : memref<2x8x128xf32, #tpu.memory_space<vmem>>, vector<2x8x128xf32>
    tpu.vector_store %arg18[%c0_153, %c0_154, %c0_155], %441 {strides = array<i32>} : memref<2x8x128xf32, #tpu.memory_space<vmem>>, vector<2x8x128xf32>,
    return
  }
  func.func @transform_0(%arg0: i32) -> (i32, i32, i32) {
    %c0_i32 = arith.constant 0 : i32
    %c0_i32_0 = arith.constant 0 : i32
    %c0_i32_1 = arith.constant 0 : i32
    return %arg0, %c0_i32, %c0_i32_0 : i32, i32, i32
  }
  func.func @transform_1(%arg0: i32) -> (i32, i32) {
    %c0_i32 = arith.constant 0 : i32
    %c0_i32_0 = arith.constant 0 : i32
    %c0_i32_1 = arith.constant 0 : i32
    return %c0_i32, %c0_i32_0 : i32, i32
  }
  func.func @transform_2(%arg0: i32) -> (i32, i32) {
    %c0_i32 = arith.constant 0 : i32
    %c0_i32_0 = arith.constant 0 : i32
    %c0_i32_1 = arith.constant 0 : i32
    return %c0_i32, %c0_i32_0 : i32, i32
  }
  func.func @transform_3(%arg0: i32) -> (i32, i32, i32) {
    %c0_i32 = arith.constant 0 : i32
    %c0_i32_0 = arith.constant 0 : i32
    %c0_i32_1 = arith.constant 0 : i32
    %c0_i32_2 = arith.constant 0 : i32
    return %c0_i32, %c0_i32_0, %c0_i32_1 : i32, i32, i32
  }
  func.func @transform_4(%arg0: i32) -> (i32, i32, i32) {
    %c0_i32 = arith.constant 0 : i32
    %c0_i32_0 = arith.constant 0 : i32
    %c0_i32_1 = arith.constant 0 : i32
    %c0_i32_2 = arith.constant 0 : i32
    return %c0_i32, %c0_i32_0, %c0_i32_1 : i32, i32, i32
  }
  func.func @transform_5(%arg0: i32) -> (i32, i32, i32) {
    %c0_i32 = arith.constant 0 : i32
    %c0_i32_0 = arith.constant 0 : i32
    %c0_i32_1 = arith.constant 0 : i32
    %c0_i32_2 = arith.constant 0 : i32
    return %c0_i32, %c0_i32_0, %c0_i32_1 : i32, i32, i32
  }
  func.func @transform_6(%arg0: i32) -> (i32, i32, i32) {
    %c0_i32 = arith.constant 0 : i32
    %c0_i32_0 = arith.constant 0 : i32
    %c0_i32_1 = arith.constant 0 : i32
    %c0_i32_2 = arith.constant 0 : i32
    return %c0_i32, %c0_i32_0, %c0_i32_1 : i32, i32, i32
  }
  func.func @transform_7(%arg0: i32) -> (i32, i32, i32) {
    %c0_i32 = arith.constant 0 : i32
    %c0_i32_0 = arith.constant 0 : i32
    %c0_i32_1 = arith.constant 0 : i32
    %c0_i32_2 = arith.constant 0 : i32
    return %c0_i32, %c0_i32_0, %c0_i32_1 : i32, i32, i32
  }
  func.func @transform_8(%arg0: i32) -> (i32, i32, i32) {
    %c0_i32 = arith.constant 0 : i32
    %c0_i32_0 = arith.constant 0 : i32
    %c0_i32_1 = arith.constant 0 : i32
    %c0_i32_2 = arith.constant 0 : i32
    return %c0_i32, %c0_i32_0, %c0_i32_1 : i32, i32, i32
  }
  func.func @transform_9(%arg0: i32) -> (i32, i32, i32) {
    %c0_i32 = arith.constant 0 : i32
    %c0_i32_0 = arith.constant 0 : i32
    %c0_i32_1 = arith.constant 0 : i32
    %c0_i32_2 = arith.constant 0 : i32
    return %c0_i32, %c0_i32_0, %c0_i32_1 : i32, i32, i32
  }
  func.func @transform_10(%arg0: i32) -> (i32, i32, i32) {
    %c0_i32 = arith.constant 0 : i32
    %c0_i32_0 = arith.constant 0 : i32
    %c0_i32_1 = arith.constant 0 : i32
    %c0_i32_2 = arith.constant 0 : i32
    return %c0_i32, %c0_i32_0, %c0_i32_1 : i32, i32, i32
  }
  func.func @transform_11(%arg0: i32) -> (i32, i32, i32) {
    %c0_i32 = arith.constant 0 : i32
    %c0_i32_0 = arith.constant 0 : i32
    %c0_i32_1 = arith.constant 0 : i32
    %c0_i32_2 = arith.constant 0 : i32
    return %c0_i32, %c0_i32_0, %c0_i32_1 : i32, i32, i32
  }
  func.func @transform_12(%arg0: i32) -> (i32, i32, i32) {
    %c0_i32 = arith.constant 0 : i32
    %c0_i32_0 = arith.constant 0 : i32
    %c0_i32_1 = arith.constant 0 : i32
    %c0_i32_2 = arith.constant 0 : i32
    return %c0_i32, %c0_i32_0, %c0_i32_1 : i32, i32, i32
  }
  func.func @transform_13(%arg0: i32) -> (i32, i32, i32) {
    %c0_i32 = arith.constant 0 : i32
    %c0_i32_0 = arith.constant 0 : i32
    %c0_i32_1 = arith.constant 0 : i32
    %c0_i32_2 = arith.constant 0 : i32
    return %c0_i32, %c0_i32_0, %c0_i32_1 : i32, i32, i32
  }
  func.func @transform_14(%arg0: i32) -> (i32, i32) {
    %c0_i32 = arith.constant 0 : i32
    %c0_i32_0 = arith.constant 0 : i32
    %c0_i32_1 = arith.constant 0 : i32
    return %c0_i32, %c0_i32_0 : i32, i32
  }
  func.func @transform_15(%arg0: i32) -> (i32, i32) {
    %c0_i32 = arith.constant 0 : i32
    %c0_i32_0 = arith.constant 0 : i32
    %c0_i32_1 = arith.constant 0 : i32
    return %c0_i32, %c0_i32_0 : i32, i32
  }
  func.func @transform_16(%arg0: i32) -> (i32, i32) {
    %c0_i32 = arith.constant 0 : i32
    %c0_i32_0 = arith.constant 0 : i32
    %c0_i32_1 = arith.constant 0 : i32
    return %c0_i32, %c0_i32_0 : i32, i32
  }
  func.func @transform_17(%arg0: i32) -> (i32, i32, i32) {
    %c0_i32 = arith.constant 0 : i32
    %c0_i32_0 = arith.constant 0 : i32
    %c0_i32_1 = arith.constant 0 : i32
    return %arg0, %c0_i32, %c0_i32_0 : i32, i32, i32
  }
}

</mosaic_0001>

<llo_original>
// kernel: tpu_custom_call.1
$region0: #{tpu_custom_call.1}
  #allocation0 [shape = 'u32[]', space=smem, size = 0x4, offset = 0x4, fixed_abs, tag = 'smem constant byte address 0x4 - core index']
  #allocation1 [shape = 'u32[144,128]{1,0:T(1,128)}', space=vmem, size = 0x12000, scoped, tag = 'internal scratch']
  %s0 = inlined_call_operand.vmem [shape: s32[2,8,1], index: 0, kind: input, shape index: {}]
  %s1 = inlined_call_operand.vmem [shape: bf16[64,32], index: 1, kind: input, shape index: {}]
  %s2 = inlined_call_operand.vmem [shape: f32[8,32], index: 2, kind: input, shape index: {}]
  %s3 = inlined_call_operand.vmem [shape: bf16[2,32,96], index: 3, kind: input, shape index: {}]
  %s4 = inlined_call_operand.vmem [shape: bf16[2,32,32], index: 4, kind: input, shape index: {}]
  %s5 = inlined_call_operand.vmem [shape: f32[2,1,32], index: 5, kind: input, shape index: {}]
  %s6 = inlined_call_operand.vmem [shape: bf16[2,32,128], index: 6, kind: input, shape index: {}]
  %s7 = inlined_call_operand.vmem [shape: f32[2,1,128], index: 7, kind: input, shape index: {}]
  %s8 = inlined_call_operand.vmem [shape: bf16[2,128,32], index: 8, kind: input, shape index: {}]
  %s9 = inlined_call_operand.vmem [shape: f32[2,1,32], index: 9, kind: input, shape index: {}]
  %s10 = inlined_call_operand.vmem [shape: f32[2,1,32], index: 10, kind: input, shape index: {}]
  %s11 = inlined_call_operand.vmem [shape: f32[2,1,32], index: 11, kind: input, shape index: {}]
  %s12 = inlined_call_operand.vmem [shape: f32[2,1,32], index: 12, kind: input, shape index: {}]
  %s13 = inlined_call_operand.vmem [shape: f32[2,1,32], index: 13, kind: input, shape index: {}]
  %s14 = inlined_call_operand.vmem [shape: f32[1,32], index: 14, kind: input, shape index: {}]
  %s15 = inlined_call_operand.vmem [shape: f32[1,32], index: 15, kind: input, shape index: {}]
  %s16 = inlined_call_operand.vmem [shape: bf16[32,128], index: 16, kind: input, shape index: {}]
  %s17 = inlined_call_operand.hbm [shape: f32[2,8,128], index: 17, kind: output, shape index: {}]
  %s18 = sld [smem:[#allocation0]]
  $region78: #{tpu_custom_call.1} parent=0
    _
  %s20 = ssub.s32 1, %s18
  %s21 = scalar_select 0, %s20, %s18
  $region1: #{tpu_custom_call.1} parent=0
    #allocation2 [shape = 'u8[8192]{0}', space=vmem, size = 0x2000, scoped, tag = 'output window, operand 0, single buffered']
    #allocation3 [shape = 's32[1]{0}', space=sflag, size = 0x4, scoped, tag = 'scoped memory for tpu_custom_call.1']
    %22 = vsyncpa [#allocation3], 0
    // Predicated region
    $region2: #{tpu_custom_call.1} parent=1 // pred_check
      _
    $region3: #{tpu_custom_call.1} parent=1 // pred_check_branch
      %24 = sbr.rel (0) target = $region5
    $region4: #{tpu_custom_call.1} parent=1 // pred_region
      _
    $region5: #{tpu_custom_call.1} parent=1 // pred_fallthru
      _
    // Predicated region
    $region6: #{tpu_custom_call.1} parent=1 // pred_check
      _
    $region7: #{tpu_custom_call.1} parent=1 // pred_check_branch
      %26 = sbr.rel (0) target = $region9
    $region8: #{tpu_custom_call.1} parent=1 // pred_region
      _
    $region9: #{tpu_custom_call.1} parent=1 // pred_fallthru
      _
    // Predicated region
    $region10: #{tpu_custom_call.1} parent=1 // pred_check
      _
    $region11: #{tpu_custom_call.1} parent=1 // pred_check_branch
      %28 = sbr.rel (0) target = $region13
    $region12: #{tpu_custom_call.1} parent=1 // pred_region
      _
    $region13: #{tpu_custom_call.1} parent=1 // pred_fallthru
      _
    // Predicated region
    $region14: #{tpu_custom_call.1} parent=1 // pred_check
      _
    $region15: #{tpu_custom_call.1} parent=1 // pred_check_branch
      %30 = sbr.rel (0) target = $region17
    $region16: #{tpu_custom_call.1} parent=1 // pred_region
      _
    $region17: #{tpu_custom_call.1} parent=1 // pred_fallthru
      _
    // Predicated region
    $region18: #{tpu_custom_call.1} parent=1 // pred_check
      _
    $region19: #{tpu_custom_call.1} parent=1 // pred_check_branch
      %32 = sbr.rel (0) target = $region21
    $region20: #{tpu_custom_call.1} parent=1 // pred_region
      _
    $region21: #{tpu_custom_call.1} parent=1 // pred_fallthru
      _
    // Predicated region
    $region22: #{tpu_custom_call.1} parent=1 // pred_check
      _
    $region23: #{tpu_custom_call.1} parent=1 // pred_check_branch
      %34 = sbr.rel (0) target = $region25
    $region24: #{tpu_custom_call.1} parent=1 // pred_region
      _
    $region25: #{tpu_custom_call.1} parent=1 // pred_fallthru
      _
    // Predicated region
    $region26: #{tpu_custom_call.1} parent=1 // pred_check
      _
    $region27: #{tpu_custom_call.1} parent=1 // pred_check_branch
      %36 = sbr.rel (0) target = $region29
    $region28: #{tpu_custom_call.1} parent=1 // pred_region
      _
    $region29: #{tpu_custom_call.1} parent=1 // pred_fallthru
      _
    // Predicated region
    $region30: #{tpu_custom_call.1} parent=1 // pred_check
      _
    $region31: #{tpu_custom_call.1} parent=1 // pred_check_branch
      %38 = sbr.rel (0) target = $region33
    $region32: #{tpu_custom_call.1} parent=1 // pred_region
      _
    $region33: #{tpu_custom_call.1} parent=1 // pred_fallthru
      _
    // Predicated region
    $region34: #{tpu_custom_call.1} parent=1 // pred_check
      _
    $region35: #{tpu_custom_call.1} parent=1 // pred_check_branch
      %40 = sbr.rel (0) target = $region37
    $region36: #{tpu_custom_call.1} parent=1 // pred_region
      _
    $region37: #{tpu_custom_call.1} parent=1 // pred_fallthru
      _
    // Predicated region
    $region38: #{tpu_custom_call.1} parent=1 // pred_check
      _
    $region39: #{tpu_custom_call.1} parent=1 // pred_check_branch
      %42 = sbr.rel (0) target = $region41
    $region40: #{tpu_custom_call.1} parent=1 // pred_region
      _
    $region41: #{tpu_custom_call.1} parent=1 // pred_fallthru
      _
    // Predicated region
    $region42: #{tpu_custom_call.1} parent=1 // pred_check
      _
    $region43: #{tpu_custom_call.1} parent=1 // pred_check_branch
      %44 = sbr.rel (0) target = $region45
    $region44: #{tpu_custom_call.1} parent=1 // pred_region
      _
    $region45: #{tpu_custom_call.1} parent=1 // pred_fallthru
      _
    // Predicated region
    $region46: #{tpu_custom_call.1} parent=1 // pred_check
      _
    $region47: #{tpu_custom_call.1} parent=1 // pred_check_branch
      %46 = sbr.rel (0) target = $region49
    $region48: #{tpu_custom_call.1} parent=1 // pred_region
      _
    $region49: #{tpu_custom_call.1} parent=1 // pred_fallthru
      _
    // Predicated region
    $region50: #{tpu_custom_call.1} parent=1 // pred_check
      _
    $region51: #{tpu_custom_call.1} parent=1 // pred_check_branch
      %48 = sbr.rel (0) target = $region53
    $region52: #{tpu_custom_call.1} parent=1 // pred_region
      _
    $region53: #{tpu_custom_call.1} parent=1 // pred_fallthru
      _
    // Predicated region
    $region54: #{tpu_custom_call.1} parent=1 // pred_check
      _
    $region55: #{tpu_custom_call.1} parent=1 // pred_check_branch
      %50 = sbr.rel (0) target = $region57
    $region56: #{tpu_custom_call.1} parent=1 // pred_region
      _
    $region57: #{tpu_custom_call.1} parent=1 // pred_fallthru
      _
    // Predicated region
    $region58: #{tpu_custom_call.1} parent=1 // pred_check
      _
    $region59: #{tpu_custom_call.1} parent=1 // pred_check_branch
      %52 = sbr.rel (0) target = $region61
    $region60: #{tpu_custom_call.1} parent=1 // pred_region
      _
    $region61: #{tpu_custom_call.1} parent=1 // pred_fallthru
      _
    // Predicated region
    $region62: #{tpu_custom_call.1} parent=1 // pred_check
      _
    $region63: #{tpu_custom_call.1} parent=1 // pred_check_branch
      %54 = sbr.rel (0) target = $region65
    $region64: #{tpu_custom_call.1} parent=1 // pred_region
      _
    $region65: #{tpu_custom_call.1} parent=1 // pred_fallthru
      _
    // Predicated region
    $region66: #{tpu_custom_call.1} parent=1 // pred_check
      _
    $region67: #{tpu_custom_call.1} parent=1 // pred_check_branch
      %56 = sbr.rel (0) target = $region69
    $region68: #{tpu_custom_call.1} parent=1 // pred_region
      _
    $region69: #{tpu_custom_call.1} parent=1 // pred_fallthru
      _
    %v58 = vld [vmem:[%s0] sm:$0xff]
    %v59 = vld [vmem:[%s0 + $0x8] sm:$0xff]
    %v60 = vlaneseq
    %v61 = vand.u32 %v60, 127
    %62 = vset.pattern.permute.xlu0 0
    %63 = vperm.xlu0 %62, %v58
    %v64 = vpop.permute.xlu0 %63
    %65 = vset.pattern.permute.xlu0 0
    %66 = vperm.xlu0 %65, %v59
    %v67 = vpop.permute.xlu0 %66
    %vm68 = vcmp.eq.s32.totalorder %v61, %v64
    %vm69 = vcmp.eq.s32.totalorder %v61, %v67
    %v70 = vsel %vm68, 1, 0
    %v71 = vsel %vm69, 1, 0
    %v72 = vcvt.s32.f32 %v70
    %v73 = vcvt.s32.f32 %v71
    %v74 = vpack.c.bf16 %v73, %v72
    %v75 = vld [vmem:[%s1] sm:$0xf]
    %v76 = vld [vmem:[%s1 + $0x4] sm:$0xf]
    %v77 = vld [vmem:[%s1 + $0x8] sm:$0xf]
    %v78 = vld [vmem:[%s1 + $0xc] sm:$0xf]
    %v79 = vld [vmem:[%s1 + $0x10] sm:$0xf]
    %v80 = vld [vmem:[%s1 + $0x14] sm:$0xf]
    %v81 = vld [vmem:[%s1 + $0x18] sm:$0xf]
    %v82 = vld [vmem:[%s1 + $0x1c] sm:$0xf]
    %v91 = vunpack.c.l.b16 %v75
    %v92 = vunpack.c.l.b16 %v76
    %v93 = vunpack.c.l.b16 %v77
    %v94 = vunpack.c.l.b16 %v78
    %v95 = vunpack.c.l.b16 %v79
    %v96 = vunpack.c.l.b16 %v80
    %v97 = vunpack.c.l.b16 %v81
    %v98 = vunpack.c.l.b16 %v82
    %v99 = vpack.c.b16 %v92, %v91
    %v100 = vpack.c.b16 %v94, %v93
    %v101 = vpack.c.b16 %v96, %v95
    %v102 = vpack.c.b16 %v98, %v97
    %vm107 = vcmask 523264
    %v109 = vsel %vm107, %v74, 0
    %111 = vmatprep.subr.bf16.mxu0 0
    %112 = vmatpush1.bf16.msra.mxu0 0
    %113 = vmatprep.subr.bf16.mxu0 0
    %114 = vmatpush1.bf16.msra.mxu0 0
    %115 = vmatprep.subr.bf16.mxu0 0
    %116 = vmatpush1.bf16.msra.mxu0 0
    %117 = vmatprep.subr.bf16.mxu0 0
    %118 = vmatpush1.bf16.msra.mxu0 0
    %119 = vmatprep.subr.bf16.mxu0 0
    %120 = vmatpush1.bf16.msra.mxu0 %v102
    %121 = vmatprep.subr.bf16.mxu0 0
    %122 = vmatpush1.bf16.msra.mxu0 %v101
    %123 = vmatprep.subr.bf16.mxu0 0
    %124 = vmatpush1.bf16.msra.mxu0 %v100
    %125 = vmatprep.subr.bf16.mxu0 0
    %126 = vmatpush1.bf16.msra.mxu0 %v99
    %127 = vmatprep.subr.bf16.mxu0 0
    %128 = vmatpush2.bf16.msra.mxu0 0
    %129 = vmatprep.subr.bf16.mxu0 0
    %130 = vmatpush2.bf16.msra.mxu0 0
    %131 = vmatprep.subr.bf16.mxu0 0
    %132 = vmatpush2.bf16.msra.mxu0 0
    %133 = vmatprep.subr.bf16.mxu0 0
    %134 = vmatpush2.bf16.msra.mxu0 0
    %135 = vmatprep.subr.bf16.mxu0 0
    %136 = vmatpush2.bf16.msra.mxu0 0
    %137 = vmatprep.subr.bf16.mxu0 0
    %138 = vmatpush2.bf16.msra.mxu0 0
    %139 = vmatprep.subr.bf16.mxu0 0
    %140 = vmatpush2.bf16.msra.mxu0 0
    %141 = vmatprep.subr.bf16.mxu0 0
    %142 = vmatpush2.bf16.msra.mxu0 0
    %143 = vmatprep.mubr.bf16.mxu0 0
    %144 = vmatmul.mubr.bf16.gmra.mxu0 %v109
    %v145 = vpop.f32.mrf.mxu0
    %v146 = vadd.f32 0.0, %v145
    %v147 = vpop.f32.mrf.mxu0
    %v148 = vpop.f32.mrf.mxu0
    %v149 = vadd.f32 0.0, %v148
    %v150 = vpop.f32.mrf.mxu0
    %151 = vdwg.mxu0
    %v152 = vld [vmem:[%s2] sm:$0xff]
    %v153 = vadd.f32 %v146, %v152
    %v154 = vadd.f32 %v149, %v152
    %v155 = vlaneseq
    %v156 = vshrl.u32 %v155, 7
    %vm157 = vcmp.gt.s32.totalorder %v61, %v156
    %v158 = vsel %vm157, -1e+30, 0.0
    %v159 = vld [vmem:[%s10] sm:$0x1]
    %v160 = vld [vmem:[%s11] sm:$0x1]
    %vm161 = vcmask 261120
    %v162 = vsel %vm161, %v153, 0.0
    %163 = vadd.xlane.f32.xlu0 %v162
    %v164 = vpop.xlane.xlu0 %163
    %v165 = vsel %vm161, %v154, 0.0
    %166 = vadd.xlane.f32.xlu0 %v165
    %v167 = vpop.xlane.xlu0 %166
    %v168 = vrcp.pop 32.0
    %v169 = vmul.f32 %v164, %v168
    %v170 = vmul.f32 %v167, %v168
    %v171 = vsub.f32 %v153, %v169
    %v172 = vsub.f32 %v154, %v170
    %v173 = vmul.f32 %v171, %v171
    %v174 = vmul.f32 %v172, %v172
    %v175 = vsel %vm161, %v173, 0.0
    %176 = vadd.xlane.f32.xlu0 %v175
    %v177 = vpop.xlane.xlu0 %176
    %v178 = vsel %vm161, %v174, 0.0
    %179 = vadd.xlane.f32.xlu0 %v178
    %v180 = vpop.xlane.xlu0 %179
    %v181 = vmul.f32 %v177, %v168
    %v182 = vmul.f32 %v180, %v168
    %v183 = vadd.f32 %v181, 1e-05
    %v184 = vadd.f32 %v182, 1e-05
    %v185 = vrsqrt.pop %v183
    %v186 = vrsqrt.pop %v184
    %v187 = vmul.f32 %v171, %v185
    %v188 = vmul.f32 %v172, %v186
    %v190 = vlaneseq
    %v191 = vshrl.u32 %v190, 7
    %v192 = vsub.s32 0, %v191
    %v193 = vrot.slane %v159, %v192
    %v195 = vmul.f32 %v187, %v193
    %v196 = vmul.f32 %v188, %v193
    %v198 = vlaneseq
    %v199 = vshrl.u32 %v198, 7
    %v200 = vsub.s32 0, %v199
    %v201 = vrot.slane %v160, %v200
    %v203 = vadd.f32 %v195, %v201
    %v204 = vadd.f32 %v196, %v201
    %v205 = vpack.c.bf16 %v204, %v203
    %v206 = vld [vmem:[%s3] sm:$0xf]
    %v207 = vld [vmem:[%s3 + $0x4] sm:$0xf]
    %v208 = vld [vmem:[%s3 + $0x8] sm:$0xf]
    %v209 = vld [vmem:[%s3 + $0xc] sm:$0xf]
    %v214 = vunpack.c.l.b16 %v206
    %v215 = vunpack.c.l.b16 %v207
    %v216 = vunpack.c.l.b16 %v208
    %v217 = vunpack.c.l.b16 %v209
    %v218 = vpack.c.b16 %v215, %v214
    %v219 = vpack.c.b16 %v217, %v216
    %v223 = vsel %vm161, %v205, 0
    %225 = vmatprep.subr.bf16.mxu0 0
    %226 = vmatpush1.bf16.msra.mxu0 0
    %227 = vmatprep.subr.bf16.mxu0 0
    %228 = vmatpush1.bf16.msra.mxu0 0
    %229 = vmatprep.subr.bf16.mxu0 0
    %230 = vmatpush1.bf16.msra.mxu0 0
    %231 = vmatprep.subr.bf16.mxu0 0
    %232 = vmatpush1.bf16.msra.mxu0 0
    %233 = vmatprep.subr.bf16.mxu0 0
    %234 = vmatpush1.bf16.msra.mxu0 0
    %235 = vmatprep.subr.bf16.mxu0 0
    %236 = vmatpush1.bf16.msra.mxu0 0
    %237 = vmatprep.subr.bf16.mxu0 0
    %238 = vmatpush1.bf16.msra.mxu0 %v219
    %239 = vmatprep.subr.bf16.mxu0 0
    %240 = vmatpush1.bf16.msra.mxu0 %v218
    %241 = vmatprep.subr.bf16.mxu0 0
    %242 = vmatpush2.bf16.msra.mxu0 0
    %243 = vmatprep.subr.bf16.mxu0 0
    %244 = vmatpush2.bf16.msra.mxu0 0
    %245 = vmatprep.subr.bf16.mxu0 0
    %246 = vmatpush2.bf16.msra.mxu0 0
    %247 = vmatprep.subr.bf16.mxu0 0
    %248 = vmatpush2.bf16.msra.mxu0 0
    %249 = vmatprep.subr.bf16.mxu0 0
    %250 = vmatpush2.bf16.msra.mxu0 0
    %251 = vmatprep.subr.bf16.mxu0 0
    %252 = vmatpush2.bf16.msra.mxu0 0
    %253 = vmatprep.subr.bf16.mxu0 0
    %254 = vmatpush2.bf16.msra.mxu0 0
    %255 = vmatprep.subr.bf16.mxu0 0
    %256 = vmatpush2.bf16.msra.mxu0 0
    %257 = vmatprep.mubr.bf16.mxu0 0
    %258 = vmatmul.mubr.bf16.gmra.mxu0 %v223
    %v259 = vpop.f32.mrf.mxu0
    %v260 = vadd.f32 0.0, %v259
    %v261 = vpop.f32.mrf.mxu0
    %v262 = vpop.f32.mrf.mxu0
    %v263 = vadd.f32 0.0, %v262
    %v264 = vpop.f32.mrf.mxu0
    %265 = vdwg.mxu0
    %v266 = vpack.c.bf16 %v263, %v260
    %v268 = vunpack.c.l.b16 %v266
    %v269 = vunpack.c.h.b16 %v266
    %v270 = vpack.c.b16 %v268, %v268
    %v271 = vpack.c.b16 %v269, %v269
    %272 = vrot.lane.b32.xlu0 %v270, 96
    %v273 = vpop.permute.xlu0 %272
    %vm274 = vcmask 64512
    %v276 = vsel %vm274, %v270, 0
    %v279 = vsel %vm274, %v273, 0
    %281 = vmatprep.subr.bf16.mxu0 0
    %282 = vmatpush1.bf16.xpose.msra.mxu0 0
    %283 = vmatprep.subr.bf16.mxu0 0
    %284 = vmatpush1.bf16.xpose.msra.mxu0 0
    %285 = vmatprep.subr.bf16.mxu0 0
    %286 = vmatpush1.bf16.xpose.msra.mxu0 0
    %287 = vmatprep.subr.bf16.mxu0 0
    %288 = vmatpush1.bf16.xpose.msra.mxu0 0
    %289 = vmatprep.subr.bf16.mxu0 0
    %290 = vmatpush1.bf16.xpose.msra.mxu0 0
    %291 = vmatprep.subr.bf16.mxu0 0
    %292 = vmatpush1.bf16.xpose.msra.mxu0 0
    %293 = vmatprep.subr.bf16.mxu0 0
    %294 = vmatpush1.bf16.xpose.msra.mxu0 0
    %295 = vmatprep.subr.bf16.mxu0 0
    %296 = vmatpush1.bf16.xpose.msra.mxu0 %v279
    %297 = vmatprep.subr.bf16.mxu0 0
    %298 = vmatpush2.bf16.xpose.msra.mxu0 0
    %299 = vmatprep.subr.bf16.mxu0 0
    %300 = vmatpush2.bf16.xpose.msra.mxu0 0
    %301 = vmatprep.subr.bf16.mxu0 0
    %302 = vmatpush2.bf16.xpose.msra.mxu0 0
    %303 = vmatprep.subr.bf16.mxu0 0
    %304 = vmatpush2.bf16.xpose.msra.mxu0 0
    %305 = vmatprep.subr.bf16.mxu0 0
    %306 = vmatpush2.bf16.xpose.msra.mxu0 0
    %307 = vmatprep.subr.bf16.mxu0 0
    %308 = vmatpush2.bf16.xpose.msra.mxu0 0
    %309 = vmatprep.subr.bf16.mxu0 0
    %310 = vmatpush2.bf16.xpose.msra.mxu0 0
    %311 = vmatprep.subr.bf16.mxu0 0
    %312 = vmatpush2.bf16.xpose.msra.mxu0 0
    %313 = vmatprep.mubr.bf16.mxu0 0
    %314 = vmatmul.mubr.bf16.gmra.mxu0 %v276
    %v315 = vpop.f32.mrf.mxu0
    %v316 = vadd.f32 %v158, %v315
    %v317 = vpop.f32.mrf.mxu0
    %v318 = vpop.f32.mrf.mxu0
    %v319 = vpop.f32.mrf.mxu0
    %320 = vdwg.mxu0
    %321 = vrot.lane.b32.xlu0 %v271, 96
    %v322 = vpop.permute.xlu0 %321
    %v324 = vsel %vm274, %v271, 0
    %v327 = vsel %vm274, %v322, 0
    %329 = vmatprep.subr.bf16.mxu0 0
    %330 = vmatpush1.bf16.xpose.msra.mxu0 0
    %331 = vmatprep.subr.bf16.mxu0 0
    %332 = vmatpush1.bf16.xpose.msra.mxu0 0
    %333 = vmatprep.subr.bf16.mxu0 0
    %334 = vmatpush1.bf16.xpose.msra.mxu0 0
    %335 = vmatprep.subr.bf16.mxu0 0
    %336 = vmatpush1.bf16.xpose.msra.mxu0 0
    %337 = vmatprep.subr.bf16.mxu0 0
    %338 = vmatpush1.bf16.xpose.msra.mxu0 0
    %339 = vmatprep.subr.bf16.mxu0 0
    %340 = vmatpush1.bf16.xpose.msra.mxu0 0
    %341 = vmatprep.subr.bf16.mxu0 0
    %342 = vmatpush1.bf16.xpose.msra.mxu0 0
    %343 = vmatprep.subr.bf16.mxu0 0
    %344 = vmatpush1.bf16.xpose.msra.mxu0 %v327
    %345 = vmatprep.subr.bf16.mxu0 0
    %346 = vmatpush2.bf16.xpose.msra.mxu0 0
    %347 = vmatprep.subr.bf16.mxu0 0
    %348 = vmatpush2.bf16.xpose.msra.mxu0 0
    %349 = vmatprep.subr.bf16.mxu0 0
    %350 = vmatpush2.bf16.xpose.msra.mxu0 0
    %351 = vmatprep.subr.bf16.mxu0 0
    %352 = vmatpush2.bf16.xpose.msra.mxu0 0
    %353 = vmatprep.subr.bf16.mxu0 0
    %354 = vmatpush2.bf16.xpose.msra.mxu0 0
    %355 = vmatprep.subr.bf16.mxu0 0
    %356 = vmatpush2.bf16.xpose.msra.mxu0 0
    %357 = vmatprep.subr.bf16.mxu0 0
    %358 = vmatpush2.bf16.xpose.msra.mxu0 0
    %359 = vmatprep.subr.bf16.mxu0 0
    %360 = vmatpush2.bf16.xpose.msra.mxu0 0
    %361 = vmatprep.mubr.bf16.mxu0 0
    %362 = vmatmul.mubr.bf16.gmra.mxu0 %v324
    %v363 = vpop.f32.mrf.mxu0
    %v364 = vadd.f32 %v158, %v363
    %v365 = vpop.f32.mrf.mxu0
    %v366 = vpop.f32.mrf.mxu0
    %v367 = vpop.f32.mrf.mxu0
    %368 = vdwg.mxu0
    %v369 = vsel %vm274, %v316, -inf
    %370 = vmax.xlane.f32.xlu0 %v369
    %v371 = vpop.xlane.xlu0 %370
    %v372 = vsel %vm274, %v364, -inf
    %373 = vmax.xlane.f32.xlu0 %v372
    %v374 = vpop.xlane.xlu0 %373
    %v375 = vsub.f32 %v316, %v371
    %v376 = vsub.f32 %v364, %v374
    %v377 = vmul.f32 %v375, 1.442695
    %v378 = vpow.pop %v377
    %v379 = vmul.f32 %v376, 1.442695
    %v380 = vpow.pop %v379
    %v381 = vsel %vm274, %v378, 0.0
    %382 = vadd.xlane.f32.xlu0 %v381
    %v383 = vpop.xlane.xlu0 %382
    %v384 = vsel %vm274, %v380, 0.0
    %385 = vadd.xlane.f32.xlu0 %v384
    %v386 = vpop.xlane.xlu0 %385
    %v387 = vrcp.pop %v383
    %v388 = vrcp.pop %v386
    %v389 = vmul.f32 %v378, %v387
    %v390 = vmul.f32 %v380, %v388
    %v391 = vpack.c.bf16 %v389, %v389
    %v392 = vpack.c.bf16 %v390, %v390
    %393 = vrot.lane.b32.xlu0 %v270, 64
    %v394 = vpop.permute.xlu0 %393
    %v396 = vsel %vm274, %v391, 0
    %vm398 = vcmask 1043456
    %v400 = vsel %vm398, %v394, 0
    %402 = vmatprep.subr.bf16.mxu0 0
    %403 = vmatpush1.bf16.msra.mxu0 0
    %404 = vmatprep.subr.bf16.mxu0 0
    %405 = vmatpush1.bf16.msra.mxu0 0
    %406 = vmatprep.subr.bf16.mxu0 0
    %407 = vmatpush1.bf16.msra.mxu0 0
    %408 = vmatprep.subr.bf16.mxu0 0
    %409 = vmatpush1.bf16.msra.mxu0 0
    %410 = vmatprep.subr.bf16.mxu0 0
    %411 = vmatpush1.bf16.msra.mxu0 0
    %412 = vmatprep.subr.bf16.mxu0 0
    %413 = vmatpush1.bf16.msra.mxu0 0
    %414 = vmatprep.subr.bf16.mxu0 0
    %415 = vmatpush1.bf16.msra.mxu0 0
    %416 = vmatprep.subr.bf16.mxu0 0
    %417 = vmatpush1.bf16.msra.mxu0 %v400
    %418 = vmatprep.subr.bf16.mxu0 0
    %419 = vmatpush2.bf16.msra.mxu0 0
    %420 = vmatprep.subr.bf16.mxu0 0
    %421 = vmatpush2.bf16.msra.mxu0 0
    %422 = vmatprep.subr.bf16.mxu0 0
    %423 = vmatpush2.bf16.msra.mxu0 0
    %424 = vmatprep.subr.bf16.mxu0 0
    %425 = vmatpush2.bf16.msra.mxu0 0
    %426 = vmatprep.subr.bf16.mxu0 0
    %427 = vmatpush2.bf16.msra.mxu0 0
    %428 = vmatprep.subr.bf16.mxu0 0
    %429 = vmatpush2.bf16.msra.mxu0 0
    %430 = vmatprep.subr.bf16.mxu0 0
    %431 = vmatpush2.bf16.msra.mxu0 0
    %432 = vmatprep.subr.bf16.mxu0 0
    %433 = vmatpush2.bf16.msra.mxu0 0
    %434 = vmatprep.mubr.bf16.mxu0 0
    %435 = vmatmul.mubr.bf16.gmra.mxu0 %v396
    %v436 = vpop.f32.mrf.mxu0
    %v437 = vadd.f32 0.0, %v436
    %v438 = vpop.f32.mrf.mxu0
    %v439 = vpop.f32.mrf.mxu0
    %v440 = vpop.f32.mrf.mxu0
    %441 = vdwg.mxu0
    %442 = vrot.lane.b32.xlu0 %v271, 64
    %v443 = vpop.permute.xlu0 %442
    %v445 = vsel %vm274, %v392, 0
    %v448 = vsel %vm398, %v443, 0
    %450 = vmatprep.subr.bf16.mxu0 0
    %451 = vmatpush1.bf16.msra.mxu0 0
    %452 = vmatprep.subr.bf16.mxu0 0
    %453 = vmatpush1.bf16.msra.mxu0 0
    %454 = vmatprep.subr.bf16.mxu0 0
    %455 = vmatpush1.bf16.msra.mxu0 0
    %456 = vmatprep.subr.bf16.mxu0 0
    %457 = vmatpush1.bf16.msra.mxu0 0
    %458 = vmatprep.subr.bf16.mxu0 0
    %459 = vmatpush1.bf16.msra.mxu0 0
    %460 = vmatprep.subr.bf16.mxu0 0
    %461 = vmatpush1.bf16.msra.mxu0 0
    %462 = vmatprep.subr.bf16.mxu0 0
    %463 = vmatpush1.bf16.msra.mxu0 0
    %464 = vmatprep.subr.bf16.mxu0 0
    %465 = vmatpush1.bf16.msra.mxu0 %v448
    %466 = vmatprep.subr.bf16.mxu0 0
    %467 = vmatpush2.bf16.msra.mxu0 0
    %468 = vmatprep.subr.bf16.mxu0 0
    %469 = vmatpush2.bf16.msra.mxu0 0
    %470 = vmatprep.subr.bf16.mxu0 0
    %471 = vmatpush2.bf16.msra.mxu0 0
    %472 = vmatprep.subr.bf16.mxu0 0
    %473 = vmatpush2.bf16.msra.mxu0 0
    %474 = vmatprep.subr.bf16.mxu0 0
    %475 = vmatpush2.bf16.msra.mxu0 0
    %476 = vmatprep.subr.bf16.mxu0 0
    %477 = vmatpush2.bf16.msra.mxu0 0
    %478 = vmatprep.subr.bf16.mxu0 0
    %479 = vmatpush2.bf16.msra.mxu0 0
    %480 = vmatprep.subr.bf16.mxu0 0
    %481 = vmatpush2.bf16.msra.mxu0 0
    %482 = vmatprep.mubr.bf16.mxu0 0
    %483 = vmatmul.mubr.bf16.gmra.mxu0 %v445
    %v484 = vpop.f32.mrf.mxu0
    %v485 = vadd.f32 0.0, %v484
    %v486 = vpop.f32.mrf.mxu0
    %v487 = vpop.f32.mrf.mxu0
    %v488 = vpop.f32.mrf.mxu0
    %489 = vdwg.mxu0
    %490 = vrot.lane.b32.xlu0 %v270, 120
    %v491 = vpop.permute.xlu0 %490
    %492 = vrot.lane.b32.xlu0 %v270, 88
    %v493 = vpop.permute.xlu0 %492
    %v495 = vsel %vm274, %v491, 0
    %v498 = vsel %vm274, %v493, 0
    %500 = vmatprep.subr.bf16.mxu0 0
    %501 = vmatpush1.bf16.xpose.msra.mxu0 0
    %502 = vmatprep.subr.bf16.mxu0 0
    %503 = vmatpush1.bf16.xpose.msra.mxu0 0
    %504 = vmatprep.subr.bf16.mxu0 0
    %505 = vmatpush1.bf16.xpose.msra.mxu0 0
    %506 = vmatprep.subr.bf16.mxu0 0
    %507 = vmatpush1.bf16.xpose.msra.mxu0 0
    %508 = vmatprep.subr.bf16.mxu0 0
    %509 = vmatpush1.bf16.xpose.msra.mxu0 0
    %510 = vmatprep.subr.bf16.mxu0 0
    %511 = vmatpush1.bf16.xpose.msra.mxu0 0
    %512 = vmatprep.subr.bf16.mxu0 0
    %513 = vmatpush1.bf16.xpose.msra.mxu0 0
    %514 = vmatprep.subr.bf16.mxu0 0
    %515 = vmatpush1.bf16.xpose.msra.mxu0 %v498
    %516 = vmatprep.subr.bf16.mxu0 0
    %517 = vmatpush2.bf16.xpose.msra.mxu0 0
    %518 = vmatprep.subr.bf16.mxu0 0
    %519 = vmatpush2.bf16.xpose.msra.mxu0 0
    %520 = vmatprep.subr.bf16.mxu0 0
    %521 = vmatpush2.bf16.xpose.msra.mxu0 0
    %522 = vmatprep.subr.bf16.mxu0 0
    %523 = vmatpush2.bf16.xpose.msra.mxu0 0
    %524 = vmatprep.subr.bf16.mxu0 0
    %525 = vmatpush2.bf16.xpose.msra.mxu0 0
    %526 = vmatprep.subr.bf16.mxu0 0
    %527 = vmatpush2.bf16.xpose.msra.mxu0 0
    %528 = vmatprep.subr.bf16.mxu0 0
    %529 = vmatpush2.bf16.xpose.msra.mxu0 0
    %530 = vmatprep.subr.bf16.mxu0 0
    %531 = vmatpush2.bf16.xpose.msra.mxu0 0
    %532 = vmatprep.mubr.bf16.mxu0 0
    %533 = vmatmul.mubr.bf16.gmra.mxu0 %v495
    %v534 = vpop.f32.mrf.mxu0
    %v535 = vadd.f32 %v158, %v534
    %v536 = vpop.f32.mrf.mxu0
    %v537 = vpop.f32.mrf.mxu0
    %v538 = vpop.f32.mrf.mxu0
    %539 = vdwg.mxu0
    %540 = vrot.lane.b32.xlu0 %v271, 120
    %v541 = vpop.permute.xlu0 %540
    %542 = vrot.lane.b32.xlu0 %v271, 88
    %v543 = vpop.permute.xlu0 %542
    %v545 = vsel %vm274, %v541, 0
    %v548 = vsel %vm274, %v543, 0
    %550 = vmatprep.subr.bf16.mxu0 0
    %551 = vmatpush1.bf16.xpose.msra.mxu0 0
    %552 = vmatprep.subr.bf16.mxu0 0
    %553 = vmatpush1.bf16.xpose.msra.mxu0 0
    %554 = vmatprep.subr.bf16.mxu0 0
    %555 = vmatpush1.bf16.xpose.msra.mxu0 0
    %556 = vmatprep.subr.bf16.mxu0 0
    %557 = vmatpush1.bf16.xpose.msra.mxu0 0
    %558 = vmatprep.subr.bf16.mxu0 0
    %559 = vmatpush1.bf16.xpose.msra.mxu0 0
    %560 = vmatprep.subr.bf16.mxu0 0
    %561 = vmatpush1.bf16.xpose.msra.mxu0 0
    %562 = vmatprep.subr.bf16.mxu0 0
    %563 = vmatpush1.bf16.xpose.msra.mxu0 0
    %564 = vmatprep.subr.bf16.mxu0 0
    %565 = vmatpush1.bf16.xpose.msra.mxu0 %v548
    %566 = vmatprep.subr.bf16.mxu0 0
    %567 = vmatpush2.bf16.xpose.msra.mxu0 0
    %568 = vmatprep.subr.bf16.mxu0 0
    %569 = vmatpush2.bf16.xpose.msra.mxu0 0
    %570 = vmatprep.subr.bf16.mxu0 0
    %571 = vmatpush2.bf16.xpose.msra.mxu0 0
    %572 = vmatprep.subr.bf16.mxu0 0
    %573 = vmatpush2.bf16.xpose.msra.mxu0 0
    %574 = vmatprep.subr.bf16.mxu0 0
    %575 = vmatpush2.bf16.xpose.msra.mxu0 0
    %576 = vmatprep.subr.bf16.mxu0 0
    %577 = vmatpush2.bf16.xpose.msra.mxu0 0
    %578 = vmatprep.subr.bf16.mxu0 0
    %579 = vmatpush2.bf16.xpose.msra.mxu0 0
    %580 = vmatprep.subr.bf16.mxu0 0
    %581 = vmatpush2.bf16.xpose.msra.mxu0 0
    %582 = vmatprep.mubr.bf16.mxu0 0
    %583 = vmatmul.mubr.bf16.gmra.mxu0 %v545
    %v584 = vpop.f32.mrf.mxu0
    %v585 = vadd.f32 %v158, %v584
    %v586 = vpop.f32.mrf.mxu0
    %v587 = vpop.f32.mrf.mxu0
    %v588 = vpop.f32.mrf.mxu0
    %589 = vdwg.mxu0
    %v590 = vsel %vm274, %v535, -inf
    %591 = vmax.xlane.f32.xlu0 %v590
    %v592 = vpop.xlane.xlu0 %591
    %v593 = vsel %vm274, %v585, -inf
    %594 = vmax.xlane.f32.xlu0 %v593
    %v595 = vpop.xlane.xlu0 %594
    %v596 = vsub.f32 %v535, %v592
    %v597 = vsub.f32 %v585, %v595
    %v598 = vmul.f32 %v596, 1.442695
    %v599 = vpow.pop %v598
    %v600 = vmul.f32 %v597, 1.442695
    %v601 = vpow.pop %v600
    %v602 = vsel %vm274, %v599, 0.0
    %603 = vadd.xlane.f32.xlu0 %v602
    %v604 = vpop.xlane.xlu0 %603
    %v605 = vsel %vm274, %v601, 0.0
    %606 = vadd.xlane.f32.xlu0 %v605
    %v607 = vpop.xlane.xlu0 %606
    %v608 = vrcp.pop %v604
    %v609 = vrcp.pop %v607
    %v610 = vmul.f32 %v599, %v608
    %v611 = vmul.f32 %v601, %v609
    %v612 = vpack.c.bf16 %v610, %v610
    %v613 = vpack.c.bf16 %v611, %v611
    %614 = vrot.lane.b32.xlu0 %v270, 56
    %v615 = vpop.permute.xlu0 %614
    %v617 = vsel %vm274, %v612, 0
    %v620 = vsel %vm398, %v615, 0
    %622 = vmatprep.subr.bf16.mxu0 0
    %623 = vmatpush1.bf16.msra.mxu0 0
    %624 = vmatprep.subr.bf16.mxu0 0
    %625 = vmatpush1.bf16.msra.mxu0 0
    %626 = vmatprep.subr.bf16.mxu0 0
    %627 = vmatpush1.bf16.msra.mxu0 0
    %628 = vmatprep.subr.bf16.mxu0 0
    %629 = vmatpush1.bf16.msra.mxu0 0
    %630 = vmatprep.subr.bf16.mxu0 0
    %631 = vmatpush1.bf16.msra.mxu0 0
    %632 = vmatprep.subr.bf16.mxu0 0
    %633 = vmatpush1.bf16.msra.mxu0 0
    %634 = vmatprep.subr.bf16.mxu0 0
    %635 = vmatpush1.bf16.msra.mxu0 0
    %636 = vmatprep.subr.bf16.mxu0 0
    %637 = vmatpush1.bf16.msra.mxu0 %v620
    %638 = vmatprep.subr.bf16.mxu0 0
    %639 = vmatpush2.bf16.msra.mxu0 0
    %640 = vmatprep.subr.bf16.mxu0 0
    %641 = vmatpush2.bf16.msra.mxu0 0
    %642 = vmatprep.subr.bf16.mxu0 0
    %643 = vmatpush2.bf16.msra.mxu0 0
    %644 = vmatprep.subr.bf16.mxu0 0
    %645 = vmatpush2.bf16.msra.mxu0 0
    %646 = vmatprep.subr.bf16.mxu0 0
    %647 = vmatpush2.bf16.msra.mxu0 0
    %648 = vmatprep.subr.bf16.mxu0 0
    %649 = vmatpush2.bf16.msra.mxu0 0
    %650 = vmatprep.subr.bf16.mxu0 0
    %651 = vmatpush2.bf16.msra.mxu0 0
    %652 = vmatprep.subr.bf16.mxu0 0
    %653 = vmatpush2.bf16.msra.mxu0 0
    %654 = vmatprep.mubr.bf16.mxu0 0
    %655 = vmatmul.mubr.bf16.gmra.mxu0 %v617
    %v656 = vpop.f32.mrf.mxu0
    %v657 = vadd.f32 0.0, %v656
    %v658 = vpop.f32.mrf.mxu0
    %v659 = vpop.f32.mrf.mxu0
    %v660 = vpop.f32.mrf.mxu0
    %661 = vdwg.mxu0
    %662 = vrot.lane.b32.xlu0 %v271, 56
    %v663 = vpop.permute.xlu0 %662
    %v665 = vsel %vm274, %v613, 0
    %v668 = vsel %vm398, %v663, 0
    %670 = vmatprep.subr.bf16.mxu0 0
    %671 = vmatpush1.bf16.msra.mxu0 0
    %672 = vmatprep.subr.bf16.mxu0 0
    %673 = vmatpush1.bf16.msra.mxu0 0
    %674 = vmatprep.subr.bf16.mxu0 0
    %675 = vmatpush1.bf16.msra.mxu0 0
    %676 = vmatprep.subr.bf16.mxu0 0
    %677 = vmatpush1.bf16.msra.mxu0 0
    %678 = vmatprep.subr.bf16.mxu0 0
    %679 = vmatpush1.bf16.msra.mxu0 0
    %680 = vmatprep.subr.bf16.mxu0 0
    %681 = vmatpush1.bf16.msra.mxu0 0
    %682 = vmatprep.subr.bf16.mxu0 0
    %683 = vmatpush1.bf16.msra.mxu0 0
    %684 = vmatprep.subr.bf16.mxu0 0
    %685 = vmatpush1.bf16.msra.mxu0 %v668
    %686 = vmatprep.subr.bf16.mxu0 0
    %687 = vmatpush2.bf16.msra.mxu0 0
    %688 = vmatprep.subr.bf16.mxu0 0
    %689 = vmatpush2.bf16.msra.mxu0 0
    %690 = vmatprep.subr.bf16.mxu0 0
    %691 = vmatpush2.bf16.msra.mxu0 0
    %692 = vmatprep.subr.bf16.mxu0 0
    %693 = vmatpush2.bf16.msra.mxu0 0
    %694 = vmatprep.subr.bf16.mxu0 0
    %695 = vmatpush2.bf16.msra.mxu0 0
    %696 = vmatprep.subr.bf16.mxu0 0
    %697 = vmatpush2.bf16.msra.mxu0 0
    %698 = vmatprep.subr.bf16.mxu0 0
    %699 = vmatpush2.bf16.msra.mxu0 0
    %700 = vmatprep.subr.bf16.mxu0 0
    %701 = vmatpush2.bf16.msra.mxu0 0
    %702 = vmatprep.mubr.bf16.mxu0 0
    %703 = vmatmul.mubr.bf16.gmra.mxu0 %v665
    %v704 = vpop.f32.mrf.mxu0
    %v705 = vadd.f32 0.0, %v704
    %v706 = vpop.f32.mrf.mxu0
    %v707 = vpop.f32.mrf.mxu0
    %v708 = vpop.f32.mrf.mxu0
    %709 = vdwg.mxu0
    %710 = vrot.lane.b32.xlu0 %v270, 112
    %v711 = vpop.permute.xlu0 %710
    %712 = vrot.lane.b32.xlu0 %v270, 80
    %v713 = vpop.permute.xlu0 %712
    %v715 = vsel %vm274, %v711, 0
    %v718 = vsel %vm274, %v713, 0
    %720 = vmatprep.subr.bf16.mxu0 0
    %721 = vmatpush1.bf16.xpose.msra.mxu0 0
    %722 = vmatprep.subr.bf16.mxu0 0
    %723 = vmatpush1.bf16.xpose.msra.mxu0 0
    %724 = vmatprep.subr.bf16.mxu0 0
    %725 = vmatpush1.bf16.xpose.msra.mxu0 0
    %726 = vmatprep.subr.bf16.mxu0 0
    %727 = vmatpush1.bf16.xpose.msra.mxu0 0
    %728 = vmatprep.subr.bf16.mxu0 0
    %729 = vmatpush1.bf16.xpose.msra.mxu0 0
    %730 = vmatprep.subr.bf16.mxu0 0
    %731 = vmatpush1.bf16.xpose.msra.mxu0 0
    %732 = vmatprep.subr.bf16.mxu0 0
    %733 = vmatpush1.bf16.xpose.msra.mxu0 0
    %734 = vmatprep.subr.bf16.mxu0 0
    %735 = vmatpush1.bf16.xpose.msra.mxu0 %v718
    %736 = vmatprep.subr.bf16.mxu0 0
    %737 = vmatpush2.bf16.xpose.msra.mxu0 0
    %738 = vmatprep.subr.bf16.mxu0 0
    %739 = vmatpush2.bf16.xpose.msra.mxu0 0
    %740 = vmatprep.subr.bf16.mxu0 0
    %741 = vmatpush2.bf16.xpose.msra.mxu0 0
    %742 = vmatprep.subr.bf16.mxu0 0
    %743 = vmatpush2.bf16.xpose.msra.mxu0 0
    %744 = vmatprep.subr.bf16.mxu0 0
    %745 = vmatpush2.bf16.xpose.msra.mxu0 0
    %746 = vmatprep.subr.bf16.mxu0 0
    %747 = vmatpush2.bf16.xpose.msra.mxu0 0
    %748 = vmatprep.subr.bf16.mxu0 0
    %749 = vmatpush2.bf16.xpose.msra.mxu0 0
    %750 = vmatprep.subr.bf16.mxu0 0
    %751 = vmatpush2.bf16.xpose.msra.mxu0 0
    %752 = vmatprep.mubr.bf16.mxu0 0
    %753 = vmatmul.mubr.bf16.gmra.mxu0 %v715
    %v754 = vpop.f32.mrf.mxu0
    %v755 = vadd.f32 %v158, %v754
    %v756 = vpop.f32.mrf.mxu0
    %v757 = vpop.f32.mrf.mxu0
    %v758 = vpop.f32.mrf.mxu0
    %759 = vdwg.mxu0
    %760 = vrot.lane.b32.xlu0 %v271, 112
    %v761 = vpop.permute.xlu0 %760
    %762 = vrot.lane.b32.xlu0 %v271, 80
    %v763 = vpop.permute.xlu0 %762
    %v765 = vsel %vm274, %v761, 0
    %v768 = vsel %vm274, %v763, 0
    %770 = vmatprep.subr.bf16.mxu0 0
    %771 = vmatpush1.bf16.xpose.msra.mxu0 0
    %772 = vmatprep.subr.bf16.mxu0 0
    %773 = vmatpush1.bf16.xpose.msra.mxu0 0
    %774 = vmatprep.subr.bf16.mxu0 0
    %775 = vmatpush1.bf16.xpose.msra.mxu0 0
    %776 = vmatprep.subr.bf16.mxu0 0
    %777 = vmatpush1.bf16.xpose.msra.mxu0 0
    %778 = vmatprep.subr.bf16.mxu0 0
    %779 = vmatpush1.bf16.xpose.msra.mxu0 0
    %780 = vmatprep.subr.bf16.mxu0 0
    %781 = vmatpush1.bf16.xpose.msra.mxu0 0
    %782 = vmatprep.subr.bf16.mxu0 0
    %783 = vmatpush1.bf16.xpose.msra.mxu0 0
    %784 = vmatprep.subr.bf16.mxu0 0
    %785 = vmatpush1.bf16.xpose.msra.mxu0 %v768
    %786 = vmatprep.subr.bf16.mxu0 0
    %787 = vmatpush2.bf16.xpose.msra.mxu0 0
    %788 = vmatprep.subr.bf16.mxu0 0
    %789 = vmatpush2.bf16.xpose.msra.mxu0 0
    %790 = vmatprep.subr.bf16.mxu0 0
    %791 = vmatpush2.bf16.xpose.msra.mxu0 0
    %792 = vmatprep.subr.bf16.mxu0 0
    %793 = vmatpush2.bf16.xpose.msra.mxu0 0
    %794 = vmatprep.subr.bf16.mxu0 0
    %795 = vmatpush2.bf16.xpose.msra.mxu0 0
    %796 = vmatprep.subr.bf16.mxu0 0
    %797 = vmatpush2.bf16.xpose.msra.mxu0 0
    %798 = vmatprep.subr.bf16.mxu0 0
    %799 = vmatpush2.bf16.xpose.msra.mxu0 0
    %800 = vmatprep.subr.bf16.mxu0 0
    %801 = vmatpush2.bf16.xpose.msra.mxu0 0
    %802 = vmatprep.mubr.bf16.mxu0 0
    %803 = vmatmul.mubr.bf16.gmra.mxu0 %v765
    %v804 = vpop.f32.mrf.mxu0
    %v805 = vadd.f32 %v158, %v804
    %v806 = vpop.f32.mrf.mxu0
    %v807 = vpop.f32.mrf.mxu0
    %v808 = vpop.f32.mrf.mxu0
    %809 = vdwg.mxu0
    %v810 = vsel %vm274, %v755, -inf
    %811 = vmax.xlane.f32.xlu0 %v810
    %v812 = vpop.xlane.xlu0 %811
    %v813 = vsel %vm274, %v805, -inf
    %814 = vmax.xlane.f32.xlu0 %v813
    %v815 = vpop.xlane.xlu0 %814
    %v816 = vsub.f32 %v755, %v812
    %v817 = vsub.f32 %v805, %v815
    %v818 = vmul.f32 %v816, 1.442695
    %v819 = vpow.pop %v818
    %v820 = vmul.f32 %v817, 1.442695
    %v821 = vpow.pop %v820
    %v822 = vsel %vm274, %v819, 0.0
    %823 = vadd.xlane.f32.xlu0 %v822
    %v824 = vpop.xlane.xlu0 %823
    %v825 = vsel %vm274, %v821, 0.0
    %826 = vadd.xlane.f32.xlu0 %v825
    %v827 = vpop.xlane.xlu0 %826
    %v828 = vrcp.pop %v824
    %v829 = vrcp.pop %v827
    %v830 = vmul.f32 %v819, %v828
    %v831 = vmul.f32 %v821, %v829
    %v832 = vpack.c.bf16 %v830, %v830
    %v833 = vpack.c.bf16 %v831, %v831
    %834 = vrot.lane.b32.xlu0 %v270, 48
    %v835 = vpop.permute.xlu0 %834
    %v837 = vsel %vm274, %v832, 0
    %v840 = vsel %vm398, %v835, 0
    %842 = vmatprep.subr.bf16.mxu0 0
    %843 = vmatpush1.bf16.msra.mxu0 0
    %844 = vmatprep.subr.bf16.mxu0 0
    %845 = vmatpush1.bf16.msra.mxu0 0
    %846 = vmatprep.subr.bf16.mxu0 0
    %847 = vmatpush1.bf16.msra.mxu0 0
    %848 = vmatprep.subr.bf16.mxu0 0
    %849 = vmatpush1.bf16.msra.mxu0 0
    %850 = vmatprep.subr.bf16.mxu0 0
    %851 = vmatpush1.bf16.msra.mxu0 0
    %852 = vmatprep.subr.bf16.mxu0 0
    %853 = vmatpush1.bf16.msra.mxu0 0
    %854 = vmatprep.subr.bf16.mxu0 0
    %855 = vmatpush1.bf16.msra.mxu0 0
    %856 = vmatprep.subr.bf16.mxu0 0
    %857 = vmatpush1.bf16.msra.mxu0 %v840
    %858 = vmatprep.subr.bf16.mxu0 0
    %859 = vmatpush2.bf16.msra.mxu0 0
    %860 = vmatprep.subr.bf16.mxu0 0
    %861 = vmatpush2.bf16.msra.mxu0 0
    %862 = vmatprep.subr.bf16.mxu0 0
    %863 = vmatpush2.bf16.msra.mxu0 0
    %864 = vmatprep.subr.bf16.mxu0 0
    %865 = vmatpush2.bf16.msra.mxu0 0
    %866 = vmatprep.subr.bf16.mxu0 0
    %867 = vmatpush2.bf16.msra.mxu0 0
    %868 = vmatprep.subr.bf16.mxu0 0
    %869 = vmatpush2.bf16.msra.mxu0 0
    %870 = vmatprep.subr.bf16.mxu0 0
    %871 = vmatpush2.bf16.msra.mxu0 0
    %872 = vmatprep.subr.bf16.mxu0 0
    %873 = vmatpush2.bf16.msra.mxu0 0
    %874 = vmatprep.mubr.bf16.mxu0 0
    %875 = vmatmul.mubr.bf16.gmra.mxu0 %v837
    %v876 = vpop.f32.mrf.mxu0
    %v877 = vadd.f32 0.0, %v876
    %v878 = vpop.f32.mrf.mxu0
    %v879 = vpop.f32.mrf.mxu0
    %v880 = vpop.f32.mrf.mxu0
    %881 = vdwg.mxu0
    %882 = vrot.lane.b32.xlu0 %v271, 48
    %v883 = vpop.permute.xlu0 %882
    %v885 = vsel %vm274, %v833, 0
    %v888 = vsel %vm398, %v883, 0
    %890 = vmatprep.subr.bf16.mxu0 0
    %891 = vmatpush1.bf16.msra.mxu0 0
    %892 = vmatprep.subr.bf16.mxu0 0
    %893 = vmatpush1.bf16.msra.mxu0 0
    %894 = vmatprep.subr.bf16.mxu0 0
    %895 = vmatpush1.bf16.msra.mxu0 0
    %896 = vmatprep.subr.bf16.mxu0 0
    %897 = vmatpush1.bf16.msra.mxu0 0
    %898 = vmatprep.subr.bf16.mxu0 0
    %899 = vmatpush1.bf16.msra.mxu0 0
    %900 = vmatprep.subr.bf16.mxu0 0
    %901 = vmatpush1.bf16.msra.mxu0 0
    %902 = vmatprep.subr.bf16.mxu0 0
    %903 = vmatpush1.bf16.msra.mxu0 0
    %904 = vmatprep.subr.bf16.mxu0 0
    %905 = vmatpush1.bf16.msra.mxu0 %v888
    %906 = vmatprep.subr.bf16.mxu0 0
    %907 = vmatpush2.bf16.msra.mxu0 0
    %908 = vmatprep.subr.bf16.mxu0 0
    %909 = vmatpush2.bf16.msra.mxu0 0
    %910 = vmatprep.subr.bf16.mxu0 0
    %911 = vmatpush2.bf16.msra.mxu0 0
    %912 = vmatprep.subr.bf16.mxu0 0
    %913 = vmatpush2.bf16.msra.mxu0 0
    %914 = vmatprep.subr.bf16.mxu0 0
    %915 = vmatpush2.bf16.msra.mxu0 0
    %916 = vmatprep.subr.bf16.mxu0 0
    %917 = vmatpush2.bf16.msra.mxu0 0
    %918 = vmatprep.subr.bf16.mxu0 0
    %919 = vmatpush2.bf16.msra.mxu0 0
    %920 = vmatprep.subr.bf16.mxu0 0
    %921 = vmatpush2.bf16.msra.mxu0 0
    %922 = vmatprep.mubr.bf16.mxu0 0
    %923 = vmatmul.mubr.bf16.gmra.mxu0 %v885
    %v924 = vpop.f32.mrf.mxu0
    %v925 = vadd.f32 0.0, %v924
    %v926 = vpop.f32.mrf.mxu0
    %v927 = vpop.f32.mrf.mxu0
    %v928 = vpop.f32.mrf.mxu0
    %929 = vdwg.mxu0
    %930 = vrot.lane.b32.xlu0 %v270, 104
    %v931 = vpop.permute.xlu0 %930
    %932 = vrot.lane.b32.xlu0 %v270, 72
    %v933 = vpop.permute.xlu0 %932
    %v935 = vsel %vm274, %v931, 0
    %v938 = vsel %vm274, %v933, 0
    %940 = vmatprep.subr.bf16.mxu0 0
    %941 = vmatpush1.bf16.xpose.msra.mxu0 0
    %942 = vmatprep.subr.bf16.mxu0 0
    %943 = vmatpush1.bf16.xpose.msra.mxu0 0
    %944 = vmatprep.subr.bf16.mxu0 0
    %945 = vmatpush1.bf16.xpose.msra.mxu0 0
    %946 = vmatprep.subr.bf16.mxu0 0
    %947 = vmatpush1.bf16.xpose.msra.mxu0 0
    %948 = vmatprep.subr.bf16.mxu0 0
    %949 = vmatpush1.bf16.xpose.msra.mxu0 0
    %950 = vmatprep.subr.bf16.mxu0 0
    %951 = vmatpush1.bf16.xpose.msra.mxu0 0
    %952 = vmatprep.subr.bf16.mxu0 0
    %953 = vmatpush1.bf16.xpose.msra.mxu0 0
    %954 = vmatprep.subr.bf16.mxu0 0
    %955 = vmatpush1.bf16.xpose.msra.mxu0 %v938
    %956 = vmatprep.subr.bf16.mxu0 0
    %957 = vmatpush2.bf16.xpose.msra.mxu0 0
    %958 = vmatprep.subr.bf16.mxu0 0
    %959 = vmatpush2.bf16.xpose.msra.mxu0 0
    %960 = vmatprep.subr.bf16.mxu0 0
    %961 = vmatpush2.bf16.xpose.msra.mxu0 0
    %962 = vmatprep.subr.bf16.mxu0 0
    %963 = vmatpush2.bf16.xpose.msra.mxu0 0
    %964 = vmatprep.subr.bf16.mxu0 0
    %965 = vmatpush2.bf16.xpose.msra.mxu0 0
    %966 = vmatprep.subr.bf16.mxu0 0
    %967 = vmatpush2.bf16.xpose.msra.mxu0 0
    %968 = vmatprep.subr.bf16.mxu0 0
    %969 = vmatpush2.bf16.xpose.msra.mxu0 0
    %970 = vmatprep.subr.bf16.mxu0 0
    %971 = vmatpush2.bf16.xpose.msra.mxu0 0
    %972 = vmatprep.mubr.bf16.mxu0 0
    %973 = vmatmul.mubr.bf16.gmra.mxu0 %v935
    %v974 = vpop.f32.mrf.mxu0
    %v975 = vadd.f32 %v158, %v974
    %v976 = vpop.f32.mrf.mxu0
    %v977 = vpop.f32.mrf.mxu0
    %v978 = vpop.f32.mrf.mxu0
    %979 = vdwg.mxu0
    %980 = vrot.lane.b32.xlu0 %v271, 104
    %v981 = vpop.permute.xlu0 %980
    %982 = vrot.lane.b32.xlu0 %v271, 72
    %v983 = vpop.permute.xlu0 %982
    %v985 = vsel %vm274, %v981, 0
    %v988 = vsel %vm274, %v983, 0
    %990 = vmatprep.subr.bf16.mxu0 0
    %991 = vmatpush1.bf16.xpose.msra.mxu0 0
    %992 = vmatprep.subr.bf16.mxu0 0
    %993 = vmatpush1.bf16.xpose.msra.mxu0 0
    %994 = vmatprep.subr.bf16.mxu0 0
    %995 = vmatpush1.bf16.xpose.msra.mxu0 0
    %996 = vmatprep.subr.bf16.mxu0 0
    %997 = vmatpush1.bf16.xpose.msra.mxu0 0
    %998 = vmatprep.subr.bf16.mxu0 0
    %999 = vmatpush1.bf16.xpose.msra.mxu0 0
    %1000 = vmatprep.subr.bf16.mxu0 0
    %1001 = vmatpush1.bf16.xpose.msra.mxu0 0
    %1002 = vmatprep.subr.bf16.mxu0 0
    %1003 = vmatpush1.bf16.xpose.msra.mxu0 0
    %1004 = vmatprep.subr.bf16.mxu0 0
    %1005 = vmatpush1.bf16.xpose.msra.mxu0 %v988
    %1006 = vmatprep.subr.bf16.mxu0 0
    %1007 = vmatpush2.bf16.xpose.msra.mxu0 0
    %1008 = vmatprep.subr.bf16.mxu0 0
    %1009 = vmatpush2.bf16.xpose.msra.mxu0 0
    %1010 = vmatprep.subr.bf16.mxu0 0
    %1011 = vmatpush2.bf16.xpose.msra.mxu0 0
    %1012 = vmatprep.subr.bf16.mxu0 0
    %1013 = vmatpush2.bf16.xpose.msra.mxu0 0
    %1014 = vmatprep.subr.bf16.mxu0 0
    %1015 = vmatpush2.bf16.xpose.msra.mxu0 0
    %1016 = vmatprep.subr.bf16.mxu0 0
    %1017 = vmatpush2.bf16.xpose.msra.mxu0 0
    %1018 = vmatprep.subr.bf16.mxu0 0
    %1019 = vmatpush2.bf16.xpose.msra.mxu0 0
    %1020 = vmatprep.subr.bf16.mxu0 0
    %1021 = vmatpush2.bf16.xpose.msra.mxu0 0
    %1022 = vmatprep.mubr.bf16.mxu0 0
    %1023 = vmatmul.mubr.bf16.gmra.mxu0 %v985
    %v1024 = vpop.f32.mrf.mxu0
    %v1025 = vadd.f32 %v158, %v1024
    %v1026 = vpop.f32.mrf.mxu0
    %v1027 = vpop.f32.mrf.mxu0
    %v1028 = vpop.f32.mrf.mxu0
    %1029 = vdwg.mxu0
    %v1030 = vsel %vm274, %v975, -inf
    %1031 = vmax.xlane.f32.xlu0 %v1030
    %v1032 = vpop.xlane.xlu0 %1031
    %v1033 = vsel %vm274, %v1025, -inf
    %1034 = vmax.xlane.f32.xlu0 %v1033
    %v1035 = vpop.xlane.xlu0 %1034
    %v1036 = vsub.f32 %v975, %v1032
    %v1037 = vsub.f32 %v1025, %v1035
    %v1038 = vmul.f32 %v1036, 1.442695
    %v1039 = vpow.pop %v1038
    %v1040 = vmul.f32 %v1037, 1.442695
    %v1041 = vpow.pop %v1040
    %v1042 = vsel %vm274, %v1039, 0.0
    %1043 = vadd.xlane.f32.xlu0 %v1042
    %v1044 = vpop.xlane.xlu0 %1043
    %v1045 = vsel %vm274, %v1041, 0.0
    %1046 = vadd.xlane.f32.xlu0 %v1045
    %v1047 = vpop.xlane.xlu0 %1046
    %v1048 = vrcp.pop %v1044
    %v1049 = vrcp.pop %v1047
    %v1050 = vmul.f32 %v1039, %v1048
    %v1051 = vmul.f32 %v1041, %v1049
    %v1052 = vpack.c.bf16 %v1050, %v1050
    %v1053 = vpack.c.bf16 %v1051, %v1051
    %1054 = vrot.lane.b32.xlu0 %v270, 40
    %v1055 = vpop.permute.xlu0 %1054
    %v1057 = vsel %vm274, %v1052, 0
    %v1060 = vsel %vm398, %v1055, 0
    %1062 = vmatprep.subr.bf16.mxu0 0
    %1063 = vmatpush1.bf16.msra.mxu0 0
    %1064 = vmatprep.subr.bf16.mxu0 0
    %1065 = vmatpush1.bf16.msra.mxu0 0
    %1066 = vmatprep.subr.bf16.mxu0 0
    %1067 = vmatpush1.bf16.msra.mxu0 0
    %1068 = vmatprep.subr.bf16.mxu0 0
    %1069 = vmatpush1.bf16.msra.mxu0 0
    %1070 = vmatprep.subr.bf16.mxu0 0
    %1071 = vmatpush1.bf16.msra.mxu0 0
    %1072 = vmatprep.subr.bf16.mxu0 0
    %1073 = vmatpush1.bf16.msra.mxu0 0
    %1074 = vmatprep.subr.bf16.mxu0 0
    %1075 = vmatpush1.bf16.msra.mxu0 0
    %1076 = vmatprep.subr.bf16.mxu0 0
    %1077 = vmatpush1.bf16.msra.mxu0 %v1060
    %1078 = vmatprep.subr.bf16.mxu0 0
    %1079 = vmatpush2.bf16.msra.mxu0 0
    %1080 = vmatprep.subr.bf16.mxu0 0
    %1081 = vmatpush2.bf16.msra.mxu0 0
    %1082 = vmatprep.subr.bf16.mxu0 0
    %1083 = vmatpush2.bf16.msra.mxu0 0
    %1084 = vmatprep.subr.bf16.mxu0 0
    %1085 = vmatpush2.bf16.msra.mxu0 0
    %1086 = vmatprep.subr.bf16.mxu0 0
    %1087 = vmatpush2.bf16.msra.mxu0 0
    %1088 = vmatprep.subr.bf16.mxu0 0
    %1089 = vmatpush2.bf16.msra.mxu0 0
    %1090 = vmatprep.subr.bf16.mxu0 0
    %1091 = vmatpush2.bf16.msra.mxu0 0
    %1092 = vmatprep.subr.bf16.mxu0 0
    %1093 = vmatpush2.bf16.msra.mxu0 0
    %1094 = vmatprep.mubr.bf16.mxu0 0
    %1095 = vmatmul.mubr.bf16.gmra.mxu0 %v1057
    %v1096 = vpop.f32.mrf.mxu0
    %v1097 = vadd.f32 0.0, %v1096
    %v1098 = vpop.f32.mrf.mxu0
    %v1099 = vpop.f32.mrf.mxu0
    %v1100 = vpop.f32.mrf.mxu0
    %1101 = vdwg.mxu0
    %1102 = vrot.lane.b32.xlu0 %v271, 40
    %v1103 = vpop.permute.xlu0 %1102
    %v1105 = vsel %vm274, %v1053, 0
    %v1108 = vsel %vm398, %v1103, 0
    %1110 = vmatprep.subr.bf16.mxu0 0
    %1111 = vmatpush1.bf16.msra.mxu0 0
    %1112 = vmatprep.subr.bf16.mxu0 0
    %1113 = vmatpush1.bf16.msra.mxu0 0
    %1114 = vmatprep.subr.bf16.mxu0 0
    %1115 = vmatpush1.bf16.msra.mxu0 0
    %1116 = vmatprep.subr.bf16.mxu0 0
    %1117 = vmatpush1.bf16.msra.mxu0 0
    %1118 = vmatprep.subr.bf16.mxu0 0
    %1119 = vmatpush1.bf16.msra.mxu0 0
    %1120 = vmatprep.subr.bf16.mxu0 0
    %1121 = vmatpush1.bf16.msra.mxu0 0
    %1122 = vmatprep.subr.bf16.mxu0 0
    %1123 = vmatpush1.bf16.msra.mxu0 0
    %1124 = vmatprep.subr.bf16.mxu0 0
    %1125 = vmatpush1.bf16.msra.mxu0 %v1108
    %1126 = vmatprep.subr.bf16.mxu0 0
    %1127 = vmatpush2.bf16.msra.mxu0 0
    %1128 = vmatprep.subr.bf16.mxu0 0
    %1129 = vmatpush2.bf16.msra.mxu0 0
    %1130 = vmatprep.subr.bf16.mxu0 0
    %1131 = vmatpush2.bf16.msra.mxu0 0
    %1132 = vmatprep.subr.bf16.mxu0 0
    %1133 = vmatpush2.bf16.msra.mxu0 0
    %1134 = vmatprep.subr.bf16.mxu0 0
    %1135 = vmatpush2.bf16.msra.mxu0 0
    %1136 = vmatprep.subr.bf16.mxu0 0
    %1137 = vmatpush2.bf16.msra.mxu0 0
    %1138 = vmatprep.subr.bf16.mxu0 0
    %1139 = vmatpush2.bf16.msra.mxu0 0
    %1140 = vmatprep.subr.bf16.mxu0 0
    %1141 = vmatpush2.bf16.msra.mxu0 0
    %1142 = vmatprep.mubr.bf16.mxu0 0
    %1143 = vmatmul.mubr.bf16.gmra.mxu0 %v1105
    %v1144 = vpop.f32.mrf.mxu0
    %v1145 = vadd.f32 0.0, %v1144
    %v1146 = vpop.f32.mrf.mxu0
    %v1147 = vpop.f32.mrf.mxu0
    %v1148 = vpop.f32.mrf.mxu0
    %1149 = vdwg.mxu0
    %1152 = vrot.lane.b32.xlu0 %v657, 8
    %v1153 = vpop.permute.xlu0 %1152
    %1154 = vrot.lane.b32.xlu0 %v705, 8
    %v1155 = vpop.permute.xlu0 %1154
    %1160 = vrot.lane.b32.xlu0 %v877, 16
    %v1161 = vpop.permute.xlu0 %1160
    %1162 = vrot.lane.b32.xlu0 %v925, 16
    %v1163 = vpop.permute.xlu0 %1162
    %1168 = vrot.lane.b32.xlu0 %v1097, 24
    %v1169 = vpop.permute.xlu0 %1168
    %1170 = vrot.lane.b32.xlu0 %v1145, 24
    %v1171 = vpop.permute.xlu0 %1170
    %v1174 = vsel %vm274, %v437, %v1153
    %v1175 = vsel %vm274, %v485, %v1155
    %vm1176 = vcmask 130048
    %v1177 = vsel %vm1176, %v1174, %v1161
    %v1178 = vsel %vm1176, %v1175, %v1163
    %vm1179 = vcmask 195584
    %v1180 = vsel %vm1179, %v1177, %v1169
    %v1181 = vsel %vm1179, %v1178, %v1171
    %v1182 = vpack.c.bf16 %v1181, %v1180
    %v1183 = vld [vmem:[%s4] sm:$0xf]
    %v1184 = vld [vmem:[%s4 + $0x4] sm:$0xf]
    %v1185 = vld [vmem:[%s4 + $0x8] sm:$0xf]
    %v1186 = vld [vmem:[%s4 + $0xc] sm:$0xf]
    %v1191 = vunpack.c.l.b16 %v1183
    %v1192 = vunpack.c.l.b16 %v1184
    %v1193 = vunpack.c.l.b16 %v1185
    %v1194 = vunpack.c.l.b16 %v1186
    %v1195 = vpack.c.b16 %v1192, %v1191
    %v1196 = vpack.c.b16 %v1194, %v1193
    %v1200 = vsel %vm161, %v1182, 0
    %1202 = vmatprep.subr.bf16.mxu0 0
    %1203 = vmatpush1.bf16.msra.mxu0 0
    %1204 = vmatprep.subr.bf16.mxu0 0
    %1205 = vmatpush1.bf16.msra.mxu0 0
    %1206 = vmatprep.subr.bf16.mxu0 0
    %1207 = vmatpush1.bf16.msra.mxu0 0
    %1208 = vmatprep.subr.bf16.mxu0 0
    %1209 = vmatpush1.bf16.msra.mxu0 0
    %1210 = vmatprep.subr.bf16.mxu0 0
    %1211 = vmatpush1.bf16.msra.mxu0 0
    %1212 = vmatprep.subr.bf16.mxu0 0
    %1213 = vmatpush1.bf16.msra.mxu0 0
    %1214 = vmatprep.subr.bf16.mxu0 0
    %1215 = vmatpush1.bf16.msra.mxu0 %v1196
    %1216 = vmatprep.subr.bf16.mxu0 0
    %1217 = vmatpush1.bf16.msra.mxu0 %v1195
    %1218 = vmatprep.subr.bf16.mxu0 0
    %1219 = vmatpush2.bf16.msra.mxu0 0
    %1220 = vmatprep.subr.bf16.mxu0 0
    %1221 = vmatpush2.bf16.msra.mxu0 0
    %1222 = vmatprep.subr.bf16.mxu0 0
    %1223 = vmatpush2.bf16.msra.mxu0 0
    %1224 = vmatprep.subr.bf16.mxu0 0
    %1225 = vmatpush2.bf16.msra.mxu0 0
    %1226 = vmatprep.subr.bf16.mxu0 0
    %1227 = vmatpush2.bf16.msra.mxu0 0
    %1228 = vmatprep.subr.bf16.mxu0 0
    %1229 = vmatpush2.bf16.msra.mxu0 0
    %1230 = vmatprep.subr.bf16.mxu0 0
    %1231 = vmatpush2.bf16.msra.mxu0 0
    %1232 = vmatprep.subr.bf16.mxu0 0
    %1233 = vmatpush2.bf16.msra.mxu0 0
    %1234 = vmatprep.mubr.bf16.mxu0 0
    %1235 = vmatmul.mubr.bf16.gmra.mxu0 %v1200
    %v1236 = vpop.f32.mrf.mxu0
    %v1237 = vadd.f32 0.0, %v1236
    %v1238 = vpop.f32.mrf.mxu0
    %v1239 = vpop.f32.mrf.mxu0
    %v1240 = vadd.f32 0.0, %v1239
    %v1241 = vpop.f32.mrf.mxu0
    %1242 = vdwg.mxu0
    %v1243 = vadd.f32 %v153, %v1237
    %v1244 = vadd.f32 %v154, %v1240
    %v1245 = vld [vmem:[%s5] sm:$0x1]
    %v1247 = vlaneseq
    %v1248 = vshrl.u32 %v1247, 7
    %v1249 = vsub.s32 0, %v1248
    %v1250 = vrot.slane %v1245, %v1249
    %v1252 = vadd.f32 %v1243, %v1250
    %v1253 = vadd.f32 %v1244, %v1250
    %v1254 = vld [vmem:[%s12] sm:$0x1]
    %v1255 = vld [vmem:[%s13] sm:$0x1]
    %v1256 = vsel %vm161, %v1252, 0.0
    %1257 = vadd.xlane.f32.xlu0 %v1256
    %v1258 = vpop.xlane.xlu0 %1257
    %v1259 = vsel %vm161, %v1253, 0.0
    %1260 = vadd.xlane.f32.xlu0 %v1259
    %v1261 = vpop.xlane.xlu0 %1260
    %v1262 = vmul.f32 %v1258, %v168
    %v1263 = vmul.f32 %v1261, %v168
    %v1264 = vsub.f32 %v1252, %v1262
    %v1265 = vsub.f32 %v1253, %v1263
    %v1266 = vmul.f32 %v1264, %v1264
    %v1267 = vmul.f32 %v1265, %v1265
    %v1268 = vsel %vm161, %v1266, 0.0
    %1269 = vadd.xlane.f32.xlu0 %v1268
    %v1270 = vpop.xlane.xlu0 %1269
    %v1271 = vsel %vm161, %v1267, 0.0
    %1272 = vadd.xlane.f32.xlu0 %v1271
    %v1273 = vpop.xlane.xlu0 %1272
    %v1274 = vmul.f32 %v1270, %v168
    %v1275 = vmul.f32 %v1273, %v168
    %v1276 = vadd.f32 %v1274, 1e-05
    %v1277 = vadd.f32 %v1275, 1e-05
    %v1278 = vrsqrt.pop %v1276
    %v1279 = vrsqrt.pop %v1277
    %v1280 = vmul.f32 %v1264, %v1278
    %v1281 = vmul.f32 %v1265, %v1279
    %v1283 = vlaneseq
    %v1284 = vshrl.u32 %v1283, 7
    %v1285 = vsub.s32 0, %v1284
    %v1286 = vrot.slane %v1254, %v1285
    %v1288 = vmul.f32 %v1280, %v1286
    %v1289 = vmul.f32 %v1281, %v1286
    %v1291 = vlaneseq
    %v1292 = vshrl.u32 %v1291, 7
    %v1293 = vsub.s32 0, %v1292
    %v1294 = vrot.slane %v1255, %v1293
    %v1296 = vadd.f32 %v1288, %v1294
    %v1297 = vadd.f32 %v1289, %v1294
    %v1298 = vpack.c.bf16 %v1297, %v1296
    %v1299 = vld [vmem:[%s6] sm:$0xf]
    %v1300 = vld [vmem:[%s6 + $0x4] sm:$0xf]
    %v1301 = vld [vmem:[%s6 + $0x8] sm:$0xf]
    %v1302 = vld [vmem:[%s6 + $0xc] sm:$0xf]
    %v1303 = vld [vmem:[%s7] sm:$0x1]
    %v1305 = vlaneseq
    %v1306 = vshrl.u32 %v1305, 7
    %v1307 = vsub.s32 0, %v1306
    %v1308 = vrot.slane %v1303, %v1307
    %v1314 = vunpack.c.l.b16 %v1299
    %v1315 = vunpack.c.l.b16 %v1300
    %v1316 = vunpack.c.l.b16 %v1301
    %v1317 = vunpack.c.l.b16 %v1302
    %v1318 = vpack.c.b16 %v1315, %v1314
    %v1319 = vpack.c.b16 %v1317, %v1316
    %v1323 = vsel %vm161, %v1298, 0
    %1325 = vmatprep.subr.bf16.mxu0 0
    %1326 = vmatpush1.bf16.msra.mxu0 0
    %1327 = vmatprep.subr.bf16.mxu0 0
    %1328 = vmatpush1.bf16.msra.mxu0 0
    %1329 = vmatprep.subr.bf16.mxu0 0
    %1330 = vmatpush1.bf16.msra.mxu0 0
    %1331 = vmatprep.subr.bf16.mxu0 0
    %1332 = vmatpush1.bf16.msra.mxu0 0
    %1333 = vmatprep.subr.bf16.mxu0 0
    %1334 = vmatpush1.bf16.msra.mxu0 0
    %1335 = vmatprep.subr.bf16.mxu0 0
    %1336 = vmatpush1.bf16.msra.mxu0 0
    %1337 = vmatprep.subr.bf16.mxu0 0
    %1338 = vmatpush1.bf16.msra.mxu0 %v1319
    %1339 = vmatprep.subr.bf16.mxu0 0
    %1340 = vmatpush1.bf16.msra.mxu0 %v1318
    %1341 = vmatprep.subr.bf16.mxu0 0
    %1342 = vmatpush2.bf16.msra.mxu0 0
    %1343 = vmatprep.subr.bf16.mxu0 0
    %1344 = vmatpush2.bf16.msra.mxu0 0
    %1345 = vmatprep.subr.bf16.mxu0 0
    %1346 = vmatpush2.bf16.msra.mxu0 0
    %1347 = vmatprep.subr.bf16.mxu0 0
    %1348 = vmatpush2.bf16.msra.mxu0 0
    %1349 = vmatprep.subr.bf16.mxu0 0
    %1350 = vmatpush2.bf16.msra.mxu0 0
    %1351 = vmatprep.subr.bf16.mxu0 0
    %1352 = vmatpush2.bf16.msra.mxu0 0
    %1353 = vmatprep.subr.bf16.mxu0 0
    %1354 = vmatpush2.bf16.msra.mxu0 0
    %1355 = vmatprep.subr.bf16.mxu0 0
    %1356 = vmatpush2.bf16.msra.mxu0 0
    %1357 = vmatprep.mubr.bf16.mxu0 0
    %1358 = vmatmul.mubr.bf16.gmra.mxu0 %v1323
    %v1359 = vpop.f32.mrf.mxu0
    %v1360 = vadd.f32 %v1308, %v1359
    %v1361 = vpop.f32.mrf.mxu0
    %v1362 = vpop.f32.mrf.mxu0
    %v1363 = vadd.f32 %v1308, %v1362
    %v1364 = vpop.f32.mrf.mxu0
    %1365 = vdwg.mxu0
    %v1366 = vmul.f32 %v1360, 0.5
    %v1367 = vmul.f32 %v1363, 0.5
    %v1368 = vmul.f32 %v1360, 0.044715
    %v1369 = vmul.f32 %v1363, 0.044715
    %v1370 = vmul.f32 %v1368, %v1360
    %v1371 = vmul.f32 %v1369, %v1363
    %v1372 = vmul.f32 %v1370, %v1360
    %v1373 = vmul.f32 %v1371, %v1363
    %v1374 = vadd.f32 %v1360, %v1372
    %v1375 = vadd.f32 %v1363, %v1373
    %v1376 = vmul.f32 %v1374, 0.7978845
    %v1377 = vmul.f32 %v1375, 0.7978845
    %v1378 = vtanh.pop %v1376
    %v1379 = vtanh.pop %v1377
    %v1380 = vadd.f32 %v1378, 1.0
    %v1381 = vadd.f32 %v1379, 1.0
    %v1382 = vmul.f32 %v1366, %v1380
    %v1383 = vmul.f32 %v1367, %v1381
    %v1384 = vpack.c.bf16 %v1383, %v1382
    %v1385 = vld [vmem:[%s8] sm:$0xf]
    %v1386 = vld [vmem:[%s8 + $0x4] sm:$0xf]
    %v1387 = vld [vmem:[%s8 + $0x8] sm:$0xf]
    %v1388 = vld [vmem:[%s8 + $0xc] sm:$0xf]
    %v1389 = vld [vmem:[%s8 + $0x10] sm:$0xf]
    %v1390 = vld [vmem:[%s8 + $0x14] sm:$0xf]
    %v1391 = vld [vmem:[%s8 + $0x18] sm:$0xf]
    %v1392 = vld [vmem:[%s8 + $0x1c] sm:$0xf]
    %v1393 = vld [vmem:[%s8 + $0x20] sm:$0xf]
    %v1394 = vld [vmem:[%s8 + $0x24] sm:$0xf]
    %v1395 = vld [vmem:[%s8 + $0x28] sm:$0xf]
    %v1396 = vld [vmem:[%s8 + $0x2c] sm:$0xf]
    %v1397 = vld [vmem:[%s8 + $0x30] sm:$0xf]
    %v1398 = vld [vmem:[%s8 + $0x34] sm:$0xf]
    %v1399 = vld [vmem:[%s8 + $0x38] sm:$0xf]
    %v1400 = vld [vmem:[%s8 + $0x3c] sm:$0xf]
    %v1401 = vld [vmem:[%s9] sm:$0x1]
    %v1403 = vlaneseq
    %v1404 = vshrl.u32 %v1403, 7
    %v1405 = vsub.s32 0, %v1404
    %v1406 = vrot.slane %v1401, %v1405
    %v1424 = vunpack.c.l.b16 %v1385
    %v1425 = vunpack.c.l.b16 %v1386
    %v1426 = vunpack.c.l.b16 %v1387
    %v1427 = vunpack.c.l.b16 %v1388
    %v1428 = vunpack.c.l.b16 %v1389
    %v1429 = vunpack.c.l.b16 %v1390
    %v1430 = vunpack.c.l.b16 %v1391
    %v1431 = vunpack.c.l.b16 %v1392
    %v1432 = vunpack.c.l.b16 %v1393
    %v1433 = vunpack.c.l.b16 %v1394
    %v1434 = vunpack.c.l.b16 %v1395
    %v1435 = vunpack.c.l.b16 %v1396
    %v1436 = vunpack.c.l.b16 %v1397
    %v1437 = vunpack.c.l.b16 %v1398
    %v1438 = vunpack.c.l.b16 %v1399
    %v1439 = vunpack.c.l.b16 %v1400
    %v1440 = vpack.c.b16 %v1425, %v1424
    %v1441 = vpack.c.b16 %v1427, %v1426
    %v1442 = vpack.c.b16 %v1429, %v1428
    %v1443 = vpack.c.b16 %v1431, %v1430
    %v1444 = vpack.c.b16 %v1433, %v1432
    %v1445 = vpack.c.b16 %v1435, %v1434
    %v1446 = vpack.c.b16 %v1437, %v1436
    %v1447 = vpack.c.b16 %v1439, %v1438
    %1456 = vmatprep.subr.bf16.mxu0 0
    %1457 = vmatpush1.bf16.msra.mxu0 %v1447
    %1458 = vmatprep.subr.bf16.mxu0 0
    %1459 = vmatpush1.bf16.msra.mxu0 %v1446
    %1460 = vmatprep.subr.bf16.mxu0 0
    %1461 = vmatpush1.bf16.msra.mxu0 %v1445
    %1462 = vmatprep.subr.bf16.mxu0 0
    %1463 = vmatpush1.bf16.msra.mxu0 %v1444
    %1464 = vmatprep.subr.bf16.mxu0 0
    %1465 = vmatpush1.bf16.msra.mxu0 %v1443
    %1466 = vmatprep.subr.bf16.mxu0 0
    %1467 = vmatpush1.bf16.msra.mxu0 %v1442
    %1468 = vmatprep.subr.bf16.mxu0 0
    %1469 = vmatpush1.bf16.msra.mxu0 %v1441
    %1470 = vmatprep.subr.bf16.mxu0 0
    %1471 = vmatpush1.bf16.msra.mxu0 %v1440
    %1472 = vmatprep.subr.bf16.mxu0 0
    %1473 = vmatpush2.bf16.msra.mxu0 0
    %1474 = vmatprep.subr.bf16.mxu0 0
    %1475 = vmatpush2.bf16.msra.mxu0 0
    %1476 = vmatprep.subr.bf16.mxu0 0
    %1477 = vmatpush2.bf16.msra.mxu0 0
    %1478 = vmatprep.subr.bf16.mxu0 0
    %1479 = vmatpush2.bf16.msra.mxu0 0
    %1480 = vmatprep.subr.bf16.mxu0 0
    %1481 = vmatpush2.bf16.msra.mxu0 0
    %1482 = vmatprep.subr.bf16.mxu0 0
    %1483 = vmatpush2.bf16.msra.mxu0 0
    %1484 = vmatprep.subr.bf16.mxu0 0
    %1485 = vmatpush2.bf16.msra.mxu0 0
    %1486 = vmatprep.subr.bf16.mxu0 0
    %1487 = vmatpush2.bf16.msra.mxu0 0
    %1488 = vmatprep.mubr.bf16.mxu0 0
    %1489 = vmatmul.mubr.bf16.gmra.mxu0 %v1384
    %v1490 = vpop.f32.mrf.mxu0
    %v1491 = vadd.f32 %v1406, %v1490
    %v1492 = vpop.f32.mrf.mxu0
    %v1493 = vpop.f32.mrf.mxu0
    %v1494 = vadd.f32 %v1406, %v1493
    %v1495 = vpop.f32.mrf.mxu0
    %1496 = vdwg.mxu0
    %v1497 = vadd.f32 %v1252, %v1491
    %v1498 = vadd.f32 %v1253, %v1494
    %s1499 = scalar_lea.vmem %s10, 1
    %v1500 = vld [vmem:[%s1499] sm:$0x1]
    %s1501 = scalar_lea.vmem %s11, 1
    %v1502 = vld [vmem:[%s1501] sm:$0x1]
    %v1503 = vsel %vm161, %v1497, 0.0
    %1504 = vadd.xlane.f32.xlu0 %v1503
    %v1505 = vpop.xlane.xlu0 %1504
    %v1506 = vsel %vm161, %v1498, 0.0
    %1507 = vadd.xlane.f32.xlu0 %v1506
    %v1508 = vpop.xlane.xlu0 %1507
    %v1509 = vmul.f32 %v1505, %v168
    %v1510 = vmul.f32 %v1508, %v168
    %v1511 = vsub.f32 %v1497, %v1509
    %v1512 = vsub.f32 %v1498, %v1510
    %v1513 = vmul.f32 %v1511, %v1511
    %v1514 = vmul.f32 %v1512, %v1512
    %v1515 = vsel %vm161, %v1513, 0.0
    %1516 = vadd.xlane.f32.xlu0 %v1515
    %v1517 = vpop.xlane.xlu0 %1516
    %v1518 = vsel %vm161, %v1514, 0.0
    %1519 = vadd.xlane.f32.xlu0 %v1518
    %v1520 = vpop.xlane.xlu0 %1519
    %v1521 = vmul.f32 %v1517, %v168
    %v1522 = vmul.f32 %v1520, %v168
    %v1523 = vadd.f32 %v1521, 1e-05
    %v1524 = vadd.f32 %v1522, 1e-05
    %v1525 = vrsqrt.pop %v1523
    %v1526 = vrsqrt.pop %v1524
    %v1527 = vmul.f32 %v1511, %v1525
    %v1528 = vmul.f32 %v1512, %v1526
    %v1530 = vlaneseq
    %v1531 = vshrl.u32 %v1530, 7
    %v1532 = vsub.s32 0, %v1531
    %v1533 = vrot.slane %v1500, %v1532
    %v1535 = vmul.f32 %v1527, %v1533
    %v1536 = vmul.f32 %v1528, %v1533
    %v1538 = vlaneseq
    %v1539 = vshrl.u32 %v1538, 7
    %v1540 = vsub.s32 0, %v1539
    %v1541 = vrot.slane %v1502, %v1540
    %v1543 = vadd.f32 %v1535, %v1541
    %v1544 = vadd.f32 %v1536, %v1541
    %v1545 = vpack.c.bf16 %v1544, %v1543
    %s1546 = scalar_lea.vmem %s3, 16
    %v1547 = vld [vmem:[%s1546] sm:$0xf]
    %v1548 = vld [vmem:[%s1546 + $0x4] sm:$0xf]
    %v1549 = vld [vmem:[%s1546 + $0x8] sm:$0xf]
    %v1550 = vld [vmem:[%s1546 + $0xc] sm:$0xf]
    %v1555 = vunpack.c.l.b16 %v1547
    %v1556 = vunpack.c.l.b16 %v1548
    %v1557 = vunpack.c.l.b16 %v1549
    %v1558 = vunpack.c.l.b16 %v1550
    %v1559 = vpack.c.b16 %v1556, %v1555
    %v1560 = vpack.c.b16 %v1558, %v1557
    %v1564 = vsel %vm161, %v1545, 0
    %1566 = vmatprep.subr.bf16.mxu0 0
    %1567 = vmatpush1.bf16.msra.mxu0 0
    %1568 = vmatprep.subr.bf16.mxu0 0
    %1569 = vmatpush1.bf16.msra.mxu0 0
    %1570 = vmatprep.subr.bf16.mxu0 0
    %1571 = vmatpush1.bf16.msra.mxu0 0
    %1572 = vmatprep.subr.bf16.mxu0 0
    %1573 = vmatpush1.bf16.msra.mxu0 0
    %1574 = vmatprep.subr.bf16.mxu0 0
    %1575 = vmatpush1.bf16.msra.mxu0 0
    %1576 = vmatprep.subr.bf16.mxu0 0
    %1577 = vmatpush1.bf16.msra.mxu0 0
    %1578 = vmatprep.subr.bf16.mxu0 0
    %1579 = vmatpush1.bf16.msra.mxu0 %v1560
    %1580 = vmatprep.subr.bf16.mxu0 0
    %1581 = vmatpush1.bf16.msra.mxu0 %v1559
    %1582 = vmatprep.subr.bf16.mxu0 0
    %1583 = vmatpush2.bf16.msra.mxu0 0
    %1584 = vmatprep.subr.bf16.mxu0 0
    %1585 = vmatpush2.bf16.msra.mxu0 0
    %1586 = vmatprep.subr.bf16.mxu0 0
    %1587 = vmatpush2.bf16.msra.mxu0 0
    %1588 = vmatprep.subr.bf16.mxu0 0
    %1589 = vmatpush2.bf16.msra.mxu0 0
    %1590 = vmatprep.subr.bf16.mxu0 0
    %1591 = vmatpush2.bf16.msra.mxu0 0
    %1592 = vmatprep.subr.bf16.mxu0 0
    %1593 = vmatpush2.bf16.msra.mxu0 0
    %1594 = vmatprep.subr.bf16.mxu0 0
    %1595 = vmatpush2.bf16.msra.mxu0 0
    %1596 = vmatprep.subr.bf16.mxu0 0
    %1597 = vmatpush2.bf16.msra.mxu0 0
    %1598 = vmatprep.mubr.bf16.mxu0 0
    %1599 = vmatmul.mubr.bf16.gmra.mxu0 %v1564
    %v1600 = vpop.f32.mrf.mxu0
    %v1601 = vadd.f32 0.0, %v1600
    %v1602 = vpop.f32.mrf.mxu0
    %v1603 = vpop.f32.mrf.mxu0
    %v1604 = vadd.f32 0.0, %v1603
    %v1605 = vpop.f32.mrf.mxu0
    %1606 = vdwg.mxu0
    %v1607 = vpack.c.bf16 %v1604, %v1601
    %v1609 = vunpack.c.l.b16 %v1607
    %v1610 = vunpack.c.h.b16 %v1607
    %v1611 = vpack.c.b16 %v1609, %v1609
    %v1612 = vpack.c.b16 %v1610, %v1610
    %1613 = vrot.lane.b32.xlu0 %v1611, 96
    %v1614 = vpop.permute.xlu0 %1613
    %v1616 = vsel %vm274, %v1611, 0
    %v1619 = vsel %vm274, %v1614, 0
    %1621 = vmatprep.subr.bf16.mxu0 0
    %1622 = vmatpush1.bf16.xpose.msra.mxu0 0
    %1623 = vmatprep.subr.bf16.mxu0 0
    %1624 = vmatpush1.bf16.xpose.msra.mxu0 0
    %1625 = vmatprep.subr.bf16.mxu0 0
    %1626 = vmatpush1.bf16.xpose.msra.mxu0 0
    %1627 = vmatprep.subr.bf16.mxu0 0
    %1628 = vmatpush1.bf16.xpose.msra.mxu0 0
    %1629 = vmatprep.subr.bf16.mxu0 0
    %1630 = vmatpush1.bf16.xpose.msra.mxu0 0
    %1631 = vmatprep.subr.bf16.mxu0 0
    %1632 = vmatpush1.bf16.xpose.msra.mxu0 0
    %1633 = vmatprep.subr.bf16.mxu0 0
    %1634 = vmatpush1.bf16.xpose.msra.mxu0 0
    %1635 = vmatprep.subr.bf16.mxu0 0
    %1636 = vmatpush1.bf16.xpose.msra.mxu0 %v1619
    %1637 = vmatprep.subr.bf16.mxu0 0
    %1638 = vmatpush2.bf16.xpose.msra.mxu0 0
    %1639 = vmatprep.subr.bf16.mxu0 0
    %1640 = vmatpush2.bf16.xpose.msra.mxu0 0
    %1641 = vmatprep.subr.bf16.mxu0 0
    %1642 = vmatpush2.bf16.xpose.msra.mxu0 0
    %1643 = vmatprep.subr.bf16.mxu0 0
    %1644 = vmatpush2.bf16.xpose.msra.mxu0 0
    %1645 = vmatprep.subr.bf16.mxu0 0
    %1646 = vmatpush2.bf16.xpose.msra.mxu0 0
    %1647 = vmatprep.subr.bf16.mxu0 0
    %1648 = vmatpush2.bf16.xpose.msra.mxu0 0
    %1649 = vmatprep.subr.bf16.mxu0 0
    %1650 = vmatpush2.bf16.xpose.msra.mxu0 0
    %1651 = vmatprep.subr.bf16.mxu0 0
    %1652 = vmatpush2.bf16.xpose.msra.mxu0 0
    %1653 = vmatprep.mubr.bf16.mxu0 0
    %1654 = vmatmul.mubr.bf16.gmra.mxu0 %v1616
    %v1655 = vpop.f32.mrf.mxu0
    %v1656 = vadd.f32 %v158, %v1655
    %v1657 = vpop.f32.mrf.mxu0
    %v1658 = vpop.f32.mrf.mxu0
    %v1659 = vpop.f32.mrf.mxu0
    %1660 = vdwg.mxu0
    %1661 = vrot.lane.b32.xlu0 %v1612, 96
    %v1662 = vpop.permute.xlu0 %1661
    %v1664 = vsel %vm274, %v1612, 0
    %v1667 = vsel %vm274, %v1662, 0
    %1669 = vmatprep.subr.bf16.mxu0 0
    %1670 = vmatpush1.bf16.xpose.msra.mxu0 0
    %1671 = vmatprep.subr.bf16.mxu0 0
    %1672 = vmatpush1.bf16.xpose.msra.mxu0 0
    %1673 = vmatprep.subr.bf16.mxu0 0
    %1674 = vmatpush1.bf16.xpose.msra.mxu0 0
    %1675 = vmatprep.subr.bf16.mxu0 0
    %1676 = vmatpush1.bf16.xpose.msra.mxu0 0
    %1677 = vmatprep.subr.bf16.mxu0 0
    %1678 = vmatpush1.bf16.xpose.msra.mxu0 0
    %1679 = vmatprep.subr.bf16.mxu0 0
    %1680 = vmatpush1.bf16.xpose.msra.mxu0 0
    %1681 = vmatprep.subr.bf16.mxu0 0
    %1682 = vmatpush1.bf16.xpose.msra.mxu0 0
    %1683 = vmatprep.subr.bf16.mxu0 0
    %1684 = vmatpush1.bf16.xpose.msra.mxu0 %v1667
    %1685 = vmatprep.subr.bf16.mxu0 0
    %1686 = vmatpush2.bf16.xpose.msra.mxu0 0
    %1687 = vmatprep.subr.bf16.mxu0 0
    %1688 = vmatpush2.bf16.xpose.msra.mxu0 0
    %1689 = vmatprep.subr.bf16.mxu0 0
    %1690 = vmatpush2.bf16.xpose.msra.mxu0 0
    %1691 = vmatprep.subr.bf16.mxu0 0
    %1692 = vmatpush2.bf16.xpose.msra.mxu0 0
    %1693 = vmatprep.subr.bf16.mxu0 0
    %1694 = vmatpush2.bf16.xpose.msra.mxu0 0
    %1695 = vmatprep.subr.bf16.mxu0 0
    %1696 = vmatpush2.bf16.xpose.msra.mxu0 0
    %1697 = vmatprep.subr.bf16.mxu0 0
    %1698 = vmatpush2.bf16.xpose.msra.mxu0 0
    %1699 = vmatprep.subr.bf16.mxu0 0
    %1700 = vmatpush2.bf16.xpose.msra.mxu0 0
    %1701 = vmatprep.mubr.bf16.mxu0 0
    %1702 = vmatmul.mubr.bf16.gmra.mxu0 %v1664
    %v1703 = vpop.f32.mrf.mxu0
    %v1704 = vadd.f32 %v158, %v1703
    %v1705 = vpop.f32.mrf.mxu0
    %v1706 = vpop.f32.mrf.mxu0
    %v1707 = vpop.f32.mrf.mxu0
    %1708 = vdwg.mxu0
    %v1709 = vsel %vm274, %v1656, -inf
    %1710 = vmax.xlane.f32.xlu0 %v1709
    %v1711 = vpop.xlane.xlu0 %1710
    %v1712 = vsel %vm274, %v1704, -inf
    %1713 = vmax.xlane.f32.xlu0 %v1712
    %v1714 = vpop.xlane.xlu0 %1713
    %v1715 = vsub.f32 %v1656, %v1711
    %v1716 = vsub.f32 %v1704, %v1714
    %v1717 = vmul.f32 %v1715, 1.442695
    %v1718 = vpow.pop %v1717
    %v1719 = vmul.f32 %v1716, 1.442695
    %v1720 = vpow.pop %v1719
    %v1721 = vsel %vm274, %v1718, 0.0
    %1722 = vadd.xlane.f32.xlu0 %v1721
    %v1723 = vpop.xlane.xlu0 %1722
    %v1724 = vsel %vm274, %v1720, 0.0
    %1725 = vadd.xlane.f32.xlu0 %v1724
    %v1726 = vpop.xlane.xlu0 %1725
    %v1727 = vrcp.pop %v1723
    %v1728 = vrcp.pop %v1726
    %v1729 = vmul.f32 %v1718, %v1727
    %v1730 = vmul.f32 %v1720, %v1728
    %v1731 = vpack.c.bf16 %v1729, %v1729
    %v1732 = vpack.c.bf16 %v1730, %v1730
    %1733 = vrot.lane.b32.xlu0 %v1611, 64
    %v1734 = vpop.permute.xlu0 %1733
    %v1736 = vsel %vm274, %v1731, 0
    %v1739 = vsel %vm398, %v1734, 0
    %1741 = vmatprep.subr.bf16.mxu0 0
    %1742 = vmatpush1.bf16.msra.mxu0 0
    %1743 = vmatprep.subr.bf16.mxu0 0
    %1744 = vmatpush1.bf16.msra.mxu0 0
    %1745 = vmatprep.subr.bf16.mxu0 0
    %1746 = vmatpush1.bf16.msra.mxu0 0
    %1747 = vmatprep.subr.bf16.mxu0 0
    %1748 = vmatpush1.bf16.msra.mxu0 0
    %1749 = vmatprep.subr.bf16.mxu0 0
    %1750 = vmatpush1.bf16.msra.mxu0 0
    %1751 = vmatprep.subr.bf16.mxu0 0
    %1752 = vmatpush1.bf16.msra.mxu0 0
    %1753 = vmatprep.subr.bf16.mxu0 0
    %1754 = vmatpush1.bf16.msra.mxu0 0
    %1755 = vmatprep.subr.bf16.mxu0 0
    %1756 = vmatpush1.bf16.msra.mxu0 %v1739
    %1757 = vmatprep.subr.bf16.mxu0 0
    %1758 = vmatpush2.bf16.msra.mxu0 0
    %1759 = vmatprep.subr.bf16.mxu0 0
    %1760 = vmatpush2.bf16.msra.mxu0 0
    %1761 = vmatprep.subr.bf16.mxu0 0
    %1762 = vmatpush2.bf16.msra.mxu0 0
    %1763 = vmatprep.subr.bf16.mxu0 0
    %1764 = vmatpush2.bf16.msra.mxu0 0
    %1765 = vmatprep.subr.bf16.mxu0 0
    %1766 = vmatpush2.bf16.msra.mxu0 0
    %1767 = vmatprep.subr.bf16.mxu0 0
    %1768 = vmatpush2.bf16.msra.mxu0 0
    %1769 = vmatprep.subr.bf16.mxu0 0
    %1770 = vmatpush2.bf16.msra.mxu0 0
    %1771 = vmatprep.subr.bf16.mxu0 0
    %1772 = vmatpush2.bf16.msra.mxu0 0
    %1773 = vmatprep.mubr.bf16.mxu0 0
    %1774 = vmatmul.mubr.bf16.gmra.mxu0 %v1736
    %v1775 = vpop.f32.mrf.mxu0
    %v1776 = vadd.f32 0.0, %v1775
    %v1777 = vpop.f32.mrf.mxu0
    %v1778 = vpop.f32.mrf.mxu0
    %v1779 = vpop.f32.mrf.mxu0
    %1780 = vdwg.mxu0
    %1781 = vrot.lane.b32.xlu0 %v1612, 64
    %v1782 = vpop.permute.xlu0 %1781
    %v1784 = vsel %vm274, %v1732, 0
    %v1787 = vsel %vm398, %v1782, 0
    %1789 = vmatprep.subr.bf16.mxu0 0
    %1790 = vmatpush1.bf16.msra.mxu0 0
    %1791 = vmatprep.subr.bf16.mxu0 0
    %1792 = vmatpush1.bf16.msra.mxu0 0
    %1793 = vmatprep.subr.bf16.mxu0 0
    %1794 = vmatpush1.bf16.msra.mxu0 0
    %1795 = vmatprep.subr.bf16.mxu0 0
    %1796 = vmatpush1.bf16.msra.mxu0 0
    %1797 = vmatprep.subr.bf16.mxu0 0
    %1798 = vmatpush1.bf16.msra.mxu0 0
    %1799 = vmatprep.subr.bf16.mxu0 0
    %1800 = vmatpush1.bf16.msra.mxu0 0
    %1801 = vmatprep.subr.bf16.mxu0 0
    %1802 = vmatpush1.bf16.msra.mxu0 0
    %1803 = vmatprep.subr.bf16.mxu0 0
    %1804 = vmatpush1.bf16.msra.mxu0 %v1787
    %1805 = vmatprep.subr.bf16.mxu0 0
    %1806 = vmatpush2.bf16.msra.mxu0 0
    %1807 = vmatprep.subr.bf16.mxu0 0
    %1808 = vmatpush2.bf16.msra.mxu0 0
    %1809 = vmatprep.subr.bf16.mxu0 0
    %1810 = vmatpush2.bf16.msra.mxu0 0
    %1811 = vmatprep.subr.bf16.mxu0 0
    %1812 = vmatpush2.bf16.msra.mxu0 0
    %1813 = vmatprep.subr.bf16.mxu0 0
    %1814 = vmatpush2.bf16.msra.mxu0 0
    %1815 = vmatprep.subr.bf16.mxu0 0
    %1816 = vmatpush2.bf16.msra.mxu0 0
    %1817 = vmatprep.subr.bf16.mxu0 0
    %1818 = vmatpush2.bf16.msra.mxu0 0
    %1819 = vmatprep.subr.bf16.mxu0 0
    %1820 = vmatpush2.bf16.msra.mxu0 0
    %1821 = vmatprep.mubr.bf16.mxu0 0
    %1822 = vmatmul.mubr.bf16.gmra.mxu0 %v1784
    %v1823 = vpop.f32.mrf.mxu0
    %v1824 = vadd.f32 0.0, %v1823
    %v1825 = vpop.f32.mrf.mxu0
    %v1826 = vpop.f32.mrf.mxu0
    %v1827 = vpop.f32.mrf.mxu0
    %1828 = vdwg.mxu0
    %1829 = vrot.lane.b32.xlu0 %v1611, 120
    %v1830 = vpop.permute.xlu0 %1829
    %1831 = vrot.lane.b32.xlu0 %v1611, 88
    %v1832 = vpop.permute.xlu0 %1831
    %v1834 = vsel %vm274, %v1830, 0
    %v1837 = vsel %vm274, %v1832, 0
    %1839 = vmatprep.subr.bf16.mxu0 0
    %1840 = vmatpush1.bf16.xpose.msra.mxu0 0
    %1841 = vmatprep.subr.bf16.mxu0 0
    %1842 = vmatpush1.bf16.xpose.msra.mxu0 0
    %1843 = vmatprep.subr.bf16.mxu0 0
    %1844 = vmatpush1.bf16.xpose.msra.mxu0 0
    %1845 = vmatprep.subr.bf16.mxu0 0
    %1846 = vmatpush1.bf16.xpose.msra.mxu0 0
    %1847 = vmatprep.subr.bf16.mxu0 0
    %1848 = vmatpush1.bf16.xpose.msra.mxu0 0
    %1849 = vmatprep.subr.bf16.mxu0 0
    %1850 = vmatpush1.bf16.xpose.msra.mxu0 0
    %1851 = vmatprep.subr.bf16.mxu0 0
    %1852 = vmatpush1.bf16.xpose.msra.mxu0 0
    %1853 = vmatprep.subr.bf16.mxu0 0
    %1854 = vmatpush1.bf16.xpose.msra.mxu0 %v1837
    %1855 = vmatprep.subr.bf16.mxu0 0
    %1856 = vmatpush2.bf16.xpose.msra.mxu0 0
    %1857 = vmatprep.subr.bf16.mxu0 0
    %1858 = vmatpush2.bf16.xpose.msra.mxu0 0
    %1859 = vmatprep.subr.bf16.mxu0 0
    %1860 = vmatpush2.bf16.xpose.msra.mxu0 0
    %1861 = vmatprep.subr.bf16.mxu0 0
    %1862 = vmatpush2.bf16.xpose.msra.mxu0 0
    %1863 = vmatprep.subr.bf16.mxu0 0
    %1864 = vmatpush2.bf16.xpose.msra.mxu0 0
    %1865 = vmatprep.subr.bf16.mxu0 0
    %1866 = vmatpush2.bf16.xpose.msra.mxu0 0
    %1867 = vmatprep.subr.bf16.mxu0 0
    %1868 = vmatpush2.bf16.xpose.msra.mxu0 0
    %1869 = vmatprep.subr.bf16.mxu0 0
    %1870 = vmatpush2.bf16.xpose.msra.mxu0 0
    %1871 = vmatprep.mubr.bf16.mxu0 0
    %1872 = vmatmul.mubr.bf16.gmra.mxu0 %v1834
    %v1873 = vpop.f32.mrf.mxu0
    %v1874 = vadd.f32 %v158, %v1873
    %v1875 = vpop.f32.mrf.mxu0
    %v1876 = vpop.f32.mrf.mxu0
    %v1877 = vpop.f32.mrf.mxu0
    %1878 = vdwg.mxu0
    %1879 = vrot.lane.b32.xlu0 %v1612, 120
    %v1880 = vpop.permute.xlu0 %1879
    %1881 = vrot.lane.b32.xlu0 %v1612, 88
    %v1882 = vpop.permute.xlu0 %1881
    %v1884 = vsel %vm274, %v1880, 0
    %v1887 = vsel %vm274, %v1882, 0
    %1889 = vmatprep.subr.bf16.mxu0 0
    %1890 = vmatpush1.bf16.xpose.msra.mxu0 0
    %1891 = vmatprep.subr.bf16.mxu0 0
    %1892 = vmatpush1.bf16.xpose.msra.mxu0 0
    %1893 = vmatprep.subr.bf16.mxu0 0
    %1894 = vmatpush1.bf16.xpose.msra.mxu0 0
    %1895 = vmatprep.subr.bf16.mxu0 0
    %1896 = vmatpush1.bf16.xpose.msra.mxu0 0
    %1897 = vmatprep.subr.bf16.mxu0 0
    %1898 = vmatpush1.bf16.xpose.msra.mxu0 0
    %1899 = vmatprep.subr.bf16.mxu0 0
    %1900 = vmatpush1.bf16.xpose.msra.mxu0 0
    %1901 = vmatprep.subr.bf16.mxu0 0
    %1902 = vmatpush1.bf16.xpose.msra.mxu0 0
    %1903 = vmatprep.subr.bf16.mxu0 0
    %1904 = vmatpush1.bf16.xpose.msra.mxu0 %v1887
    %1905 = vmatprep.subr.bf16.mxu0 0
    %1906 = vmatpush2.bf16.xpose.msra.mxu0 0
    %1907 = vmatprep.subr.bf16.mxu0 0
    %1908 = vmatpush2.bf16.xpose.msra.mxu0 0
    %1909 = vmatprep.subr.bf16.mxu0 0
    %1910 = vmatpush2.bf16.xpose.msra.mxu0 0
    %1911 = vmatprep.subr.bf16.mxu0 0
    %1912 = vmatpush2.bf16.xpose.msra.mxu0 0
    %1913 = vmatprep.subr.bf16.mxu0 0
    %1914 = vmatpush2.bf16.xpose.msra.mxu0 0
    %1915 = vmatprep.subr.bf16.mxu0 0
    %1916 = vmatpush2.bf16.xpose.msra.mxu0 0
    %1917 = vmatprep.subr.bf16.mxu0 0
    %1918 = vmatpush2.bf16.xpose.msra.mxu0 0
    %1919 = vmatprep.subr.bf16.mxu0 0
    %1920 = vmatpush2.bf16.xpose.msra.mxu0 0
    %1921 = vmatprep.mubr.bf16.mxu0 0
    %1922 = vmatmul.mubr.bf16.gmra.mxu0 %v1884
    %v1923 = vpop.f32.mrf.mxu0
    %v1924 = vadd.f32 %v158, %v1923
    %v1925 = vpop.f32.mrf.mxu0
    %v1926 = vpop.f32.mrf.mxu0
    %v1927 = vpop.f32.mrf.mxu0
    %1928 = vdwg.mxu0
    %v1929 = vsel %vm274, %v1874, -inf
    %1930 = vmax.xlane.f32.xlu0 %v1929
    %v1931 = vpop.xlane.xlu0 %1930
    %v1932 = vsel %vm274, %v1924, -inf
    %1933 = vmax.xlane.f32.xlu0 %v1932
    %v1934 = vpop.xlane.xlu0 %1933
    %v1935 = vsub.f32 %v1874, %v1931
    %v1936 = vsub.f32 %v1924, %v1934
    %v1937 = vmul.f32 %v1935, 1.442695
    %v1938 = vpow.pop %v1937
    %v1939 = vmul.f32 %v1936, 1.442695
    %v1940 = vpow.pop %v1939
    %v1941 = vsel %vm274, %v1938, 0.0
    %1942 = vadd.xlane.f32.xlu0 %v1941
    %v1943 = vpop.xlane.xlu0 %1942
    %v1944 = vsel %vm274, %v1940, 0.0
    %1945 = vadd.xlane.f32.xlu0 %v1944
    %v1946 = vpop.xlane.xlu0 %1945
    %v1947 = vrcp.pop %v1943
    %v1948 = vrcp.pop %v1946
    %v1949 = vmul.f32 %v1938, %v1947
    %v1950 = vmul.f32 %v1940, %v1948
    %v1951 = vpack.c.bf16 %v1949, %v1949
    %v1952 = vpack.c.bf16 %v1950, %v1950
    %1953 = vrot.lane.b32.xlu0 %v1611, 56
    %v1954 = vpop.permute.xlu0 %1953
    %v1956 = vsel %vm274, %v1951, 0
    %v1959 = vsel %vm398, %v1954, 0
    %1961 = vmatprep.subr.bf16.mxu0 0
    %1962 = vmatpush1.bf16.msra.mxu0 0
    %1963 = vmatprep.subr.bf16.mxu0 0
    %1964 = vmatpush1.bf16.msra.mxu0 0
    %1965 = vmatprep.subr.bf16.mxu0 0
    %1966 = vmatpush1.bf16.msra.mxu0 0
    %1967 = vmatprep.subr.bf16.mxu0 0
    %1968 = vmatpush1.bf16.msra.mxu0 0
    %1969 = vmatprep.subr.bf16.mxu0 0
    %1970 = vmatpush1.bf16.msra.mxu0 0
    %1971 = vmatprep.subr.bf16.mxu0 0
    %1972 = vmatpush1.bf16.msra.mxu0 0
    %1973 = vmatprep.subr.bf16.mxu0 0
    %1974 = vmatpush1.bf16.msra.mxu0 0
    %1975 = vmatprep.subr.bf16.mxu0 0
    %1976 = vmatpush1.bf16.msra.mxu0 %v1959
    %1977 = vmatprep.subr.bf16.mxu0 0
    %1978 = vmatpush2.bf16.msra.mxu0 0
    %1979 = vmatprep.subr.bf16.mxu0 0
    %1980 = vmatpush2.bf16.msra.mxu0 0
    %1981 = vmatprep.subr.bf16.mxu0 0
    %1982 = vmatpush2.bf16.msra.mxu0 0
    %1983 = vmatprep.subr.bf16.mxu0 0
    %1984 = vmatpush2.bf16.msra.mxu0 0
    %1985 = vmatprep.subr.bf16.mxu0 0
    %1986 = vmatpush2.bf16.msra.mxu0 0
    %1987 = vmatprep.subr.bf16.mxu0 0
    %1988 = vmatpush2.bf16.msra.mxu0 0
    %1989 = vmatprep.subr.bf16.mxu0 0
    %1990 = vmatpush2.bf16.msra.mxu0 0
    %1991 = vmatprep.subr.bf16.mxu0 0
    %1992 = vmatpush2.bf16.msra.mxu0 0
    %1993 = vmatprep.mubr.bf16.mxu0 0
    %1994 = vmatmul.mubr.bf16.gmra.mxu0 %v1956
    %v1995 = vpop.f32.mrf.mxu0
    %v1996 = vadd.f32 0.0, %v1995
    %v1997 = vpop.f32.mrf.mxu0
    %v1998 = vpop.f32.mrf.mxu0
    %v1999 = vpop.f32.mrf.mxu0
    %2000 = vdwg.mxu0
    %2001 = vrot.lane.b32.xlu0 %v1612, 56
    %v2002 = vpop.permute.xlu0 %2001
    %v2004 = vsel %vm274, %v1952, 0
    %v2007 = vsel %vm398, %v2002, 0
    %2009 = vmatprep.subr.bf16.mxu0 0
    %2010 = vmatpush1.bf16.msra.mxu0 0
    %2011 = vmatprep.subr.bf16.mxu0 0
    %2012 = vmatpush1.bf16.msra.mxu0 0
    %2013 = vmatprep.subr.bf16.mxu0 0
    %2014 = vmatpush1.bf16.msra.mxu0 0
    %2015 = vmatprep.subr.bf16.mxu0 0
    %2016 = vmatpush1.bf16.msra.mxu0 0
    %2017 = vmatprep.subr.bf16.mxu0 0
    %2018 = vmatpush1.bf16.msra.mxu0 0
    %2019 = vmatprep.subr.bf16.mxu0 0
    %2020 = vmatpush1.bf16.msra.mxu0 0
    %2021 = vmatprep.subr.bf16.mxu0 0
    %2022 = vmatpush1.bf16.msra.mxu0 0
    %2023 = vmatprep.subr.bf16.mxu0 0
    %2024 = vmatpush1.bf16.msra.mxu0 %v2007
    %2025 = vmatprep.subr.bf16.mxu0 0
    %2026 = vmatpush2.bf16.msra.mxu0 0
    %2027 = vmatprep.subr.bf16.mxu0 0
    %2028 = vmatpush2.bf16.msra.mxu0 0
    %2029 = vmatprep.subr.bf16.mxu0 0
    %2030 = vmatpush2.bf16.msra.mxu0 0
    %2031 = vmatprep.subr.bf16.mxu0 0
    %2032 = vmatpush2.bf16.msra.mxu0 0
    %2033 = vmatprep.subr.bf16.mxu0 0
    %2034 = vmatpush2.bf16.msra.mxu0 0
    %2035 = vmatprep.subr.bf16.mxu0 0
    %2036 = vmatpush2.bf16.msra.mxu0 0
    %2037 = vmatprep.subr.bf16.mxu0 0
    %2038 = vmatpush2.bf16.msra.mxu0 0
    %2039 = vmatprep.subr.bf16.mxu0 0
    %2040 = vmatpush2.bf16.msra.mxu0 0
    %2041 = vmatprep.mubr.bf16.mxu0 0
    %2042 = vmatmul.mubr.bf16.gmra.mxu0 %v2004
    %v2043 = vpop.f32.mrf.mxu0
    %v2044 = vadd.f32 0.0, %v2043
    %v2045 = vpop.f32.mrf.mxu0
    %v2046 = vpop.f32.mrf.mxu0
    %v2047 = vpop.f32.mrf.mxu0
    %2048 = vdwg.mxu0
    %2049 = vrot.lane.b32.xlu0 %v1611, 112
    %v2050 = vpop.permute.xlu0 %2049
    %2051 = vrot.lane.b32.xlu0 %v1611, 80
    %v2052 = vpop.permute.xlu0 %2051
    %v2054 = vsel %vm274, %v2050, 0
    %v2057 = vsel %vm274, %v2052, 0
    %2059 = vmatprep.subr.bf16.mxu0 0
    %2060 = vmatpush1.bf16.xpose.msra.mxu0 0
    %2061 = vmatprep.subr.bf16.mxu0 0
    %2062 = vmatpush1.bf16.xpose.msra.mxu0 0
    %2063 = vmatprep.subr.bf16.mxu0 0
    %2064 = vmatpush1.bf16.xpose.msra.mxu0 0
    %2065 = vmatprep.subr.bf16.mxu0 0
    %2066 = vmatpush1.bf16.xpose.msra.mxu0 0
    %2067 = vmatprep.subr.bf16.mxu0 0
    %2068 = vmatpush1.bf16.xpose.msra.mxu0 0
    %2069 = vmatprep.subr.bf16.mxu0 0
    %2070 = vmatpush1.bf16.xpose.msra.mxu0 0
    %2071 = vmatprep.subr.bf16.mxu0 0
    %2072 = vmatpush1.bf16.xpose.msra.mxu0 0
    %2073 = vmatprep.subr.bf16.mxu0 0
    %2074 = vmatpush1.bf16.xpose.msra.mxu0 %v2057
    %2075 = vmatprep.subr.bf16.mxu0 0
    %2076 = vmatpush2.bf16.xpose.msra.mxu0 0
    %2077 = vmatprep.subr.bf16.mxu0 0
    %2078 = vmatpush2.bf16.xpose.msra.mxu0 0
    %2079 = vmatprep.subr.bf16.mxu0 0
    %2080 = vmatpush2.bf16.xpose.msra.mxu0 0
    %2081 = vmatprep.subr.bf16.mxu0 0
    %2082 = vmatpush2.bf16.xpose.msra.mxu0 0
    %2083 = vmatprep.subr.bf16.mxu0 0
    %2084 = vmatpush2.bf16.xpose.msra.mxu0 0
    %2085 = vmatprep.subr.bf16.mxu0 0
    %2086 = vmatpush2.bf16.xpose.msra.mxu0 0
    %2087 = vmatprep.subr.bf16.mxu0 0
    %2088 = vmatpush2.bf16.xpose.msra.mxu0 0
    %2089 = vmatprep.subr.bf16.mxu0 0
    %2090 = vmatpush2.bf16.xpose.msra.mxu0 0
    %2091 = vmatprep.mubr.bf16.mxu0 0
    %2092 = vmatmul.mubr.bf16.gmra.mxu0 %v2054
    %v2093 = vpop.f32.mrf.mxu0
    %v2094 = vadd.f32 %v158, %v2093
    %v2095 = vpop.f32.mrf.mxu0
    %v2096 = vpop.f32.mrf.mxu0
    %v2097 = vpop.f32.mrf.mxu0
    %2098 = vdwg.mxu0
    %2099 = vrot.lane.b32.xlu0 %v1612, 112
    %v2100 = vpop.permute.xlu0 %2099
    %2101 = vrot.lane.b32.xlu0 %v1612, 80
    %v2102 = vpop.permute.xlu0 %2101
    %v2104 = vsel %vm274, %v2100, 0
    %v2107 = vsel %vm274, %v2102, 0
    %2109 = vmatprep.subr.bf16.mxu0 0
    %2110 = vmatpush1.bf16.xpose.msra.mxu0 0
    %2111 = vmatprep.subr.bf16.mxu0 0
    %2112 = vmatpush1.bf16.xpose.msra.mxu0 0
    %2113 = vmatprep.subr.bf16.mxu0 0
    %2114 = vmatpush1.bf16.xpose.msra.mxu0 0
    %2115 = vmatprep.subr.bf16.mxu0 0
    %2116 = vmatpush1.bf16.xpose.msra.mxu0 0
    %2117 = vmatprep.subr.bf16.mxu0 0
    %2118 = vmatpush1.bf16.xpose.msra.mxu0 0
    %2119 = vmatprep.subr.bf16.mxu0 0
    %2120 = vmatpush1.bf16.xpose.msra.mxu0 0
    %2121 = vmatprep.subr.bf16.mxu0 0
    %2122 = vmatpush1.bf16.xpose.msra.mxu0 0
    %2123 = vmatprep.subr.bf16.mxu0 0
    %2124 = vmatpush1.bf16.xpose.msra.mxu0 %v2107
    %2125 = vmatprep.subr.bf16.mxu0 0
    %2126 = vmatpush2.bf16.xpose.msra.mxu0 0
    %2127 = vmatprep.subr.bf16.mxu0 0
    %2128 = vmatpush2.bf16.xpose.msra.mxu0 0
    %2129 = vmatprep.subr.bf16.mxu0 0
    %2130 = vmatpush2.bf16.xpose.msra.mxu0 0
    %2131 = vmatprep.subr.bf16.mxu0 0
    %2132 = vmatpush2.bf16.xpose.msra.mxu0 0
    %2133 = vmatprep.subr.bf16.mxu0 0
    %2134 = vmatpush2.bf16.xpose.msra.mxu0 0
    %2135 = vmatprep.subr.bf16.mxu0 0
    %2136 = vmatpush2.bf16.xpose.msra.mxu0 0
    %2137 = vmatprep.subr.bf16.mxu0 0
    %2138 = vmatpush2.bf16.xpose.msra.mxu0 0
    %2139 = vmatprep.subr.bf16.mxu0 0
    %2140 = vmatpush2.bf16.xpose.msra.mxu0 0
    %2141 = vmatprep.mubr.bf16.mxu0 0
    %2142 = vmatmul.mubr.bf16.gmra.mxu0 %v2104
    %v2143 = vpop.f32.mrf.mxu0
    %v2144 = vadd.f32 %v158, %v2143
    %v2145 = vpop.f32.mrf.mxu0
    %v2146 = vpop.f32.mrf.mxu0
    %v2147 = vpop.f32.mrf.mxu0
    %2148 = vdwg.mxu0
    %v2149 = vsel %vm274, %v2094, -inf
    %2150 = vmax.xlane.f32.xlu0 %v2149
    %v2151 = vpop.xlane.xlu0 %2150
    %v2152 = vsel %vm274, %v2144, -inf
    %2153 = vmax.xlane.f32.xlu0 %v2152
    %v2154 = vpop.xlane.xlu0 %2153
    %v2155 = vsub.f32 %v2094, %v2151
    %v2156 = vsub.f32 %v2144, %v2154
    %v2157 = vmul.f32 %v2155, 1.442695
    %v2158 = vpow.pop %v2157
    %v2159 = vmul.f32 %v2156, 1.442695
    %v2160 = vpow.pop %v2159
    %v2161 = vsel %vm274, %v2158, 0.0
    %2162 = vadd.xlane.f32.xlu0 %v2161
    %v2163 = vpop.xlane.xlu0 %2162
    %v2164 = vsel %vm274, %v2160, 0.0
    %2165 = vadd.xlane.f32.xlu0 %v2164
    %v2166 = vpop.xlane.xlu0 %2165
    %v2167 = vrcp.pop %v2163
    %v2168 = vrcp.pop %v2166
    %v2169 = vmul.f32 %v2158, %v2167
    %v2170 = vmul.f32 %v2160, %v2168
    %v2171 = vpack.c.bf16 %v2169, %v2169
    %v2172 = vpack.c.bf16 %v2170, %v2170
    %2173 = vrot.lane.b32.xlu0 %v1611, 48
    %v2174 = vpop.permute.xlu0 %2173
    %v2176 = vsel %vm274, %v2171, 0
    %v2179 = vsel %vm398, %v2174, 0
    %2181 = vmatprep.subr.bf16.mxu0 0
    %2182 = vmatpush1.bf16.msra.mxu0 0
    %2183 = vmatprep.subr.bf16.mxu0 0
    %2184 = vmatpush1.bf16.msra.mxu0 0
    %2185 = vmatprep.subr.bf16.mxu0 0
    %2186 = vmatpush1.bf16.msra.mxu0 0
    %2187 = vmatprep.subr.bf16.mxu0 0
    %2188 = vmatpush1.bf16.msra.mxu0 0
    %2189 = vmatprep.subr.bf16.mxu0 0
    %2190 = vmatpush1.bf16.msra.mxu0 0
    %2191 = vmatprep.subr.bf16.mxu0 0
    %2192 = vmatpush1.bf16.msra.mxu0 0
    %2193 = vmatprep.subr.bf16.mxu0 0
    %2194 = vmatpush1.bf16.msra.mxu0 0
    %2195 = vmatprep.subr.bf16.mxu0 0
    %2196 = vmatpush1.bf16.msra.mxu0 %v2179
    %2197 = vmatprep.subr.bf16.mxu0 0
    %2198 = vmatpush2.bf16.msra.mxu0 0
    %2199 = vmatprep.subr.bf16.mxu0 0
    %2200 = vmatpush2.bf16.msra.mxu0 0
    %2201 = vmatprep.subr.bf16.mxu0 0
    %2202 = vmatpush2.bf16.msra.mxu0 0
    %2203 = vmatprep.subr.bf16.mxu0 0
    %2204 = vmatpush2.bf16.msra.mxu0 0
    %2205 = vmatprep.subr.bf16.mxu0 0
    %2206 = vmatpush2.bf16.msra.mxu0 0
    %2207 = vmatprep.subr.bf16.mxu0 0
    %2208 = vmatpush2.bf16.msra.mxu0 0
    %2209 = vmatprep.subr.bf16.mxu0 0
    %2210 = vmatpush2.bf16.msra.mxu0 0
    %2211 = vmatprep.subr.bf16.mxu0 0
    %2212 = vmatpush2.bf16.msra.mxu0 0
    %2213 = vmatprep.mubr.bf16.mxu0 0
    %2214 = vmatmul.mubr.bf16.gmra.mxu0 %v2176
    %v2215 = vpop.f32.mrf.mxu0
    %v2216 = vadd.f32 0.0, %v2215
    %v2217 = vpop.f32.mrf.mxu0
    %v2218 = vpop.f32.mrf.mxu0
    %v2219 = vpop.f32.mrf.mxu0
    %2220 = vdwg.mxu0
    %2221 = vrot.lane.b32.xlu0 %v1612, 48
    %v2222 = vpop.permute.xlu0 %2221
    %v2224 = vsel %vm274, %v2172, 0
    %v2227 = vsel %vm398, %v2222, 0
    %2229 = vmatprep.subr.bf16.mxu0 0
    %2230 = vmatpush1.bf16.msra.mxu0 0
    %2231 = vmatprep.subr.bf16.mxu0 0
    %2232 = vmatpush1.bf16.msra.mxu0 0
    %2233 = vmatprep.subr.bf16.mxu0 0
    %2234 = vmatpush1.bf16.msra.mxu0 0
    %2235 = vmatprep.subr.bf16.mxu0 0
    %2236 = vmatpush1.bf16.msra.mxu0 0
    %2237 = vmatprep.subr.bf16.mxu0 0
    %2238 = vmatpush1.bf16.msra.mxu0 0
    %2239 = vmatprep.subr.bf16.mxu0 0
    %2240 = vmatpush1.bf16.msra.mxu0 0
    %2241 = vmatprep.subr.bf16.mxu0 0
    %2242 = vmatpush1.bf16.msra.mxu0 0
    %2243 = vmatprep.subr.bf16.mxu0 0
    %2244 = vmatpush1.bf16.msra.mxu0 %v2227
    %2245 = vmatprep.subr.bf16.mxu0 0
    %2246 = vmatpush2.bf16.msra.mxu0 0
    %2247 = vmatprep.subr.bf16.mxu0 0
    %2248 = vmatpush2.bf16.msra.mxu0 0
    %2249 = vmatprep.subr.bf16.mxu0 0
    %2250 = vmatpush2.bf16.msra.mxu0 0
    %2251 = vmatprep.subr.bf16.mxu0 0
    %2252 = vmatpush2.bf16.msra.mxu0 0
    %2253 = vmatprep.subr.bf16.mxu0 0
    %2254 = vmatpush2.bf16.msra.mxu0 0
    %2255 = vmatprep.subr.bf16.mxu0 0
    %2256 = vmatpush2.bf16.msra.mxu0 0
    %2257 = vmatprep.subr.bf16.mxu0 0
    %2258 = vmatpush2.bf16.msra.mxu0 0
    %2259 = vmatprep.subr.bf16.mxu0 0
    %2260 = vmatpush2.bf16.msra.mxu0 0
    %2261 = vmatprep.mubr.bf16.mxu0 0
    %2262 = vmatmul.mubr.bf16.gmra.mxu0 %v2224
    %v2263 = vpop.f32.mrf.mxu0
    %v2264 = vadd.f32 0.0, %v2263
    %v2265 = vpop.f32.mrf.mxu0
    %v2266 = vpop.f32.mrf.mxu0
    %v2267 = vpop.f32.mrf.mxu0
    %2268 = vdwg.mxu0
    %2269 = vrot.lane.b32.xlu0 %v1611, 104
    %v2270 = vpop.permute.xlu0 %2269
    %2271 = vrot.lane.b32.xlu0 %v1611, 72
    %v2272 = vpop.permute.xlu0 %2271
    %v2274 = vsel %vm274, %v2270, 0
    %v2277 = vsel %vm274, %v2272, 0
    %2279 = vmatprep.subr.bf16.mxu0 0
    %2280 = vmatpush1.bf16.xpose.msra.mxu0 0
    %2281 = vmatprep.subr.bf16.mxu0 0
    %2282 = vmatpush1.bf16.xpose.msra.mxu0 0
    %2283 = vmatprep.subr.bf16.mxu0 0
    %2284 = vmatpush1.bf16.xpose.msra.mxu0 0
    %2285 = vmatprep.subr.bf16.mxu0 0
    %2286 = vmatpush1.bf16.xpose.msra.mxu0 0
    %2287 = vmatprep.subr.bf16.mxu0 0
    %2288 = vmatpush1.bf16.xpose.msra.mxu0 0
    %2289 = vmatprep.subr.bf16.mxu0 0
    %2290 = vmatpush1.bf16.xpose.msra.mxu0 0
    %2291 = vmatprep.subr.bf16.mxu0 0
    %2292 = vmatpush1.bf16.xpose.msra.mxu0 0
    %2293 = vmatprep.subr.bf16.mxu0 0
    %2294 = vmatpush1.bf16.xpose.msra.mxu0 %v2277
    %2295 = vmatprep.subr.bf16.mxu0 0
    %2296 = vmatpush2.bf16.xpose.msra.mxu0 0
    %2297 = vmatprep.subr.bf16.mxu0 0
    %2298 = vmatpush2.bf16.xpose.msra.mxu0 0
    %2299 = vmatprep.subr.bf16.mxu0 0
    %2300 = vmatpush2.bf16.xpose.msra.mxu0 0
    %2301 = vmatprep.subr.bf16.mxu0 0
    %2302 = vmatpush2.bf16.xpose.msra.mxu0 0
    %2303 = vmatprep.subr.bf16.mxu0 0
    %2304 = vmatpush2.bf16.xpose.msra.mxu0 0
    %2305 = vmatprep.subr.bf16.mxu0 0
    %2306 = vmatpush2.bf16.xpose.msra.mxu0 0
    %2307 = vmatprep.subr.bf16.mxu0 0
    %2308 = vmatpush2.bf16.xpose.msra.mxu0 0
    %2309 = vmatprep.subr.bf16.mxu0 0
    %2310 = vmatpush2.bf16.xpose.msra.mxu0 0
    %2311 = vmatprep.mubr.bf16.mxu0 0
    %2312 = vmatmul.mubr.bf16.gmra.mxu0 %v2274
    %v2313 = vpop.f32.mrf.mxu0
    %v2314 = vadd.f32 %v158, %v2313
    %v2315 = vpop.f32.mrf.mxu0
    %v2316 = vpop.f32.mrf.mxu0
    %v2317 = vpop.f32.mrf.mxu0
    %2318 = vdwg.mxu0
    %2319 = vrot.lane.b32.xlu0 %v1612, 104
    %v2320 = vpop.permute.xlu0 %2319
    %2321 = vrot.lane.b32.xlu0 %v1612, 72
    %v2322 = vpop.permute.xlu0 %2321
    %v2324 = vsel %vm274, %v2320, 0
    %v2327 = vsel %vm274, %v2322, 0
    %2329 = vmatprep.subr.bf16.mxu0 0
    %2330 = vmatpush1.bf16.xpose.msra.mxu0 0
    %2331 = vmatprep.subr.bf16.mxu0 0
    %2332 = vmatpush1.bf16.xpose.msra.mxu0 0
    %2333 = vmatprep.subr.bf16.mxu0 0
    %2334 = vmatpush1.bf16.xpose.msra.mxu0 0
    %2335 = vmatprep.subr.bf16.mxu0 0
    %2336 = vmatpush1.bf16.xpose.msra.mxu0 0
    %2337 = vmatprep.subr.bf16.mxu0 0
    %2338 = vmatpush1.bf16.xpose.msra.mxu0 0
    %2339 = vmatprep.subr.bf16.mxu0 0
    %2340 = vmatpush1.bf16.xpose.msra.mxu0 0
    %2341 = vmatprep.subr.bf16.mxu0 0
    %2342 = vmatpush1.bf16.xpose.msra.mxu0 0
    %2343 = vmatprep.subr.bf16.mxu0 0
    %2344 = vmatpush1.bf16.xpose.msra.mxu0 %v2327
    %2345 = vmatprep.subr.bf16.mxu0 0
    %2346 = vmatpush2.bf16.xpose.msra.mxu0 0
    %2347 = vmatprep.subr.bf16.mxu0 0
    %2348 = vmatpush2.bf16.xpose.msra.mxu0 0
    %2349 = vmatprep.subr.bf16.mxu0 0
    %2350 = vmatpush2.bf16.xpose.msra.mxu0 0
    %2351 = vmatprep.subr.bf16.mxu0 0
    %2352 = vmatpush2.bf16.xpose.msra.mxu0 0
    %2353 = vmatprep.subr.bf16.mxu0 0
    %2354 = vmatpush2.bf16.xpose.msra.mxu0 0
    %2355 = vmatprep.subr.bf16.mxu0 0
    %2356 = vmatpush2.bf16.xpose.msra.mxu0 0
    %2357 = vmatprep.subr.bf16.mxu0 0
    %2358 = vmatpush2.bf16.xpose.msra.mxu0 0
    %2359 = vmatprep.subr.bf16.mxu0 0
    %2360 = vmatpush2.bf16.xpose.msra.mxu0 0
    %2361 = vmatprep.mubr.bf16.mxu0 0
    %2362 = vmatmul.mubr.bf16.gmra.mxu0 %v2324
    %v2363 = vpop.f32.mrf.mxu0
    %v2364 = vadd.f32 %v158, %v2363
    %v2365 = vpop.f32.mrf.mxu0
    %v2366 = vpop.f32.mrf.mxu0
    %v2367 = vpop.f32.mrf.mxu0
    %2368 = vdwg.mxu0
    %v2369 = vsel %vm274, %v2314, -inf
    %2370 = vmax.xlane.f32.xlu0 %v2369
    %v2371 = vpop.xlane.xlu0 %2370
    %v2372 = vsel %vm274, %v2364, -inf
    %2373 = vmax.xlane.f32.xlu0 %v2372
    %v2374 = vpop.xlane.xlu0 %2373
    %v2375 = vsub.f32 %v2314, %v2371
    %v2376 = vsub.f32 %v2364, %v2374
    %v2377 = vmul.f32 %v2375, 1.442695
    %v2378 = vpow.pop %v2377
    %v2379 = vmul.f32 %v2376, 1.442695
    %v2380 = vpow.pop %v2379
    %v2381 = vsel %vm274, %v2378, 0.0
    %2382 = vadd.xlane.f32.xlu0 %v2381
    %v2383 = vpop.xlane.xlu0 %2382
    %v2384 = vsel %vm274, %v2380, 0.0
    %2385 = vadd.xlane.f32.xlu0 %v2384
    %v2386 = vpop.xlane.xlu0 %2385
    %v2387 = vrcp.pop %v2383
    %v2388 = vrcp.pop %v2386
    %v2389 = vmul.f32 %v2378, %v2387
    %v2390 = vmul.f32 %v2380, %v2388
    %v2391 = vpack.c.bf16 %v2389, %v2389
    %v2392 = vpack.c.bf16 %v2390, %v2390
    %2393 = vrot.lane.b32.xlu0 %v1611, 40
    %v2394 = vpop.permute.xlu0 %2393
    %v2396 = vsel %vm274, %v2391, 0
    %v2399 = vsel %vm398, %v2394, 0
    %2401 = vmatprep.subr.bf16.mxu0 0
    %2402 = vmatpush1.bf16.msra.mxu0 0
    %2403 = vmatprep.subr.bf16.mxu0 0
    %2404 = vmatpush1.bf16.msra.mxu0 0
    %2405 = vmatprep.subr.bf16.mxu0 0
    %2406 = vmatpush1.bf16.msra.mxu0 0
    %2407 = vmatprep.subr.bf16.mxu0 0
    %2408 = vmatpush1.bf16.msra.mxu0 0
    %2409 = vmatprep.subr.bf16.mxu0 0
    %2410 = vmatpush1.bf16.msra.mxu0 0
    %2411 = vmatprep.subr.bf16.mxu0 0
    %2412 = vmatpush1.bf16.msra.mxu0 0
    %2413 = vmatprep.subr.bf16.mxu0 0
    %2414 = vmatpush1.bf16.msra.mxu0 0
    %2415 = vmatprep.subr.bf16.mxu0 0
    %2416 = vmatpush1.bf16.msra.mxu0 %v2399
    %2417 = vmatprep.subr.bf16.mxu0 0
    %2418 = vmatpush2.bf16.msra.mxu0 0
    %2419 = vmatprep.subr.bf16.mxu0 0
    %2420 = vmatpush2.bf16.msra.mxu0 0
    %2421 = vmatprep.subr.bf16.mxu0 0
    %2422 = vmatpush2.bf16.msra.mxu0 0
    %2423 = vmatprep.subr.bf16.mxu0 0
    %2424 = vmatpush2.bf16.msra.mxu0 0
    %2425 = vmatprep.subr.bf16.mxu0 0
    %2426 = vmatpush2.bf16.msra.mxu0 0
    %2427 = vmatprep.subr.bf16.mxu0 0
    %2428 = vmatpush2.bf16.msra.mxu0 0
    %2429 = vmatprep.subr.bf16.mxu0 0
    %2430 = vmatpush2.bf16.msra.mxu0 0
    %2431 = vmatprep.subr.bf16.mxu0 0
    %2432 = vmatpush2.bf16.msra.mxu0 0
    %2433 = vmatprep.mubr.bf16.mxu0 0
    %2434 = vmatmul.mubr.bf16.gmra.mxu0 %v2396
    %v2435 = vpop.f32.mrf.mxu0
    %v2436 = vadd.f32 0.0, %v2435
    %v2437 = vpop.f32.mrf.mxu0
    %v2438 = vpop.f32.mrf.mxu0
    %v2439 = vpop.f32.mrf.mxu0
    %2440 = vdwg.mxu0
    %2441 = vrot.lane.b32.xlu0 %v1612, 40
    %v2442 = vpop.permute.xlu0 %2441
    %v2444 = vsel %vm274, %v2392, 0
    %v2447 = vsel %vm398, %v2442, 0
    %2449 = vmatprep.subr.bf16.mxu0 0
    %2450 = vmatpush1.bf16.msra.mxu0 0
    %2451 = vmatprep.subr.bf16.mxu0 0
    %2452 = vmatpush1.bf16.msra.mxu0 0
    %2453 = vmatprep.subr.bf16.mxu0 0
    %2454 = vmatpush1.bf16.msra.mxu0 0
    %2455 = vmatprep.subr.bf16.mxu0 0
    %2456 = vmatpush1.bf16.msra.mxu0 0
    %2457 = vmatprep.subr.bf16.mxu0 0
    %2458 = vmatpush1.bf16.msra.mxu0 0
    %2459 = vmatprep.subr.bf16.mxu0 0
    %2460 = vmatpush1.bf16.msra.mxu0 0
    %2461 = vmatprep.subr.bf16.mxu0 0
    %2462 = vmatpush1.bf16.msra.mxu0 0
    %2463 = vmatprep.subr.bf16.mxu0 0
    %2464 = vmatpush1.bf16.msra.mxu0 %v2447
    %2465 = vmatprep.subr.bf16.mxu0 0
    %2466 = vmatpush2.bf16.msra.mxu0 0
    %2467 = vmatprep.subr.bf16.mxu0 0
    %2468 = vmatpush2.bf16.msra.mxu0 0
    %2469 = vmatprep.subr.bf16.mxu0 0
    %2470 = vmatpush2.bf16.msra.mxu0 0
    %2471 = vmatprep.subr.bf16.mxu0 0
    %2472 = vmatpush2.bf16.msra.mxu0 0
    %2473 = vmatprep.subr.bf16.mxu0 0
    %2474 = vmatpush2.bf16.msra.mxu0 0
    %2475 = vmatprep.subr.bf16.mxu0 0
    %2476 = vmatpush2.bf16.msra.mxu0 0
    %2477 = vmatprep.subr.bf16.mxu0 0
    %2478 = vmatpush2.bf16.msra.mxu0 0
    %2479 = vmatprep.subr.bf16.mxu0 0
    %2480 = vmatpush2.bf16.msra.mxu0 0
    %2481 = vmatprep.mubr.bf16.mxu0 0
    %2482 = vmatmul.mubr.bf16.gmra.mxu0 %v2444
    %v2483 = vpop.f32.mrf.mxu0
    %v2484 = vadd.f32 0.0, %v2483
    %v2485 = vpop.f32.mrf.mxu0
    %v2486 = vpop.f32.mrf.mxu0
    %v2487 = vpop.f32.mrf.mxu0
    %2488 = vdwg.mxu0
    %2491 = vrot.lane.b32.xlu0 %v1996, 8
    %v2492 = vpop.permute.xlu0 %2491
    %2493 = vrot.lane.b32.xlu0 %v2044, 8
    %v2494 = vpop.permute.xlu0 %2493
    %2499 = vrot.lane.b32.xlu0 %v2216, 16
    %v2500 = vpop.permute.xlu0 %2499
    %2501 = vrot.lane.b32.xlu0 %v2264, 16
    %v2502 = vpop.permute.xlu0 %2501
    %2507 = vrot.lane.b32.xlu0 %v2436, 24
    %v2508 = vpop.permute.xlu0 %2507
    %2509 = vrot.lane.b32.xlu0 %v2484, 24
    %v2510 = vpop.permute.xlu0 %2509
    %v2513 = vsel %vm274, %v1776, %v2492
    %v2514 = vsel %vm274, %v1824, %v2494
    %v2515 = vsel %vm1176, %v2513, %v2500
    %v2516 = vsel %vm1176, %v2514, %v2502
    %v2517 = vsel %vm1179, %v2515, %v2508
    %v2518 = vsel %vm1179, %v2516, %v2510
    %v2519 = vpack.c.bf16 %v2518, %v2517
    %s2520 = scalar_lea.vmem %s4, 16
    %v2521 = vld [vmem:[%s2520] sm:$0xf]
    %v2522 = vld [vmem:[%s2520 + $0x4] sm:$0xf]
    %v2523 = vld [vmem:[%s2520 + $0x8] sm:$0xf]
    %v2524 = vld [vmem:[%s2520 + $0xc] sm:$0xf]
    %v2529 = vunpack.c.l.b16 %v2521
    %v2530 = vunpack.c.l.b16 %v2522
    %v2531 = vunpack.c.l.b16 %v2523
    %v2532 = vunpack.c.l.b16 %v2524
    %v2533 = vpack.c.b16 %v2530, %v2529
    %v2534 = vpack.c.b16 %v2532, %v2531
    %v2538 = vsel %vm161, %v2519, 0
    %2540 = vmatprep.subr.bf16.mxu0 0
    %2541 = vmatpush1.bf16.msra.mxu0 0
    %2542 = vmatprep.subr.bf16.mxu0 0
    %2543 = vmatpush1.bf16.msra.mxu0 0
    %2544 = vmatprep.subr.bf16.mxu0 0
    %2545 = vmatpush1.bf16.msra.mxu0 0
    %2546 = vmatprep.subr.bf16.mxu0 0
    %2547 = vmatpush1.bf16.msra.mxu0 0
    %2548 = vmatprep.subr.bf16.mxu0 0
    %2549 = vmatpush1.bf16.msra.mxu0 0
    %2550 = vmatprep.subr.bf16.mxu0 0
    %2551 = vmatpush1.bf16.msra.mxu0 0
    %2552 = vmatprep.subr.bf16.mxu0 0
    %2553 = vmatpush1.bf16.msra.mxu0 %v2534
    %2554 = vmatprep.subr.bf16.mxu0 0
    %2555 = vmatpush1.bf16.msra.mxu0 %v2533
    %2556 = vmatprep.subr.bf16.mxu0 0
    %2557 = vmatpush2.bf16.msra.mxu0 0
    %2558 = vmatprep.subr.bf16.mxu0 0
    %2559 = vmatpush2.bf16.msra.mxu0 0
    %2560 = vmatprep.subr.bf16.mxu0 0
    %2561 = vmatpush2.bf16.msra.mxu0 0
    %2562 = vmatprep.subr.bf16.mxu0 0
    %2563 = vmatpush2.bf16.msra.mxu0 0
    %2564 = vmatprep.subr.bf16.mxu0 0
    %2565 = vmatpush2.bf16.msra.mxu0 0
    %2566 = vmatprep.subr.bf16.mxu0 0
    %2567 = vmatpush2.bf16.msra.mxu0 0
    %2568 = vmatprep.subr.bf16.mxu0 0
    %2569 = vmatpush2.bf16.msra.mxu0 0
    %2570 = vmatprep.subr.bf16.mxu0 0
    %2571 = vmatpush2.bf16.msra.mxu0 0
    %2572 = vmatprep.mubr.bf16.mxu0 0
    %2573 = vmatmul.mubr.bf16.gmra.mxu0 %v2538
    %v2574 = vpop.f32.mrf.mxu0
    %v2575 = vadd.f32 0.0, %v2574
    %v2576 = vpop.f32.mrf.mxu0
    %v2577 = vpop.f32.mrf.mxu0
    %v2578 = vadd.f32 0.0, %v2577
    %v2579 = vpop.f32.mrf.mxu0
    %2580 = vdwg.mxu0
    %v2581 = vadd.f32 %v1497, %v2575
    %v2582 = vadd.f32 %v1498, %v2578
    %s2583 = scalar_lea.vmem %s5, 1
    %v2584 = vld [vmem:[%s2583] sm:$0x1]
    %v2586 = vlaneseq
    %v2587 = vshrl.u32 %v2586, 7
    %v2588 = vsub.s32 0, %v2587
    %v2589 = vrot.slane %v2584, %v2588
    %v2591 = vadd.f32 %v2581, %v2589
    %v2592 = vadd.f32 %v2582, %v2589
    %s2593 = scalar_lea.vmem %s12, 1
    %v2594 = vld [vmem:[%s2593] sm:$0x1]
    %s2595 = scalar_lea.vmem %s13, 1
    %v2596 = vld [vmem:[%s2595] sm:$0x1]
    %v2597 = vsel %vm161, %v2591, 0.0
    %2598 = vadd.xlane.f32.xlu0 %v2597
    %v2599 = vpop.xlane.xlu0 %2598
    %v2600 = vsel %vm161, %v2592, 0.0
    %2601 = vadd.xlane.f32.xlu0 %v2600
    %v2602 = vpop.xlane.xlu0 %2601
    %v2603 = vmul.f32 %v2599, %v168
    %v2604 = vmul.f32 %v2602, %v168
    %v2605 = vsub.f32 %v2591, %v2603
    %v2606 = vsub.f32 %v2592, %v2604
    %v2607 = vmul.f32 %v2605, %v2605
    %v2608 = vmul.f32 %v2606, %v2606
    %v2609 = vsel %vm161, %v2607, 0.0
    %2610 = vadd.xlane.f32.xlu0 %v2609
    %v2611 = vpop.xlane.xlu0 %2610
    %v2612 = vsel %vm161, %v2608, 0.0
    %2613 = vadd.xlane.f32.xlu0 %v2612
    %v2614 = vpop.xlane.xlu0 %2613
    %v2615 = vmul.f32 %v2611, %v168
    %v2616 = vmul.f32 %v2614, %v168
    %v2617 = vadd.f32 %v2615, 1e-05
    %v2618 = vadd.f32 %v2616, 1e-05
    %v2619 = vrsqrt.pop %v2617
    %v2620 = vrsqrt.pop %v2618
    %v2621 = vmul.f32 %v2605, %v2619
    %v2622 = vmul.f32 %v2606, %v2620
    %v2624 = vlaneseq
    %v2625 = vshrl.u32 %v2624, 7
    %v2626 = vsub.s32 0, %v2625
    %v2627 = vrot.slane %v2594, %v2626
    %v2629 = vmul.f32 %v2621, %v2627
    %v2630 = vmul.f32 %v2622, %v2627
    %v2632 = vlaneseq
    %v2633 = vshrl.u32 %v2632, 7
    %v2634 = vsub.s32 0, %v2633
    %v2635 = vrot.slane %v2596, %v2634
    %v2637 = vadd.f32 %v2629, %v2635
    %v2638 = vadd.f32 %v2630, %v2635
    %v2639 = vpack.c.bf16 %v2638, %v2637
    %s2640 = scalar_lea.vmem %s6, 16
    %v2641 = vld [vmem:[%s2640] sm:$0xf]
    %v2642 = vld [vmem:[%s2640 + $0x4] sm:$0xf]
    %v2643 = vld [vmem:[%s2640 + $0x8] sm:$0xf]
    %v2644 = vld [vmem:[%s2640 + $0xc] sm:$0xf]
    %s2645 = scalar_lea.vmem %s7, 1
    %v2646 = vld [vmem:[%s2645] sm:$0x1]
    %v2648 = vlaneseq
    %v2649 = vshrl.u32 %v2648, 7
    %v2650 = vsub.s32 0, %v2649
    %v2651 = vrot.slane %v2646, %v2650
    %v2657 = vunpack.c.l.b16 %v2641
    %v2658 = vunpack.c.l.b16 %v2642
    %v2659 = vunpack.c.l.b16 %v2643
    %v2660 = vunpack.c.l.b16 %v2644
    %v2661 = vpack.c.b16 %v2658, %v2657
    %v2662 = vpack.c.b16 %v2660, %v2659
    %v2666 = vsel %vm161, %v2639, 0
    %2668 = vmatprep.subr.bf16.mxu0 0
    %2669 = vmatpush1.bf16.msra.mxu0 0
    %2670 = vmatprep.subr.bf16.mxu0 0
    %2671 = vmatpush1.bf16.msra.mxu0 0
    %2672 = vmatprep.subr.bf16.mxu0 0
    %2673 = vmatpush1.bf16.msra.mxu0 0
    %2674 = vmatprep.subr.bf16.mxu0 0
    %2675 = vmatpush1.bf16.msra.mxu0 0
    %2676 = vmatprep.subr.bf16.mxu0 0
    %2677 = vmatpush1.bf16.msra.mxu0 0
    %2678 = vmatprep.subr.bf16.mxu0 0
    %2679 = vmatpush1.bf16.msra.mxu0 0
    %2680 = vmatprep.subr.bf16.mxu0 0
    %2681 = vmatpush1.bf16.msra.mxu0 %v2662
    %2682 = vmatprep.subr.bf16.mxu0 0
    %2683 = vmatpush1.bf16.msra.mxu0 %v2661
    %2684 = vmatprep.subr.bf16.mxu0 0
    %2685 = vmatpush2.bf16.msra.mxu0 0
    %2686 = vmatprep.subr.bf16.mxu0 0
    %2687 = vmatpush2.bf16.msra.mxu0 0
    %2688 = vmatprep.subr.bf16.mxu0 0
    %2689 = vmatpush2.bf16.msra.mxu0 0
    %2690 = vmatprep.subr.bf16.mxu0 0
    %2691 = vmatpush2.bf16.msra.mxu0 0
    %2692 = vmatprep.subr.bf16.mxu0 0
    %2693 = vmatpush2.bf16.msra.mxu0 0
    %2694 = vmatprep.subr.bf16.mxu0 0
    %2695 = vmatpush2.bf16.msra.mxu0 0
    %2696 = vmatprep.subr.bf16.mxu0 0
    %2697 = vmatpush2.bf16.msra.mxu0 0
    %2698 = vmatprep.subr.bf16.mxu0 0
    %2699 = vmatpush2.bf16.msra.mxu0 0
    %2700 = vmatprep.mubr.bf16.mxu0 0
    %2701 = vmatmul.mubr.bf16.gmra.mxu0 %v2666
    %v2702 = vpop.f32.mrf.mxu0
    %v2703 = vadd.f32 %v2651, %v2702
    %v2704 = vpop.f32.mrf.mxu0
    %v2705 = vpop.f32.mrf.mxu0
    %v2706 = vadd.f32 %v2651, %v2705
    %v2707 = vpop.f32.mrf.mxu0
    %2708 = vdwg.mxu0
    %v2709 = vmul.f32 %v2703, 0.5
    %v2710 = vmul.f32 %v2706, 0.5
    %v2711 = vmul.f32 %v2703, 0.044715
    %v2712 = vmul.f32 %v2706, 0.044715
    %v2713 = vmul.f32 %v2711, %v2703
    %v2714 = vmul.f32 %v2712, %v2706
    %v2715 = vmul.f32 %v2713, %v2703
    %v2716 = vmul.f32 %v2714, %v2706
    %v2717 = vadd.f32 %v2703, %v2715
    %v2718 = vadd.f32 %v2706, %v2716
    %v2719 = vmul.f32 %v2717, 0.7978845
    %v2720 = vmul.f32 %v2718, 0.7978845
    %v2721 = vtanh.pop %v2719
    %v2722 = vtanh.pop %v2720
    %v2723 = vadd.f32 %v2721, 1.0
    %v2724 = vadd.f32 %v2722, 1.0
    %v2725 = vmul.f32 %v2709, %v2723
    %v2726 = vmul.f32 %v2710, %v2724
    %v2727 = vpack.c.bf16 %v2726, %v2725
    %s2728 = scalar_lea.vmem %s8, 64
    %v2729 = vld [vmem:[%s2728] sm:$0xf]
    %v2730 = vld [vmem:[%s2728 + $0x4] sm:$0xf]
    %v2731 = vld [vmem:[%s2728 + $0x8] sm:$0xf]
    %v2732 = vld [vmem:[%s2728 + $0xc] sm:$0xf]
    %v2733 = vld [vmem:[%s2728 + $0x10] sm:$0xf]
    %v2734 = vld [vmem:[%s2728 + $0x14] sm:$0xf]
    %v2735 = vld [vmem:[%s2728 + $0x18] sm:$0xf]
    %v2736 = vld [vmem:[%s2728 + $0x1c] sm:$0xf]
    %v2737 = vld [vmem:[%s2728 + $0x20] sm:$0xf]
    %v2738 = vld [vmem:[%s2728 + $0x24] sm:$0xf]
    %v2739 = vld [vmem:[%s2728 + $0x28] sm:$0xf]
    %v2740 = vld [vmem:[%s2728 + $0x2c] sm:$0xf]
    %v2741 = vld [vmem:[%s2728 + $0x30] sm:$0xf]
    %v2742 = vld [vmem:[%s2728 + $0x34] sm:$0xf]
    %v2743 = vld [vmem:[%s2728 + $0x38] sm:$0xf]
    %v2744 = vld [vmem:[%s2728 + $0x3c] sm:$0xf]
    %s2745 = scalar_lea.vmem %s9, 1
    %v2746 = vld [vmem:[%s2745] sm:$0x1]
    %v2748 = vlaneseq
    %v2749 = vshrl.u32 %v2748, 7
    %v2750 = vsub.s32 0, %v2749
    %v2751 = vrot.slane %v2746, %v2750
    %v2769 = vunpack.c.l.b16 %v2729
    %v2770 = vunpack.c.l.b16 %v2730
    %v2771 = vunpack.c.l.b16 %v2731
    %v2772 = vunpack.c.l.b16 %v2732
    %v2773 = vunpack.c.l.b16 %v2733
    %v2774 = vunpack.c.l.b16 %v2734
    %v2775 = vunpack.c.l.b16 %v2735
    %v2776 = vunpack.c.l.b16 %v2736
    %v2777 = vunpack.c.l.b16 %v2737
    %v2778 = vunpack.c.l.b16 %v2738
    %v2779 = vunpack.c.l.b16 %v2739
    %v2780 = vunpack.c.l.b16 %v2740
    %v2781 = vunpack.c.l.b16 %v2741
    %v2782 = vunpack.c.l.b16 %v2742
    %v2783 = vunpack.c.l.b16 %v2743
    %v2784 = vunpack.c.l.b16 %v2744
    %v2785 = vpack.c.b16 %v2770, %v2769
    %v2786 = vpack.c.b16 %v2772, %v2771
    %v2787 = vpack.c.b16 %v2774, %v2773
    %v2788 = vpack.c.b16 %v2776, %v2775
    %v2789 = vpack.c.b16 %v2778, %v2777
    %v2790 = vpack.c.b16 %v2780, %v2779
    %v2791 = vpack.c.b16 %v2782, %v2781
    %v2792 = vpack.c.b16 %v2784, %v2783
    %2801 = vmatprep.subr.bf16.mxu0 0
    %2802 = vmatpush1.bf16.msra.mxu0 %v2792
    %2803 = vmatprep.subr.bf16.mxu0 0
    %2804 = vmatpush1.bf16.msra.mxu0 %v2791
    %2805 = vmatprep.subr.bf16.mxu0 0
    %2806 = vmatpush1.bf16.msra.mxu0 %v2790
    %2807 = vmatprep.subr.bf16.mxu0 0
    %2808 = vmatpush1.bf16.msra.mxu0 %v2789
    %2809 = vmatprep.subr.bf16.mxu0 0
    %2810 = vmatpush1.bf16.msra.mxu0 %v2788
    %2811 = vmatprep.subr.bf16.mxu0 0
    %2812 = vmatpush1.bf16.msra.mxu0 %v2787
    %2813 = vmatprep.subr.bf16.mxu0 0
    %2814 = vmatpush1.bf16.msra.mxu0 %v2786
    %2815 = vmatprep.subr.bf16.mxu0 0
    %2816 = vmatpush1.bf16.msra.mxu0 %v2785
    %2817 = vmatprep.subr.bf16.mxu0 0
    %2818 = vmatpush2.bf16.msra.mxu0 0
    %2819 = vmatprep.subr.bf16.mxu0 0
    %2820 = vmatpush2.bf16.msra.mxu0 0
    %2821 = vmatprep.subr.bf16.mxu0 0
    %2822 = vmatpush2.bf16.msra.mxu0 0
    %2823 = vmatprep.subr.bf16.mxu0 0
    %2824 = vmatpush2.bf16.msra.mxu0 0
    %2825 = vmatprep.subr.bf16.mxu0 0
    %2826 = vmatpush2.bf16.msra.mxu0 0
    %2827 = vmatprep.subr.bf16.mxu0 0
    %2828 = vmatpush2.bf16.msra.mxu0 0
    %2829 = vmatprep.subr.bf16.mxu0 0
    %2830 = vmatpush2.bf16.msra.mxu0 0
    %2831 = vmatprep.subr.bf16.mxu0 0
    %2832 = vmatpush2.bf16.msra.mxu0 0
    %2833 = vmatprep.mubr.bf16.mxu0 0
    %2834 = vmatmul.mubr.bf16.gmra.mxu0 %v2727
    %v2835 = vpop.f32.mrf.mxu0
    %v2836 = vadd.f32 %v2751, %v2835
    %v2837 = vpop.f32.mrf.mxu0
    %v2838 = vpop.f32.mrf.mxu0
    %v2839 = vadd.f32 %v2751, %v2838
    %v2840 = vpop.f32.mrf.mxu0
    %2841 = vdwg.mxu0
    %v2842 = vadd.f32 %v2591, %v2836
    %v2843 = vadd.f32 %v2592, %v2839
    %v2844 = vld [vmem:[%s14] sm:$0x1]
    %v2845 = vld [vmem:[%s15] sm:$0x1]
    %v2846 = vsel %vm161, %v2842, 0.0
    %2847 = vadd.xlane.f32.xlu0 %v2846
    %v2848 = vpop.xlane.xlu0 %2847
    %v2849 = vsel %vm161, %v2843, 0.0
    %2850 = vadd.xlane.f32.xlu0 %v2849
    %v2851 = vpop.xlane.xlu0 %2850
    %v2852 = vmul.f32 %v2848, %v168
    %v2853 = vmul.f32 %v2851, %v168
    %v2854 = vsub.f32 %v2842, %v2852
    %v2855 = vsub.f32 %v2843, %v2853
    %v2856 = vmul.f32 %v2854, %v2854
    %v2857 = vmul.f32 %v2855, %v2855
    %v2858 = vsel %vm161, %v2856, 0.0
    %2859 = vadd.xlane.f32.xlu0 %v2858
    %v2860 = vpop.xlane.xlu0 %2859
    %v2861 = vsel %vm161, %v2857, 0.0
    %2862 = vadd.xlane.f32.xlu0 %v2861
    %v2863 = vpop.xlane.xlu0 %2862
    %v2864 = vmul.f32 %v2860, %v168
    %v2865 = vmul.f32 %v2863, %v168
    %v2866 = vadd.f32 %v2864, 1e-05
    %v2867 = vadd.f32 %v2865, 1e-05
    %v2868 = vrsqrt.pop %v2866
    %v2869 = vrsqrt.pop %v2867
    %v2870 = vmul.f32 %v2854, %v2868
    %v2871 = vmul.f32 %v2855, %v2869
    %v2873 = vlaneseq
    %v2874 = vshrl.u32 %v2873, 7
    %v2875 = vsub.s32 0, %v2874
    %v2876 = vrot.slane %v2844, %v2875
    %v2878 = vmul.f32 %v2870, %v2876
    %v2879 = vmul.f32 %v2871, %v2876
    %v2881 = vlaneseq
    %v2882 = vshrl.u32 %v2881, 7
    %v2883 = vsub.s32 0, %v2882
    %v2884 = vrot.slane %v2845, %v2883
    %v2886 = vadd.f32 %v2878, %v2884
    %v2887 = vadd.f32 %v2879, %v2884
    %v2888 = vpack.c.bf16 %v2887, %v2886
    %v2889 = vld [vmem:[%s16] sm:$0xf]
    %v2890 = vld [vmem:[%s16 + $0x4] sm:$0xf]
    %v2891 = vld [vmem:[%s16 + $0x8] sm:$0xf]
    %v2892 = vld [vmem:[%s16 + $0xc] sm:$0xf]
    %v2897 = vunpack.c.l.b16 %v2889
    %v2898 = vunpack.c.l.b16 %v2890
    %v2899 = vunpack.c.l.b16 %v2891
    %v2900 = vunpack.c.l.b16 %v2892
    %v2901 = vpack.c.b16 %v2898, %v2897
    %v2902 = vpack.c.b16 %v2900, %v2899
    %v2906 = vsel %vm161, %v2888, 0
    %2908 = vmatprep.subr.bf16.mxu0 0
    %2909 = vmatpush1.bf16.msra.mxu0 0
    %2910 = vmatprep.subr.bf16.mxu0 0
    %2911 = vmatpush1.bf16.msra.mxu0 0
    %2912 = vmatprep.subr.bf16.mxu0 0
    %2913 = vmatpush1.bf16.msra.mxu0 0
    %2914 = vmatprep.subr.bf16.mxu0 0
    %2915 = vmatpush1.bf16.msra.mxu0 0
    %2916 = vmatprep.subr.bf16.mxu0 0
    %2917 = vmatpush1.bf16.msra.mxu0 0
    %2918 = vmatprep.subr.bf16.mxu0 0
    %2919 = vmatpush1.bf16.msra.mxu0 0
    %2920 = vmatprep.subr.bf16.mxu0 0
    %2921 = vmatpush1.bf16.msra.mxu0 %v2902
    %2922 = vmatprep.subr.bf16.mxu0 0
    %2923 = vmatpush1.bf16.msra.mxu0 %v2901
    %2924 = vmatprep.subr.bf16.mxu0 0
    %2925 = vmatpush2.bf16.msra.mxu0 0
    %2926 = vmatprep.subr.bf16.mxu0 0
    %2927 = vmatpush2.bf16.msra.mxu0 0
    %2928 = vmatprep.subr.bf16.mxu0 0
    %2929 = vmatpush2.bf16.msra.mxu0 0
    %2930 = vmatprep.subr.bf16.mxu0 0
    %2931 = vmatpush2.bf16.msra.mxu0 0
    %2932 = vmatprep.subr.bf16.mxu0 0
    %2933 = vmatpush2.bf16.msra.mxu0 0
    %2934 = vmatprep.subr.bf16.mxu0 0
    %2935 = vmatpush2.bf16.msra.mxu0 0
    %2936 = vmatprep.subr.bf16.mxu0 0
    %2937 = vmatpush2.bf16.msra.mxu0 0
    %2938 = vmatprep.subr.bf16.mxu0 0
    %2939 = vmatpush2.bf16.msra.mxu0 0
    %2940 = vmatprep.mubr.bf16.mxu0 0
    %2941 = vmatmul.mubr.bf16.gmra.mxu0 %v2906
    %v2942 = vpop.f32.mrf.mxu0
    %v2943 = vadd.f32 0.0, %v2942
    %v2944 = vpop.f32.mrf.mxu0
    %v2945 = vpop.f32.mrf.mxu0
    %v2946 = vadd.f32 0.0, %v2945
    %v2947 = vpop.f32.mrf.mxu0
    %2948 = vdwg.mxu0
    %2949 = vst [vmem:[#allocation2] sm:$0xff] %v2943
    %2950 = vst [vmem:[#allocation2 + $0x8] sm:$0xff] %v2946
    // Predicated region
    $region70: #{tpu_custom_call.1} parent=1 // pred_check
      _
    $region71: #{tpu_custom_call.1} parent=1 // pred_check_branch
      %2952 = sbr.rel (0) target = $region73
    $region72: #{tpu_custom_call.1} parent=1 // pred_region
      %s2954 = ssub.s32 256, 256
      %2955 = vsyncadd [#allocation3], %s2954
      %s2956 = sshll.u32 [#allocation2], 4
      %s2957 = int_to_ptr.vmem [resolvable:$true] %s2956
      %2962 = dma.vmem_to_hbm [thread:$0]  %s2957, 256, %s17, [#allocation3], 128, 128, 8
    $region73: #{tpu_custom_call.1} parent=1 // pred_fallthru
      _
    // Predicated region
    $region74: #{tpu_custom_call.1} parent=1 // pred_check
      _
    $region75: #{tpu_custom_call.1} parent=1 // pred_check_branch
      %2964 = sbr.rel (0) target = $region77
    $region76: #{tpu_custom_call.1} parent=1 // pred_region
      %2965 = dma.done [#allocation3], 256
    $region77: #{tpu_custom_call.1} parent=1 // pred_fallthru
      _
    %2966 = vsyncpa [#allocation3], 1

</llo_original>
